<compile_context>
chip_gen: v6e
topology: v6e:2x2x1
jax: 0.10.0
libtpu: 0.0.40
codegen_flags: <defaults>
</compile_context>

<pallas_src>
import jax
import jax.numpy as jnp
from jax.experimental import pallas as pl
from jax.experimental.pallas import tpu as pltpu

IN_DIM = 784
HID_DIM = 400
LAT_DIM = 20


def _round_up(n, m):
    return (n + m - 1) // m * m


def _choose_tb(batch):
    """Batch tile: multiple of 16 rows, capped at 512; >=2 grid steps when batch allows."""
    if batch <= 16:
        return _round_up(max(batch, 1), 16)
    # aim for at least two tiles so the "parallel" grid axis can use both TCs on v7x
    tb = _round_up(pl.cdiv(batch, 2), 16)
    return min(512, tb)


def _vae_kernel(x_ref, eps_ref,
                w1_ref, b1_ref,
                wmu_ref, bmu_ref,
                wsig_ref, bsig_ref,
                w2_ref, b2_ref,
                w3_ref, b3_ref,
                recon_ref, mu_ref, sig_ref):
    bf16 = jnp.bfloat16

    # encoder: h1 = relu(x @ W1 + b1)      [TB, 400]
    x = x_ref[...].astype(bf16)
    h1 = jnp.dot(x, w1_ref[...], preferred_element_type=jnp.float32) + b1_ref[...]
    h1 = jnp.maximum(h1, 0.0).astype(bf16)

    # heads: mu / st_d at native width 20  [TB, 20]
    mu = jnp.dot(h1, wmu_ref[...], preferred_element_type=jnp.float32) + bmu_ref[...]
    sig = jnp.dot(h1, wsig_ref[...], preferred_element_type=jnp.float32) + bsig_ref[...]

    # reparameterize: z = mu + st_d * eps
    z = mu + sig * eps_ref[...]

    # decoder: sigmoid(relu(z @ W2 + b2) @ W3 + b3)
    h2 = jnp.dot(z.astype(bf16), w2_ref[...], preferred_element_type=jnp.float32) + b2_ref[...]
    h2 = jnp.maximum(h2, 0.0).astype(bf16)
    logits = jnp.dot(h2, w3_ref[...], preferred_element_type=jnp.float32) + b3_ref[...]
    logits = jnp.clip(logits, -30.0, 30.0)                       # keep exp finite for approx recip
    recon = pl.reciprocal(1.0 + jnp.exp(-logits), approx=True)   # sigmoid via EUP

    recon_ref[...] = recon.astype(recon_ref.dtype)               # bf16 store (largest output)
    mu_ref[...] = mu
    sig_ref[...] = sig


def vae_forward(x_nchw, eps, kp):
    """x_nchw: [B, 1, 28, 28] f32; eps: [B, 20] f32; kp: packed params from pack_params().

    Returns (recon [B, 784] bf16, mu [B, 20] f32, st_d [B, 20] f32)."""
    B = x_nchw.shape[0]
    x = x_nchw.reshape(B, IN_DIM).astype(jnp.float32)   # same semantics as x.view(-1, 784)
    eps = eps.astype(jnp.float32)

    TB = _choose_tb(B)
    Bp = _round_up(B, TB)
    if Bp != B:
        x = jnp.pad(x, ((0, Bp - B), (0, 0)))
        eps = jnp.pad(eps, ((0, Bp - B), (0, 0)))

    grid = (Bp // TB,)
    tile = lambda i: (i, 0)      # batch-tiled arrays
    full = lambda i: (0, 0)      # weights/biases: resident across the whole grid

    in_specs = [
        pl.BlockSpec((TB, IN_DIM), tile),            # x
        pl.BlockSpec((TB, LAT_DIM), tile),           # eps (native width 20)
        pl.BlockSpec((IN_DIM, HID_DIM), full),       # w1  (bf16)
        pl.BlockSpec((1, HID_DIM), full),            # b1  (f32)
        pl.BlockSpec((HID_DIM, LAT_DIM), full),      # w_mu (bf16)
        pl.BlockSpec((1, LAT_DIM), full),            # b_mu
        pl.BlockSpec((HID_DIM, LAT_DIM), full),      # w_sig (bf16)
        pl.BlockSpec((1, LAT_DIM), full),            # b_sig
        pl.BlockSpec((LAT_DIM, HID_DIM), full),      # w2 (bf16)
        pl.BlockSpec((1, HID_DIM), full),            # b2
        pl.BlockSpec((HID_DIM, IN_DIM), full),       # w3 (bf16)
        pl.BlockSpec((1, IN_DIM), full),             # b3
    ]
    out_specs = (
        pl.BlockSpec((TB, IN_DIM), tile),            # recon (bf16, native width 784)
        pl.BlockSpec((TB, LAT_DIM), tile),           # mu
        pl.BlockSpec((TB, LAT_DIM), tile),           # st_d
    )

    recon, mu, sig = pl.pallas_call(
        _vae_kernel,
        grid=grid,
        out_shape=(
            jax.ShapeDtypeStruct((Bp, IN_DIM), jnp.bfloat16),
            jax.ShapeDtypeStruct((Bp, LAT_DIM), jnp.float32),
            jax.ShapeDtypeStruct((Bp, LAT_DIM), jnp.float32),
        ),
        in_specs=in_specs,
        out_specs=out_specs,
        compiler_params=pltpu.CompilerParams(
            dimension_semantics=("parallel",),   # batch tiles shard across TCs on v7x
            vmem_limit_bytes=48 << 20,           # TB=512 footprint ~12 MiB; fits v7x 64 MiB/TC
        ),
    )(x, eps,
      kp["w1"], kp["b1"], kp["wmu"], kp["bmu"], kp["wsig"], kp["bsig"],
      kp["w2"], kp["b2"], kp["w3"], kp["b3"])

    if Bp != B:
        recon, mu, sig = recon[:B], mu[:B], sig[:B]
    return recon, mu, sig


def init_params(key):
    """Deterministic synthetic parameters (PyTorch-equivalent init). Weights (in, out), biases (1, out)."""
    ks = jax.random.split(key, 10)

    def lin(kw, kb, d_in, d_out):
        scale = 1.0 / jnp.sqrt(jnp.float32(d_in))
        w = jax.random.uniform(kw, (d_in, d_out), jnp.float32, -scale, scale)
        b = jax.random.uniform(kb, (1, d_out), jnp.float32, -scale, scale)
        return w, b

    w1, b1 = lin(ks[0], ks[1], IN_DIM, HID_DIM)
    wmu, bmu = lin(ks[2], ks[3], HID_DIM, LAT_DIM)
    wsig, bsig = lin(ks[4], ks[5], HID_DIM, LAT_DIM)
    w2, b2 = lin(ks[6], ks[7], LAT_DIM, HID_DIM)
    w3, b3 = lin(ks[8], ks[9], HID_DIM, IN_DIM)
    return dict(w1=w1, b1=b1, wmu=wmu, bmu=bmu, wsig=wsig, bsig=bsig,
                w2=w2, b2=b2, w3=w3, b3=b3)


def pack_params(p):
    """Kernel layout: bf16 weights (halves weight DMA), f32 biases, native (unpadded) shapes."""
    bf = jnp.bfloat16
    return dict(
        w1=p["w1"].astype(bf), b1=p["b1"],
        wmu=p["wmu"].astype(bf), bmu=p["bmu"],
        wsig=p["wsig"].astype(bf), bsig=p["bsig"],
        w2=p["w2"].astype(bf), b2=p["b2"],
        w3=p["w3"].astype(bf), b3=p["b3"],
    )


def vae_forward_ref(x_nchw, eps, p):
    """Pure-JAX f32 reference (original module semantics) for correctness checking."""
    x = x_nchw.reshape(x_nchw.shape[0], IN_DIM)
    h1 = jnp.maximum(x @ p["w1"] + p["b1"], 0.0)
    mu = h1 @ p["wmu"] + p["bmu"]
    sig = h1 @ p["wsig"] + p["bsig"]
    z = mu + sig * eps
    h2 = jnp.maximum(z @ p["w2"] + p["b2"], 0.0)
    recon = jax.nn.sigmoid(h2 @ p["w3"] + p["b3"])
    return recon, mu, sig


if __name__ == "__main__":
    key = jax.random.PRNGKey(0)
    k_x, k_eps, k_p = jax.random.split(key, 3)

    B = 8
    x = jax.random.normal(k_x, (B, 1, 28, 28), dtype=jnp.float32)    # NCHW, like MNIST input
    eps = jax.random.normal(k_eps, (B, LAT_DIM), dtype=jnp.float32)  # reparameterization noise
    params = init_params(k_p)
    kparams = pack_params(params)

    recon, mu, st_d = vae_forward(x, eps, kparams)
    jax.block_until_ready((recon, mu, st_d))

    # correctness check against plain-JAX f32 reference (bf16 matmuls + bf16 recon => loose tolerance)
    r_ref, mu_ref, sig_ref = vae_forward_ref(x, eps, params)
    assert recon.shape == (B, IN_DIM) and mu.shape == (B, LAT_DIM) and st_d.shape == (B, LAT_DIM)
    assert jnp.allclose(recon.astype(jnp.float32), r_ref, atol=3e-2, rtol=3e-2)
    assert jnp.allclose(mu, mu_ref, atol=3e-2, rtol=3e-2)
    assert jnp.allclose(st_d, sig_ref, atol=3e-2, rtol=3e-2)

    print("KERNEL_OK")
</pallas_src>

<mosaic_0001>
module attributes {stable_mosaic.version = 11 : i64} {
  func.func @_vae_kernel(%arg0: i32, %arg1: memref<16x784xf32, #tpu.memory_space<vmem>>, %arg2: memref<16x20xf32, #tpu.memory_space<vmem>>, %arg3: memref<784x400xbf16, #tpu.memory_space<vmem>>, %arg4: memref<1x400xf32, #tpu.memory_space<vmem>>, %arg5: memref<400x20xbf16, #tpu.memory_space<vmem>>, %arg6: memref<1x20xf32, #tpu.memory_space<vmem>>, %arg7: memref<400x20xbf16, #tpu.memory_space<vmem>>, %arg8: memref<1x20xf32, #tpu.memory_space<vmem>>, %arg9: memref<20x400xbf16, #tpu.memory_space<vmem>>, %arg10: memref<1x400xf32, #tpu.memory_space<vmem>>, %arg11: memref<400x784xbf16, #tpu.memory_space<vmem>>, %arg12: memref<1x784xf32, #tpu.memory_space<vmem>>, %arg13: memref<16x784xbf16, #tpu.memory_space<vmem>>, %arg14: memref<16x20xf32, #tpu.memory_space<vmem>>, %arg15: memref<16x20xf32, #tpu.memory_space<vmem>>) attributes {dimension_semantics = [#tpu.dimension_semantics<parallel>], iteration_bounds = array<i64: 1>, scalar_prefetch = 0 : i64, scratch_operands = 0 : i64, tpu.core_type = #tpu.core_type<tc>, window_params = [{transform_indices = @transform_0, window_bounds = array<i64: 16, 784>}, {transform_indices = @transform_1, window_bounds = array<i64: 16, 20>}, {pipeline_mode = #tpu.pipeline_mode<synchronous>, transform_indices = @transform_2, window_bounds = array<i64: 784, 400>}, {pipeline_mode = #tpu.pipeline_mode<synchronous>, transform_indices = @transform_3, window_bounds = array<i64: 1, 400>}, {pipeline_mode = #tpu.pipeline_mode<synchronous>, transform_indices = @transform_4, window_bounds = array<i64: 400, 20>}, {pipeline_mode = #tpu.pipeline_mode<synchronous>, transform_indices = @transform_5, window_bounds = array<i64: 1, 20>}, {pipeline_mode = #tpu.pipeline_mode<synchronous>, transform_indices = @transform_6, window_bounds = array<i64: 400, 20>}, {pipeline_mode = #tpu.pipeline_mode<synchronous>, transform_indices = @transform_7, window_bounds = array<i64: 1, 20>}, {pipeline_mode = #tpu.pipeline_mode<synchronous>, transform_indices = @transform_8, window_bounds = array<i64: 20, 400>}, {pipeline_mode = #tpu.pipeline_mode<synchronous>, transform_indices = @transform_9, window_bounds = array<i64: 1, 400>}, {pipeline_mode = #tpu.pipeline_mode<synchronous>, transform_indices = @transform_10, window_bounds = array<i64: 400, 784>}, {pipeline_mode = #tpu.pipeline_mode<synchronous>, transform_indices = @transform_11, window_bounds = array<i64: 1, 784>}, {transform_indices = @transform_12, window_bounds = array<i64: 16, 784>}, {transform_indices = @transform_13, window_bounds = array<i64: 16, 20>}, {transform_indices = @transform_14, window_bounds = array<i64: 16, 20>}]} {
    %c0 = arith.constant 0 : index
    %c0_0 = arith.constant 0 : index
    %0 = vector.load %arg1[%c0, %c0_0] : memref<16x784xf32, #tpu.memory_space<vmem>>, vector<16x784xf32>
    %1 = arith.truncf %0 : vector<16x784xf32> to vector<16x784xbf16>
    %c0_1 = arith.constant 0 : index
    %c0_2 = arith.constant 0 : index
    %2 = vector.load %arg3[%c0_1, %c0_2] : memref<784x400xbf16, #tpu.memory_space<vmem>>, vector<784x400xbf16>
    %cst = arith.constant dense<0.000000e+00> : vector<16x400xf32>
    %3 = tpu.matmul %1, %2, %cst {dimension_numbers = #tpu.dot_dimension_numbers<[1], [0], [0], [1], [0, 0, 1, 1], [], []>} : vector<16x784xbf16>, vector<784x400xbf16>, vector<16x400xf32> -> vector<16x400xf32>
    %c0_3 = arith.constant 0 : index
    %c0_4 = arith.constant 0 : index
    %4 = vector.load %arg4[%c0_3, %c0_4] : memref<1x400xf32, #tpu.memory_space<vmem>>, vector<1x400xf32>
    %5 = vector.broadcast %4 : vector<1x400xf32> to vector<16x400xf32>
    %6 = arith.addf %3, %5 : vector<16x400xf32>
    %cst_5 = arith.constant 0.000000e+00 : f32
    %7 = vector.broadcast %cst_5 : f32 to vector<16x400xf32>
    %8 = arith.maximumf %6, %7 : vector<16x400xf32>
    %9 = arith.truncf %8 : vector<16x400xf32> to vector<16x400xbf16>
    %c0_6 = arith.constant 0 : index
    %c0_7 = arith.constant 0 : index
    %10 = vector.load %arg5[%c0_6, %c0_7] : memref<400x20xbf16, #tpu.memory_space<vmem>>, vector<400x20xbf16>
    %cst_8 = arith.constant dense<0.000000e+00> : vector<16x20xf32>
    %11 = tpu.matmul %9, %10, %cst_8 {dimension_numbers = #tpu.dot_dimension_numbers<[1], [0], [0], [1], [0, 0, 1, 1], [], []>} : vector<16x400xbf16>, vector<400x20xbf16>, vector<16x20xf32> -> vector<16x20xf32>
    %c0_9 = arith.constant 0 : index
    %c0_10 = arith.constant 0 : index
    %12 = vector.load %arg6[%c0_9, %c0_10] : memref<1x20xf32, #tpu.memory_space<vmem>>, vector<1x20xf32>
    %13 = vector.broadcast %12 : vector<1x20xf32> to vector<16x20xf32>
    %14 = arith.addf %11, %13 : vector<16x20xf32>
    %c0_11 = arith.constant 0 : index
    %c0_12 = arith.constant 0 : index
    %15 = vector.load %arg7[%c0_11, %c0_12] : memref<400x20xbf16, #tpu.memory_space<vmem>>, vector<400x20xbf16>
    %cst_13 = arith.constant dense<0.000000e+00> : vector<16x20xf32>
    %16 = tpu.matmul %9, %15, %cst_13 {dimension_numbers = #tpu.dot_dimension_numbers<[1], [0], [0], [1], [0, 0, 1, 1], [], []>} : vector<16x400xbf16>, vector<400x20xbf16>, vector<16x20xf32> -> vector<16x20xf32>
    %c0_14 = arith.constant 0 : index
    %c0_15 = arith.constant 0 : index
    %17 = vector.load %arg8[%c0_14, %c0_15] : memref<1x20xf32, #tpu.memory_space<vmem>>, vector<1x20xf32>
    %18 = vector.broadcast %17 : vector<1x20xf32> to vector<16x20xf32>
    %19 = arith.addf %16, %18 : vector<16x20xf32>
    %c0_16 = arith.constant 0 : index
    %c0_17 = arith.constant 0 : index
    %20 = vector.load %arg2[%c0_16, %c0_17] : memref<16x20xf32, #tpu.memory_space<vmem>>, vector<16x20xf32>
    %21 = arith.mulf %19, %20 : vector<16x20xf32>
    %22 = arith.addf %14, %21 : vector<16x20xf32>
    %23 = arith.truncf %22 : vector<16x20xf32> to vector<16x20xbf16>
    %c0_18 = arith.constant 0 : index
    %c0_19 = arith.constant 0 : index
    %24 = vector.load %arg9[%c0_18, %c0_19] : memref<20x400xbf16, #tpu.memory_space<vmem>>, vector<20x400xbf16>
    %cst_20 = arith.constant dense<0.000000e+00> : vector<16x400xf32>
    %25 = tpu.matmul %23, %24, %cst_20 {dimension_numbers = #tpu.dot_dimension_numbers<[1], [0], [0], [1], [0, 0, 1, 1], [], []>} : vector<16x20xbf16>, vector<20x400xbf16>, vector<16x400xf32> -> vector<16x400xf32>
    %c0_21 = arith.constant 0 : index
    %c0_22 = arith.constant 0 : index
    %26 = vector.load %arg10[%c0_21, %c0_22] : memref<1x400xf32, #tpu.memory_space<vmem>>, vector<1x400xf32>
    %27 = vector.broadcast %26 : vector<1x400xf32> to vector<16x400xf32>
    %28 = arith.addf %25, %27 : vector<16x400xf32>
    %cst_23 = arith.constant 0.000000e+00 : f32
    %29 = vector.broadcast %cst_23 : f32 to vector<16x400xf32>
    %30 = arith.maximumf %28, %29 : vector<16x400xf32>
    %31 = arith.truncf %30 : vector<16x400xf32> to vector<16x400xbf16>
    %c0_24 = arith.constant 0 : index
    %c0_25 = arith.constant 0 : index
    %32 = vector.load %arg11[%c0_24, %c0_25] : memref<400x784xbf16, #tpu.memory_space<vmem>>, vector<400x784xbf16>
    %cst_26 = arith.constant dense<0.000000e+00> : vector<16x784xf32>
    %33 = tpu.matmul %31, %32, %cst_26 {dimension_numbers = #tpu.dot_dimension_numbers<[1], [0], [0], [1], [0, 0, 1, 1], [], []>} : vector<16x400xbf16>, vector<400x784xbf16>, vector<16x784xf32> -> vector<16x784xf32>
    %c0_27 = arith.constant 0 : index
    %c0_28 = arith.constant 0 : index
    %34 = vector.load %arg12[%c0_27, %c0_28] : memref<1x784xf32, #tpu.memory_space<vmem>>, vector<1x784xf32>
    %35 = vector.broadcast %34 : vector<1x784xf32> to vector<16x784xf32>
    %36 = arith.addf %33, %35 : vector<16x784xf32>
    %cst_29 = arith.constant -3.000000e+01 : f32
    %cst_30 = arith.constant 3.000000e+01 : f32
    %37 = vector.broadcast %cst_29 : f32 to vector<16x784xf32>
    %38 = arith.maximumf %37, %36 : vector<16x784xf32>
    %39 = vector.broadcast %cst_30 : f32 to vector<16x784xf32>
    %40 = arith.minimumf %39, %38 : vector<16x784xf32>
    %cst_31 = arith.constant 0.000000e+00 : f32
    %41 = vector.broadcast %cst_31 : f32 to vector<16x784xf32>
    %42 = arith.subf %41, %40 : vector<16x784xf32>
    %43 = math.exp %42 : vector<16x784xf32>
    %cst_32 = arith.constant 1.000000e+00 : f32
    %44 = vector.broadcast %cst_32 : f32 to vector<16x784xf32>
    %45 = arith.addf %44, %43 : vector<16x784xf32>
    %46 = tpu.reciprocal %45 {approx = true} : vector<16x784xf32> -> vector<16x784xf32>
    %47 = arith.truncf %46 : vector<16x784xf32> to vector<16x784xbf16>
    %c0_33 = arith.constant 0 : index
    %c0_34 = arith.constant 0 : index
    %48 = vector.load %arg13[%c0_33, %c0_34] : memref<16x784xbf16, #tpu.memory_space<vmem>>, vector<16x784xbf16>
    tpu.vector_store %arg13[%c0_33, %c0_34], %47 {strides = array<i32>} : memref<16x784xbf16, #tpu.memory_space<vmem>>, vector<16x784xbf16>,
    %c0_35 = arith.constant 0 : index
    %c0_36 = arith.constant 0 : index
    %49 = vector.load %arg14[%c0_35, %c0_36] : memref<16x20xf32, #tpu.memory_space<vmem>>, vector<16x20xf32>
    tpu.vector_store %arg14[%c0_35, %c0_36], %14 {strides = array<i32>} : memref<16x20xf32, #tpu.memory_space<vmem>>, vector<16x20xf32>,
    %c0_37 = arith.constant 0 : index
    %c0_38 = arith.constant 0 : index
    %50 = vector.load %arg15[%c0_37, %c0_38] : memref<16x20xf32, #tpu.memory_space<vmem>>, vector<16x20xf32>
    tpu.vector_store %arg15[%c0_37, %c0_38], %19 {strides = array<i32>} : memref<16x20xf32, #tpu.memory_space<vmem>>, vector<16x20xf32>,
    return
  }
  func.func @transform_0(%arg0: i32) -> (i32, i32) {
    %c0_i32 = arith.constant 0 : i32
    %c0_i32_0 = arith.constant 0 : i32
    return %arg0, %c0_i32 : i32, i32
  }
  func.func @transform_1(%arg0: i32) -> (i32, i32) {
    %c0_i32 = arith.constant 0 : i32
    %c0_i32_0 = arith.constant 0 : i32
    return %arg0, %c0_i32 : i32, i32
  }
  func.func @transform_2(%arg0: i32) -> (i32, i32) {
    %c0_i32 = arith.constant 0 : i32
    %c0_i32_0 = arith.constant 0 : i32
    %c0_i32_1 = arith.constant 0 : i32
    return %c0_i32, %c0_i32_0 : i32, i32
  }
  func.func @transform_3(%arg0: i32) -> (i32, i32) {
    %c0_i32 = arith.constant 0 : i32
    %c0_i32_0 = arith.constant 0 : i32
    %c0_i32_1 = arith.constant 0 : i32
    return %c0_i32, %c0_i32_0 : i32, i32
  }
  func.func @transform_4(%arg0: i32) -> (i32, i32) {
    %c0_i32 = arith.constant 0 : i32
    %c0_i32_0 = arith.constant 0 : i32
    %c0_i32_1 = arith.constant 0 : i32
    return %c0_i32, %c0_i32_0 : i32, i32
  }
  func.func @transform_5(%arg0: i32) -> (i32, i32) {
    %c0_i32 = arith.constant 0 : i32
    %c0_i32_0 = arith.constant 0 : i32
    %c0_i32_1 = arith.constant 0 : i32
    return %c0_i32, %c0_i32_0 : i32, i32
  }
  func.func @transform_6(%arg0: i32) -> (i32, i32) {
    %c0_i32 = arith.constant 0 : i32
    %c0_i32_0 = arith.constant 0 : i32
    %c0_i32_1 = arith.constant 0 : i32
    return %c0_i32, %c0_i32_0 : i32, i32
  }
  func.func @transform_7(%arg0: i32) -> (i32, i32) {
    %c0_i32 = arith.constant 0 : i32
    %c0_i32_0 = arith.constant 0 : i32
    %c0_i32_1 = arith.constant 0 : i32
    return %c0_i32, %c0_i32_0 : i32, i32
  }
  func.func @transform_8(%arg0: i32) -> (i32, i32) {
    %c0_i32 = arith.constant 0 : i32
    %c0_i32_0 = arith.constant 0 : i32
    %c0_i32_1 = arith.constant 0 : i32
    return %c0_i32, %c0_i32_0 : i32, i32
  }
  func.func @transform_9(%arg0: i32) -> (i32, i32) {
    %c0_i32 = arith.constant 0 : i32
    %c0_i32_0 = arith.constant 0 : i32
    %c0_i32_1 = arith.constant 0 : i32
    return %c0_i32, %c0_i32_0 : i32, i32
  }
  func.func @transform_10(%arg0: i32) -> (i32, i32) {
    %c0_i32 = arith.constant 0 : i32
    %c0_i32_0 = arith.constant 0 : i32
    %c0_i32_1 = arith.constant 0 : i32
    return %c0_i32, %c0_i32_0 : i32, i32
  }
  func.func @transform_11(%arg0: i32) -> (i32, i32) {
    %c0_i32 = arith.constant 0 : i32
    %c0_i32_0 = arith.constant 0 : i32
    %c0_i32_1 = arith.constant 0 : i32
    return %c0_i32, %c0_i32_0 : i32, i32
  }
  func.func @transform_12(%arg0: i32) -> (i32, i32) {
    %c0_i32 = arith.constant 0 : i32
    %c0_i32_0 = arith.constant 0 : i32
    return %arg0, %c0_i32 : i32, i32
  }
  func.func @transform_13(%arg0: i32) -> (i32, i32) {
    %c0_i32 = arith.constant 0 : i32
    %c0_i32_0 = arith.constant 0 : i32
    return %arg0, %c0_i32 : i32, i32
  }
  func.func @transform_14(%arg0: i32) -> (i32, i32) {
    %c0_i32 = arith.constant 0 : i32
    %c0_i32_0 = arith.constant 0 : i32
    return %arg0, %c0_i32 : i32, i32
  }
}

</mosaic_0001>

<llo_original>
// kernel: tpu_custom_call.1
$region0: #{tpu_custom_call.1}
  #allocation0 [shape = 'u32[]', space=smem, size = 0x4, offset = 0x4, fixed_abs, tag = 'smem constant byte address 0x4 - core index']
  #allocation1 [shape = 'u32[144,128]{1,0:T(1,128)}', space=vmem, size = 0x12000, scoped, tag = 'internal scratch']
  %s0 = inlined_call_operand.vmem [shape: f32[16,784], index: 0, kind: input, shape index: {}]
  %s1 = inlined_call_operand.vmem [shape: f32[16,20], index: 1, kind: input, shape index: {}]
  %s2 = inlined_call_operand.vmem [shape: bf16[784,400], index: 2, kind: input, shape index: {}]
  %s3 = inlined_call_operand.vmem [shape: f32[1,400], index: 3, kind: input, shape index: {}]
  %s4 = inlined_call_operand.vmem [shape: bf16[400,20], index: 4, kind: input, shape index: {}]
  %s5 = inlined_call_operand.vmem [shape: f32[1,20], index: 5, kind: input, shape index: {}]
  %s6 = inlined_call_operand.vmem [shape: bf16[400,20], index: 6, kind: input, shape index: {}]
  %s7 = inlined_call_operand.vmem [shape: f32[1,20], index: 7, kind: input, shape index: {}]
  %s8 = inlined_call_operand.vmem [shape: bf16[20,400], index: 8, kind: input, shape index: {}]
  %s9 = inlined_call_operand.vmem [shape: f32[1,400], index: 9, kind: input, shape index: {}]
  %s10 = inlined_call_operand.vmem [shape: bf16[400,784], index: 10, kind: input, shape index: {}]
  %s11 = inlined_call_operand.vmem [shape: f32[1,784], index: 11, kind: input, shape index: {}]
  %s12 = inlined_call_operand.hbm [shape: bf16[16,784], index: 12, kind: output, shape index: {0}]
  %s13 = inlined_call_operand.hbm [shape: f32[16,20], index: 13, kind: output, shape index: {1}]
  %s14 = inlined_call_operand.hbm [shape: f32[16,20], index: 14, kind: output, shape index: {2}]
  %15 = xla_tuple %s12, %s13, %s14
  %s16 = sld [smem:[#allocation0]]
  $region74: #{tpu_custom_call.1} parent=0
    _
  %s18 = ssub.s32 1, %s16
  %s19 = scalar_select 0, %s18, %s16
  $region1: #{tpu_custom_call.1} parent=0
    #allocation2 [shape = 'u8[28672]{0}', space=vmem, size = 0x7000, scoped, tag = 'output window, operand 0, single buffered']
    #allocation3 [shape = 's32[1]{0}', space=sflag, size = 0x4, scoped, tag = 'scoped memory for tpu_custom_call.1']
    #allocation4 [shape = 'u8[8192]{0}', space=vmem, size = 0x2000, scoped, tag = 'output window, operand 1, single buffered']
    #allocation5 [shape = 's32[1]{0}', space=sflag, size = 0x4, scoped, tag = 'scoped memory for tpu_custom_call.1']
    #allocation6 [shape = 'u8[8192]{0}', space=vmem, size = 0x2000, scoped, tag = 'output window, operand 2, single buffered']
    %20 = vsyncpa [#allocation3], 0
    %21 = vsyncpa [#allocation5], 0
    // Predicated region
    $region2: #{tpu_custom_call.1} parent=1 // pred_check
      _
    $region3: #{tpu_custom_call.1} parent=1 // pred_check_branch
      %23 = sbr.rel (0) target = $region5
    $region4: #{tpu_custom_call.1} parent=1 // pred_region
      _
    $region5: #{tpu_custom_call.1} parent=1 // pred_fallthru
      _
    // Predicated region
    $region6: #{tpu_custom_call.1} parent=1 // pred_check
      _
    $region7: #{tpu_custom_call.1} parent=1 // pred_check_branch
      %25 = sbr.rel (0) target = $region9
    $region8: #{tpu_custom_call.1} parent=1 // pred_region
      _
    $region9: #{tpu_custom_call.1} parent=1 // pred_fallthru
      _
    // Predicated region
    $region10: #{tpu_custom_call.1} parent=1 // pred_check
      _
    $region11: #{tpu_custom_call.1} parent=1 // pred_check_branch
      %27 = sbr.rel (0) target = $region13
    $region12: #{tpu_custom_call.1} parent=1 // pred_region
      _
    $region13: #{tpu_custom_call.1} parent=1 // pred_fallthru
      _
    // Predicated region
    $region14: #{tpu_custom_call.1} parent=1 // pred_check
      _
    $region15: #{tpu_custom_call.1} parent=1 // pred_check_branch
      %29 = sbr.rel (0) target = $region17
    $region16: #{tpu_custom_call.1} parent=1 // pred_region
      _
    $region17: #{tpu_custom_call.1} parent=1 // pred_fallthru
      _
    // Predicated region
    $region18: #{tpu_custom_call.1} parent=1 // pred_check
      _
    $region19: #{tpu_custom_call.1} parent=1 // pred_check_branch
      %31 = sbr.rel (0) target = $region21
    $region20: #{tpu_custom_call.1} parent=1 // pred_region
      _
    $region21: #{tpu_custom_call.1} parent=1 // pred_fallthru
      _
    // Predicated region
    $region22: #{tpu_custom_call.1} parent=1 // pred_check
      _
    $region23: #{tpu_custom_call.1} parent=1 // pred_check_branch
      %33 = sbr.rel (0) target = $region25
    $region24: #{tpu_custom_call.1} parent=1 // pred_region
      _
    $region25: #{tpu_custom_call.1} parent=1 // pred_fallthru
      _
    // Predicated region
    $region26: #{tpu_custom_call.1} parent=1 // pred_check
      _
    $region27: #{tpu_custom_call.1} parent=1 // pred_check_branch
      %35 = sbr.rel (0) target = $region29
    $region28: #{tpu_custom_call.1} parent=1 // pred_region
      _
    $region29: #{tpu_custom_call.1} parent=1 // pred_fallthru
      _
    // Predicated region
    $region30: #{tpu_custom_call.1} parent=1 // pred_check
      _
    $region31: #{tpu_custom_call.1} parent=1 // pred_check_branch
      %37 = sbr.rel (0) target = $region33
    $region32: #{tpu_custom_call.1} parent=1 // pred_region
      _
    $region33: #{tpu_custom_call.1} parent=1 // pred_fallthru
      _
    // Predicated region
    $region34: #{tpu_custom_call.1} parent=1 // pred_check
      _
    $region35: #{tpu_custom_call.1} parent=1 // pred_check_branch
      %39 = sbr.rel (0) target = $region37
    $region36: #{tpu_custom_call.1} parent=1 // pred_region
      _
    $region37: #{tpu_custom_call.1} parent=1 // pred_fallthru
      _
    // Predicated region
    $region38: #{tpu_custom_call.1} parent=1 // pred_check
      _
    $region39: #{tpu_custom_call.1} parent=1 // pred_check_branch
      %41 = sbr.rel (0) target = $region41
    $region40: #{tpu_custom_call.1} parent=1 // pred_region
      _
    $region41: #{tpu_custom_call.1} parent=1 // pred_fallthru
      _
    // Predicated region
    $region42: #{tpu_custom_call.1} parent=1 // pred_check
      _
    $region43: #{tpu_custom_call.1} parent=1 // pred_check_branch
      %43 = sbr.rel (0) target = $region45
    $region44: #{tpu_custom_call.1} parent=1 // pred_region
      _
    $region45: #{tpu_custom_call.1} parent=1 // pred_fallthru
      _
    // Predicated region
    $region46: #{tpu_custom_call.1} parent=1 // pred_check
      _
    $region47: #{tpu_custom_call.1} parent=1 // pred_check_branch
      %45 = sbr.rel (0) target = $region49
    $region48: #{tpu_custom_call.1} parent=1 // pred_region
      _
    $region49: #{tpu_custom_call.1} parent=1 // pred_fallthru
      _
    %v47 = vld [vmem:[%s0] sm:$0xff]
    %v48 = vld [vmem:[%s0 + $0x8] sm:$0xff]
    %v49 = vld [vmem:[%s0 + $0x10] sm:$0xff]
    %v50 = vld [vmem:[%s0 + $0x18] sm:$0xff]
    %v51 = vld [vmem:[%s0 + $0x20] sm:$0xff]
    %v52 = vld [vmem:[%s0 + $0x28] sm:$0xff]
    %v53 = vld [vmem:[%s0 + $0x30] sm:$0xff]
    %v54 = vld [vmem:[%s0 + $0x38] sm:$0xff]
    %v55 = vld [vmem:[%s0 + $0x40] sm:$0xff]
    %v56 = vld [vmem:[%s0 + $0x48] sm:$0xff]
    %v57 = vld [vmem:[%s0 + $0x50] sm:$0xff]
    %v58 = vld [vmem:[%s0 + $0x58] sm:$0xff]
    %v59 = vld [vmem:[%s0 + $0x60] sm:$0xff]
    %v60 = vld [vmem:[%s0 + $0x68] sm:$0xff]
    %v61 = vpack.c.bf16 %v54, %v47
    %v62 = vpack.c.bf16 %v55, %v48
    %v63 = vpack.c.bf16 %v56, %v49
    %v64 = vpack.c.bf16 %v57, %v50
    %v65 = vpack.c.bf16 %v58, %v51
    %v66 = vpack.c.bf16 %v59, %v52
    %v67 = vpack.c.bf16 %v60, %v53
    %v68 = vld [vmem:[%s2] sm:$0xff]
    %v69 = vld [vmem:[%s2 + $0x8] sm:$0xff]
    %v70 = vld [vmem:[%s2 + $0x10] sm:$0xff]
    %v71 = vld [vmem:[%s2 + $0x18] sm:$0xff]
    %v72 = vld [vmem:[%s2 + $0x20] sm:$0xff]
    %v73 = vld [vmem:[%s2 + $0x28] sm:$0xff]
    %v74 = vld [vmem:[%s2 + $0x30] sm:$0xff]
    %v75 = vld [vmem:[%s2 + $0x38] sm:$0xff]
    %v76 = vld [vmem:[%s2 + $0x40] sm:$0xff]
    %v77 = vld [vmem:[%s2 + $0x48] sm:$0xff]
    %v78 = vld [vmem:[%s2 + $0x50] sm:$0xff]
    %v79 = vld [vmem:[%s2 + $0x58] sm:$0xff]
    %v80 = vld [vmem:[%s2 + $0x60] sm:$0xff]
    %v81 = vld [vmem:[%s2 + $0x68] sm:$0xff]
    %v82 = vld [vmem:[%s2 + $0x70] sm:$0xff]
    %v83 = vld [vmem:[%s2 + $0x78] sm:$0xff]
    %v84 = vld [vmem:[%s2 + $0x80] sm:$0xff]
    %v85 = vld [vmem:[%s2 + $0x88] sm:$0xff]
    %v86 = vld [vmem:[%s2 + $0x90] sm:$0xff]
    %v87 = vld [vmem:[%s2 + $0x98] sm:$0xff]
    %v88 = vld [vmem:[%s2 + $0xa0] sm:$0xff]
    %v89 = vld [vmem:[%s2 + $0xa8] sm:$0xff]
    %v90 = vld [vmem:[%s2 + $0xb0] sm:$0xff]
    %v91 = vld [vmem:[%s2 + $0xb8] sm:$0xff]
    %v92 = vld [vmem:[%s2 + $0xc0] sm:$0xff]
    %v93 = vld [vmem:[%s2 + $0xc8] sm:$0xff]
    %v94 = vld [vmem:[%s2 + $0xd0] sm:$0xff]
    %v95 = vld [vmem:[%s2 + $0xd8] sm:$0xff]
    %v96 = vld [vmem:[%s2 + $0xe0] sm:$0xff]
    %v97 = vld [vmem:[%s2 + $0xe8] sm:$0xff]
    %v98 = vld [vmem:[%s2 + $0xf0] sm:$0xff]
    %v99 = vld [vmem:[%s2 + $0xf8] sm:$0xff]
    %v100 = vld [vmem:[%s2 + $0x100] sm:$0xff]
    %v101 = vld [vmem:[%s2 + $0x108] sm:$0xff]
    %v102 = vld [vmem:[%s2 + $0x110] sm:$0xff]
    %v103 = vld [vmem:[%s2 + $0x118] sm:$0xff]
    %v104 = vld [vmem:[%s2 + $0x120] sm:$0xff]
    %v105 = vld [vmem:[%s2 + $0x128] sm:$0xff]
    %v106 = vld [vmem:[%s2 + $0x130] sm:$0xff]
    %v107 = vld [vmem:[%s2 + $0x138] sm:$0xff]
    %v108 = vld [vmem:[%s2 + $0x140] sm:$0xff]
    %v109 = vld [vmem:[%s2 + $0x148] sm:$0xff]
    %v110 = vld [vmem:[%s2 + $0x150] sm:$0xff]
    %v111 = vld [vmem:[%s2 + $0x158] sm:$0xff]
    %v112 = vld [vmem:[%s2 + $0x160] sm:$0xff]
    %v113 = vld [vmem:[%s2 + $0x168] sm:$0xff]
    %v114 = vld [vmem:[%s2 + $0x170] sm:$0xff]
    %v115 = vld [vmem:[%s2 + $0x178] sm:$0xff]
    %v116 = vld [vmem:[%s2 + $0x180] sm:$0xff]
    %v117 = vld [vmem:[%s2 + $0x188] sm:$0xff]
    %v118 = vld [vmem:[%s2 + $0x190] sm:$0xff]
    %v119 = vld [vmem:[%s2 + $0x198] sm:$0xff]
    %v120 = vld [vmem:[%s2 + $0x1a0] sm:$0xff]
    %v121 = vld [vmem:[%s2 + $0x1a8] sm:$0xff]
    %v122 = vld [vmem:[%s2 + $0x1b0] sm:$0xff]
    %v123 = vld [vmem:[%s2 + $0x1b8] sm:$0xff]
    %v124 = vld [vmem:[%s2 + $0x1c0] sm:$0xff]
    %v125 = vld [vmem:[%s2 + $0x1c8] sm:$0xff]
    %v126 = vld [vmem:[%s2 + $0x1d0] sm:$0xff]
    %v127 = vld [vmem:[%s2 + $0x1d8] sm:$0xff]
    %v128 = vld [vmem:[%s2 + $0x1e0] sm:$0xff]
    %v129 = vld [vmem:[%s2 + $0x1e8] sm:$0xff]
    %v130 = vld [vmem:[%s2 + $0x1f0] sm:$0xff]
    %v131 = vld [vmem:[%s2 + $0x1f8] sm:$0xff]
    %v132 = vld [vmem:[%s2 + $0x200] sm:$0xff]
    %v133 = vld [vmem:[%s2 + $0x208] sm:$0xff]
    %v134 = vld [vmem:[%s2 + $0x210] sm:$0xff]
    %v135 = vld [vmem:[%s2 + $0x218] sm:$0xff]
    %v136 = vld [vmem:[%s2 + $0x220] sm:$0xff]
    %v137 = vld [vmem:[%s2 + $0x228] sm:$0xff]
    %v138 = vld [vmem:[%s2 + $0x230] sm:$0xff]
    %v139 = vld [vmem:[%s2 + $0x238] sm:$0xff]
    %v140 = vld [vmem:[%s2 + $0x240] sm:$0xff]
    %v141 = vld [vmem:[%s2 + $0x248] sm:$0xff]
    %v142 = vld [vmem:[%s2 + $0x250] sm:$0xff]
    %v143 = vld [vmem:[%s2 + $0x258] sm:$0xff]
    %v144 = vld [vmem:[%s2 + $0x260] sm:$0xff]
    %v145 = vld [vmem:[%s2 + $0x268] sm:$0xff]
    %v146 = vld [vmem:[%s2 + $0x270] sm:$0xff]
    %v147 = vld [vmem:[%s2 + $0x278] sm:$0xff]
    %v148 = vld [vmem:[%s2 + $0x280] sm:$0xff]
    %v149 = vld [vmem:[%s2 + $0x288] sm:$0xff]
    %v150 = vld [vmem:[%s2 + $0x290] sm:$0xff]
    %v151 = vld [vmem:[%s2 + $0x298] sm:$0xff]
    %v152 = vld [vmem:[%s2 + $0x2a0] sm:$0xff]
    %v153 = vld [vmem:[%s2 + $0x2a8] sm:$0xff]
    %v154 = vld [vmem:[%s2 + $0x2b0] sm:$0xff]
    %v155 = vld [vmem:[%s2 + $0x2b8] sm:$0xff]
    %v156 = vld [vmem:[%s2 + $0x2c0] sm:$0xff]
    %v157 = vld [vmem:[%s2 + $0x2c8] sm:$0xff]
    %v158 = vld [vmem:[%s2 + $0x2d0] sm:$0xff]
    %v159 = vld [vmem:[%s2 + $0x2d8] sm:$0xff]
    %v160 = vld [vmem:[%s2 + $0x2e0] sm:$0xff]
    %v161 = vld [vmem:[%s2 + $0x2e8] sm:$0xff]
    %v162 = vld [vmem:[%s2 + $0x2f0] sm:$0xff]
    %v163 = vld [vmem:[%s2 + $0x2f8] sm:$0xff]
    %v164 = vld [vmem:[%s2 + $0x300] sm:$0xff]
    %v165 = vld [vmem:[%s2 + $0x308] sm:$0xff]
    %v166 = vld [vmem:[%s2 + $0x310] sm:$0xff]
    %v167 = vld [vmem:[%s2 + $0x318] sm:$0xff]
    %v168 = vld [vmem:[%s2 + $0x320] sm:$0xff]
    %v169 = vld [vmem:[%s2 + $0x328] sm:$0xff]
    %v170 = vld [vmem:[%s2 + $0x330] sm:$0xff]
    %v171 = vld [vmem:[%s2 + $0x338] sm:$0xff]
    %v172 = vld [vmem:[%s2 + $0x340] sm:$0xff]
    %v173 = vld [vmem:[%s2 + $0x348] sm:$0xff]
    %v174 = vld [vmem:[%s2 + $0x350] sm:$0xff]
    %v175 = vld [vmem:[%s2 + $0x358] sm:$0xff]
    %v176 = vld [vmem:[%s2 + $0x360] sm:$0xff]
    %v177 = vld [vmem:[%s2 + $0x368] sm:$0xff]
    %v178 = vld [vmem:[%s2 + $0x370] sm:$0xff]
    %v179 = vld [vmem:[%s2 + $0x378] sm:$0xff]
    %v180 = vld [vmem:[%s2 + $0x380] sm:$0xff]
    %v181 = vld [vmem:[%s2 + $0x388] sm:$0xff]
    %v182 = vld [vmem:[%s2 + $0x390] sm:$0xff]
    %v183 = vld [vmem:[%s2 + $0x398] sm:$0xff]
    %v184 = vld [vmem:[%s2 + $0x3a0] sm:$0xff]
    %v185 = vld [vmem:[%s2 + $0x3a8] sm:$0xff]
    %v186 = vld [vmem:[%s2 + $0x3b0] sm:$0xff]
    %v187 = vld [vmem:[%s2 + $0x3b8] sm:$0xff]
    %v188 = vld [vmem:[%s2 + $0x3c0] sm:$0xff]
    %v189 = vld [vmem:[%s2 + $0x3c8] sm:$0xff]
    %v190 = vld [vmem:[%s2 + $0x3d0] sm:$0xff]
    %v191 = vld [vmem:[%s2 + $0x3d8] sm:$0xff]
    %v192 = vld [vmem:[%s2 + $0x3e0] sm:$0xff]
    %v193 = vld [vmem:[%s2 + $0x3e8] sm:$0xff]
    %v194 = vld [vmem:[%s2 + $0x3f0] sm:$0xff]
    %v195 = vld [vmem:[%s2 + $0x3f8] sm:$0xff]
    %v196 = vld [vmem:[%s2 + $0x400] sm:$0xff]
    %v197 = vld [vmem:[%s2 + $0x408] sm:$0xff]
    %v198 = vld [vmem:[%s2 + $0x410] sm:$0xff]
    %v199 = vld [vmem:[%s2 + $0x418] sm:$0xff]
    %v200 = vld [vmem:[%s2 + $0x420] sm:$0xff]
    %v201 = vld [vmem:[%s2 + $0x428] sm:$0xff]
    %v202 = vld [vmem:[%s2 + $0x430] sm:$0xff]
    %v203 = vld [vmem:[%s2 + $0x438] sm:$0xff]
    %v204 = vld [vmem:[%s2 + $0x440] sm:$0xff]
    %v205 = vld [vmem:[%s2 + $0x448] sm:$0xff]
    %v206 = vld [vmem:[%s2 + $0x450] sm:$0xff]
    %v207 = vld [vmem:[%s2 + $0x458] sm:$0xff]
    %v208 = vld [vmem:[%s2 + $0x460] sm:$0xff]
    %v209 = vld [vmem:[%s2 + $0x468] sm:$0xff]
    %v210 = vld [vmem:[%s2 + $0x470] sm:$0xff]
    %v211 = vld [vmem:[%s2 + $0x478] sm:$0xff]
    %v212 = vld [vmem:[%s2 + $0x480] sm:$0xff]
    %v213 = vld [vmem:[%s2 + $0x488] sm:$0xff]
    %v214 = vld [vmem:[%s2 + $0x490] sm:$0xff]
    %v215 = vld [vmem:[%s2 + $0x498] sm:$0xff]
    %v216 = vld [vmem:[%s2 + $0x4a0] sm:$0xff]
    %v217 = vld [vmem:[%s2 + $0x4a8] sm:$0xff]
    %v218 = vld [vmem:[%s2 + $0x4b0] sm:$0xff]
    %v219 = vld [vmem:[%s2 + $0x4b8] sm:$0xff]
    %v220 = vld [vmem:[%s2 + $0x4c0] sm:$0xff]
    %v221 = vld [vmem:[%s2 + $0x4c8] sm:$0xff]
    %v222 = vld [vmem:[%s2 + $0x4d0] sm:$0xff]
    %v223 = vld [vmem:[%s2 + $0x4d8] sm:$0xff]
    %v224 = vld [vmem:[%s2 + $0x4e0] sm:$0xff]
    %v225 = vld [vmem:[%s2 + $0x4e8] sm:$0xff]
    %v226 = vld [vmem:[%s2 + $0x4f0] sm:$0xff]
    %v227 = vld [vmem:[%s2 + $0x4f8] sm:$0xff]
    %v228 = vld [vmem:[%s2 + $0x500] sm:$0xff]
    %v229 = vld [vmem:[%s2 + $0x508] sm:$0xff]
    %v230 = vld [vmem:[%s2 + $0x510] sm:$0xff]
    %v231 = vld [vmem:[%s2 + $0x518] sm:$0xff]
    %v232 = vld [vmem:[%s2 + $0x520] sm:$0xff]
    %v233 = vld [vmem:[%s2 + $0x528] sm:$0xff]
    %v234 = vld [vmem:[%s2 + $0x530] sm:$0xff]
    %v235 = vld [vmem:[%s2 + $0x538] sm:$0xff]
    %v236 = vld [vmem:[%s2 + $0x540] sm:$0xff]
    %v237 = vld [vmem:[%s2 + $0x548] sm:$0xff]
    %v238 = vld [vmem:[%s2 + $0x550] sm:$0xff]
    %v239 = vld [vmem:[%s2 + $0x558] sm:$0xff]
    %v240 = vld [vmem:[%s2 + $0x560] sm:$0xff]
    %v241 = vld [vmem:[%s2 + $0x568] sm:$0xff]
    %v242 = vld [vmem:[%s2 + $0x570] sm:$0xff]
    %v243 = vld [vmem:[%s2 + $0x578] sm:$0xff]
    %v244 = vld [vmem:[%s2 + $0x580] sm:$0xff]
    %v245 = vld [vmem:[%s2 + $0x588] sm:$0xff]
    %v246 = vld [vmem:[%s2 + $0x590] sm:$0xff]
    %v247 = vld [vmem:[%s2 + $0x598] sm:$0xff]
    %v248 = vld [vmem:[%s2 + $0x5a0] sm:$0xff]
    %v249 = vld [vmem:[%s2 + $0x5a8] sm:$0xff]
    %v250 = vld [vmem:[%s2 + $0x5b0] sm:$0xff]
    %v251 = vld [vmem:[%s2 + $0x5b8] sm:$0xff]
    %v252 = vld [vmem:[%s2 + $0x5c0] sm:$0xff]
    %v253 = vld [vmem:[%s2 + $0x5c8] sm:$0xff]
    %v254 = vld [vmem:[%s2 + $0x5d0] sm:$0xff]
    %v255 = vld [vmem:[%s2 + $0x5d8] sm:$0xff]
    %v256 = vld [vmem:[%s2 + $0x5e0] sm:$0xff]
    %v257 = vld [vmem:[%s2 + $0x5e8] sm:$0xff]
    %v258 = vld [vmem:[%s2 + $0x5f0] sm:$0xff]
    %v259 = vld [vmem:[%s2 + $0x5f8] sm:$0xff]
    %v260 = vld [vmem:[%s2 + $0x600] sm:$0xff]
    %v261 = vld [vmem:[%s2 + $0x608] sm:$0xff]
    %v262 = vld [vmem:[%s2 + $0x610] sm:$0xff]
    %v263 = vld [vmem:[%s2 + $0x618] sm:$0xff]
    %v264 = vld [vmem:[%s3] sm:$0xf]
    %v266 = vlaneseq
    %v267 = vshrl.u32 %v266, 7
    %v268 = vsub.s32 0, %v267
    %v269 = vrot.slane %v264, %v268
    %v270 = vlaneseq
    %v271 = vshrl.u32 %v270, 7
    %v272 = vsub.s32 1, %v271
    %v273 = vrot.slane %v264, %v272
    %v274 = vlaneseq
    %v275 = vshrl.u32 %v274, 7
    %v276 = vsub.s32 2, %v275
    %v277 = vrot.slane %v264, %v276
    %v278 = vlaneseq
    %v279 = vshrl.u32 %v278, 7
    %v280 = vsub.s32 3, %v279
    %v281 = vrot.slane %v264, %v280
    %v482 = vunpack.c.l.b16 %v68
    %v483 = vunpack.c.h.b16 %v68
    %v484 = vunpack.c.l.b16 %v69
    %v485 = vunpack.c.h.b16 %v69
    %v486 = vunpack.c.l.b16 %v70
    %v487 = vunpack.c.h.b16 %v70
    %v488 = vunpack.c.l.b16 %v71
    %v489 = vunpack.c.h.b16 %v71
    %v490 = vunpack.c.l.b16 %v72
    %v491 = vunpack.c.h.b16 %v72
    %v492 = vunpack.c.l.b16 %v73
    %v493 = vunpack.c.h.b16 %v73
    %v494 = vunpack.c.l.b16 %v74
    %v495 = vunpack.c.h.b16 %v74
    %v496 = vunpack.c.l.b16 %v75
    %v497 = vunpack.c.h.b16 %v75
    %v498 = vunpack.c.l.b16 %v76
    %v499 = vunpack.c.h.b16 %v76
    %v500 = vunpack.c.l.b16 %v77
    %v501 = vunpack.c.h.b16 %v77
    %v502 = vunpack.c.l.b16 %v78
    %v503 = vunpack.c.h.b16 %v78
    %v504 = vunpack.c.l.b16 %v79
    %v505 = vunpack.c.h.b16 %v79
    %v506 = vunpack.c.l.b16 %v80
    %v507 = vunpack.c.h.b16 %v80
    %v508 = vunpack.c.l.b16 %v81
    %v509 = vunpack.c.h.b16 %v81
    %v510 = vunpack.c.l.b16 %v82
    %v511 = vunpack.c.h.b16 %v82
    %v512 = vunpack.c.l.b16 %v83
    %v513 = vunpack.c.h.b16 %v83
    %v514 = vunpack.c.l.b16 %v84
    %v515 = vunpack.c.h.b16 %v84
    %v516 = vunpack.c.l.b16 %v85
    %v517 = vunpack.c.h.b16 %v85
    %v518 = vunpack.c.l.b16 %v86
    %v519 = vunpack.c.h.b16 %v86
    %v520 = vunpack.c.l.b16 %v87
    %v521 = vunpack.c.h.b16 %v87
    %v522 = vunpack.c.l.b16 %v88
    %v523 = vunpack.c.h.b16 %v88
    %v524 = vunpack.c.l.b16 %v89
    %v525 = vunpack.c.h.b16 %v89
    %v526 = vunpack.c.l.b16 %v90
    %v527 = vunpack.c.h.b16 %v90
    %v528 = vunpack.c.l.b16 %v91
    %v529 = vunpack.c.h.b16 %v91
    %v530 = vunpack.c.l.b16 %v92
    %v531 = vunpack.c.h.b16 %v92
    %v532 = vunpack.c.l.b16 %v93
    %v533 = vunpack.c.h.b16 %v93
    %v534 = vunpack.c.l.b16 %v94
    %v535 = vunpack.c.h.b16 %v94
    %v536 = vunpack.c.l.b16 %v95
    %v537 = vunpack.c.h.b16 %v95
    %v538 = vunpack.c.l.b16 %v96
    %v539 = vunpack.c.h.b16 %v96
    %v540 = vunpack.c.l.b16 %v97
    %v541 = vunpack.c.h.b16 %v97
    %v542 = vunpack.c.l.b16 %v98
    %v543 = vunpack.c.h.b16 %v98
    %v544 = vunpack.c.l.b16 %v99
    %v545 = vunpack.c.h.b16 %v99
    %v546 = vunpack.c.l.b16 %v100
    %v547 = vunpack.c.h.b16 %v100
    %v548 = vunpack.c.l.b16 %v101
    %v549 = vunpack.c.h.b16 %v101
    %v550 = vunpack.c.l.b16 %v102
    %v551 = vunpack.c.h.b16 %v102
    %v552 = vunpack.c.l.b16 %v103
    %v553 = vunpack.c.h.b16 %v103
    %v554 = vunpack.c.l.b16 %v104
    %v555 = vunpack.c.h.b16 %v104
    %v556 = vunpack.c.l.b16 %v105
    %v557 = vunpack.c.h.b16 %v105
    %v558 = vunpack.c.l.b16 %v106
    %v559 = vunpack.c.h.b16 %v106
    %v560 = vunpack.c.l.b16 %v107
    %v561 = vunpack.c.h.b16 %v107
    %v562 = vunpack.c.l.b16 %v108
    %v563 = vunpack.c.h.b16 %v108
    %v564 = vunpack.c.l.b16 %v109
    %v565 = vunpack.c.h.b16 %v109
    %v566 = vunpack.c.l.b16 %v110
    %v567 = vunpack.c.h.b16 %v110
    %v568 = vunpack.c.l.b16 %v111
    %v569 = vunpack.c.h.b16 %v111
    %v570 = vunpack.c.l.b16 %v112
    %v571 = vunpack.c.h.b16 %v112
    %v572 = vunpack.c.l.b16 %v113
    %v573 = vunpack.c.h.b16 %v113
    %v574 = vunpack.c.l.b16 %v114
    %v575 = vunpack.c.h.b16 %v114
    %v576 = vunpack.c.l.b16 %v115
    %v577 = vunpack.c.h.b16 %v115
    %v578 = vunpack.c.l.b16 %v116
    %v579 = vunpack.c.h.b16 %v116
    %v580 = vunpack.c.l.b16 %v117
    %v581 = vunpack.c.h.b16 %v117
    %v582 = vunpack.c.l.b16 %v118
    %v583 = vunpack.c.h.b16 %v118
    %v584 = vunpack.c.l.b16 %v119
    %v585 = vunpack.c.h.b16 %v119
    %v586 = vunpack.c.l.b16 %v120
    %v587 = vunpack.c.h.b16 %v120
    %v588 = vunpack.c.l.b16 %v121
    %v589 = vunpack.c.h.b16 %v121
    %v590 = vunpack.c.l.b16 %v122
    %v591 = vunpack.c.h.b16 %v122
    %v592 = vunpack.c.l.b16 %v123
    %v593 = vunpack.c.h.b16 %v123
    %v594 = vunpack.c.l.b16 %v124
    %v595 = vunpack.c.h.b16 %v124
    %v596 = vunpack.c.l.b16 %v125
    %v597 = vunpack.c.h.b16 %v125
    %v598 = vunpack.c.l.b16 %v126
    %v599 = vunpack.c.h.b16 %v126
    %v600 = vunpack.c.l.b16 %v127
    %v601 = vunpack.c.h.b16 %v127
    %v602 = vunpack.c.l.b16 %v128
    %v603 = vunpack.c.h.b16 %v128
    %v604 = vunpack.c.l.b16 %v129
    %v605 = vunpack.c.h.b16 %v129
    %v606 = vunpack.c.l.b16 %v130
    %v607 = vunpack.c.h.b16 %v130
    %v608 = vunpack.c.l.b16 %v131
    %v609 = vunpack.c.h.b16 %v131
    %v610 = vunpack.c.l.b16 %v132
    %v611 = vunpack.c.h.b16 %v132
    %v612 = vunpack.c.l.b16 %v133
    %v613 = vunpack.c.h.b16 %v133
    %v614 = vunpack.c.l.b16 %v134
    %v615 = vunpack.c.h.b16 %v134
    %v616 = vunpack.c.l.b16 %v135
    %v617 = vunpack.c.h.b16 %v135
    %v618 = vunpack.c.l.b16 %v136
    %v619 = vunpack.c.h.b16 %v136
    %v620 = vunpack.c.l.b16 %v137
    %v621 = vunpack.c.h.b16 %v137
    %v622 = vunpack.c.l.b16 %v138
    %v623 = vunpack.c.h.b16 %v138
    %v624 = vunpack.c.l.b16 %v139
    %v625 = vunpack.c.h.b16 %v139
    %v626 = vunpack.c.l.b16 %v140
    %v627 = vunpack.c.h.b16 %v140
    %v628 = vunpack.c.l.b16 %v141
    %v629 = vunpack.c.h.b16 %v141
    %v630 = vunpack.c.l.b16 %v142
    %v631 = vunpack.c.h.b16 %v142
    %v632 = vunpack.c.l.b16 %v143
    %v633 = vunpack.c.h.b16 %v143
    %v634 = vunpack.c.l.b16 %v144
    %v635 = vunpack.c.h.b16 %v144
    %v636 = vunpack.c.l.b16 %v145
    %v637 = vunpack.c.h.b16 %v145
    %v638 = vunpack.c.l.b16 %v146
    %v639 = vunpack.c.h.b16 %v146
    %v640 = vunpack.c.l.b16 %v147
    %v641 = vunpack.c.h.b16 %v147
    %v642 = vunpack.c.l.b16 %v148
    %v643 = vunpack.c.h.b16 %v148
    %v644 = vunpack.c.l.b16 %v149
    %v645 = vunpack.c.h.b16 %v149
    %v646 = vunpack.c.l.b16 %v150
    %v647 = vunpack.c.h.b16 %v150
    %v648 = vunpack.c.l.b16 %v151
    %v649 = vunpack.c.h.b16 %v151
    %v650 = vunpack.c.l.b16 %v152
    %v651 = vunpack.c.h.b16 %v152
    %v652 = vunpack.c.l.b16 %v153
    %v653 = vunpack.c.h.b16 %v153
    %v654 = vunpack.c.l.b16 %v154
    %v655 = vunpack.c.h.b16 %v154
    %v656 = vunpack.c.l.b16 %v155
    %v657 = vunpack.c.h.b16 %v155
    %v658 = vunpack.c.l.b16 %v156
    %v659 = vunpack.c.h.b16 %v156
    %v660 = vunpack.c.l.b16 %v157
    %v661 = vunpack.c.h.b16 %v157
    %v662 = vunpack.c.l.b16 %v158
    %v663 = vunpack.c.h.b16 %v158
    %v664 = vunpack.c.l.b16 %v159
    %v665 = vunpack.c.h.b16 %v159
    %v666 = vunpack.c.l.b16 %v160
    %v667 = vunpack.c.h.b16 %v160
    %v668 = vunpack.c.l.b16 %v161
    %v669 = vunpack.c.h.b16 %v161
    %v670 = vunpack.c.l.b16 %v162
    %v671 = vunpack.c.h.b16 %v162
    %v672 = vunpack.c.l.b16 %v163
    %v673 = vunpack.c.h.b16 %v163
    %v674 = vunpack.c.l.b16 %v164
    %v675 = vunpack.c.h.b16 %v164
    %v676 = vunpack.c.l.b16 %v165
    %v677 = vunpack.c.h.b16 %v165
    %v678 = vunpack.c.l.b16 %v166
    %v679 = vunpack.c.h.b16 %v166
    %v680 = vunpack.c.l.b16 %v167
    %v681 = vunpack.c.h.b16 %v167
    %v682 = vunpack.c.l.b16 %v168
    %v683 = vunpack.c.h.b16 %v168
    %v684 = vunpack.c.l.b16 %v169
    %v685 = vunpack.c.h.b16 %v169
    %v686 = vunpack.c.l.b16 %v170
    %v687 = vunpack.c.h.b16 %v170
    %v688 = vunpack.c.l.b16 %v171
    %v689 = vunpack.c.h.b16 %v171
    %v690 = vunpack.c.l.b16 %v172
    %v691 = vunpack.c.h.b16 %v172
    %v692 = vunpack.c.l.b16 %v173
    %v693 = vunpack.c.h.b16 %v173
    %v694 = vunpack.c.l.b16 %v174
    %v695 = vunpack.c.h.b16 %v174
    %v696 = vunpack.c.l.b16 %v175
    %v697 = vunpack.c.h.b16 %v175
    %v698 = vunpack.c.l.b16 %v176
    %v699 = vunpack.c.h.b16 %v176
    %v700 = vunpack.c.l.b16 %v177
    %v701 = vunpack.c.h.b16 %v177
    %v702 = vunpack.c.l.b16 %v178
    %v703 = vunpack.c.h.b16 %v178
    %v704 = vunpack.c.l.b16 %v179
    %v705 = vunpack.c.h.b16 %v179
    %v706 = vunpack.c.l.b16 %v180
    %v707 = vunpack.c.h.b16 %v180
    %v708 = vunpack.c.l.b16 %v181
    %v709 = vunpack.c.h.b16 %v181
    %v710 = vunpack.c.l.b16 %v182
    %v711 = vunpack.c.h.b16 %v182
    %v712 = vunpack.c.l.b16 %v183
    %v713 = vunpack.c.h.b16 %v183
    %v714 = vunpack.c.l.b16 %v184
    %v715 = vunpack.c.h.b16 %v184
    %v716 = vunpack.c.l.b16 %v185
    %v717 = vunpack.c.h.b16 %v185
    %v718 = vunpack.c.l.b16 %v186
    %v719 = vunpack.c.h.b16 %v186
    %v720 = vunpack.c.l.b16 %v187
    %v721 = vunpack.c.h.b16 %v187
    %v722 = vunpack.c.l.b16 %v188
    %v723 = vunpack.c.h.b16 %v188
    %v724 = vunpack.c.l.b16 %v189
    %v725 = vunpack.c.h.b16 %v189
    %v726 = vunpack.c.l.b16 %v190
    %v727 = vunpack.c.h.b16 %v190
    %v728 = vunpack.c.l.b16 %v191
    %v729 = vunpack.c.h.b16 %v191
    %v730 = vunpack.c.l.b16 %v192
    %v731 = vunpack.c.h.b16 %v192
    %v732 = vunpack.c.l.b16 %v193
    %v733 = vunpack.c.h.b16 %v193
    %v734 = vunpack.c.l.b16 %v194
    %v735 = vunpack.c.h.b16 %v194
    %v736 = vunpack.c.l.b16 %v195
    %v737 = vunpack.c.h.b16 %v195
    %v738 = vunpack.c.l.b16 %v196
    %v739 = vunpack.c.h.b16 %v196
    %v740 = vunpack.c.l.b16 %v197
    %v741 = vunpack.c.h.b16 %v197
    %v742 = vunpack.c.l.b16 %v198
    %v743 = vunpack.c.h.b16 %v198
    %v744 = vunpack.c.l.b16 %v199
    %v745 = vunpack.c.h.b16 %v199
    %v746 = vunpack.c.l.b16 %v200
    %v747 = vunpack.c.h.b16 %v200
    %v748 = vunpack.c.l.b16 %v201
    %v749 = vunpack.c.h.b16 %v201
    %v750 = vunpack.c.l.b16 %v202
    %v751 = vunpack.c.h.b16 %v202
    %v752 = vunpack.c.l.b16 %v203
    %v753 = vunpack.c.h.b16 %v203
    %v754 = vunpack.c.l.b16 %v204
    %v755 = vunpack.c.h.b16 %v204
    %v756 = vunpack.c.l.b16 %v205
    %v757 = vunpack.c.h.b16 %v205
    %v758 = vunpack.c.l.b16 %v206
    %v759 = vunpack.c.h.b16 %v206
    %v760 = vunpack.c.l.b16 %v207
    %v761 = vunpack.c.h.b16 %v207
    %v762 = vunpack.c.l.b16 %v208
    %v763 = vunpack.c.h.b16 %v208
    %v764 = vunpack.c.l.b16 %v209
    %v765 = vunpack.c.h.b16 %v209
    %v766 = vunpack.c.l.b16 %v210
    %v767 = vunpack.c.h.b16 %v210
    %v768 = vunpack.c.l.b16 %v211
    %v769 = vunpack.c.h.b16 %v211
    %v770 = vunpack.c.l.b16 %v212
    %v771 = vunpack.c.h.b16 %v212
    %v772 = vunpack.c.l.b16 %v213
    %v773 = vunpack.c.h.b16 %v213
    %v774 = vunpack.c.l.b16 %v214
    %v775 = vunpack.c.h.b16 %v214
    %v776 = vunpack.c.l.b16 %v215
    %v777 = vunpack.c.h.b16 %v215
    %v778 = vunpack.c.l.b16 %v216
    %v779 = vunpack.c.h.b16 %v216
    %v780 = vunpack.c.l.b16 %v217
    %v781 = vunpack.c.h.b16 %v217
    %v782 = vunpack.c.l.b16 %v218
    %v783 = vunpack.c.h.b16 %v218
    %v784 = vunpack.c.l.b16 %v219
    %v785 = vunpack.c.h.b16 %v219
    %v786 = vunpack.c.l.b16 %v220
    %v787 = vunpack.c.h.b16 %v220
    %v788 = vunpack.c.l.b16 %v221
    %v789 = vunpack.c.h.b16 %v221
    %v790 = vunpack.c.l.b16 %v222
    %v791 = vunpack.c.h.b16 %v222
    %v792 = vunpack.c.l.b16 %v223
    %v793 = vunpack.c.h.b16 %v223
    %v794 = vunpack.c.l.b16 %v224
    %v795 = vunpack.c.h.b16 %v224
    %v796 = vunpack.c.l.b16 %v225
    %v797 = vunpack.c.h.b16 %v225
    %v798 = vunpack.c.l.b16 %v226
    %v799 = vunpack.c.h.b16 %v226
    %v800 = vunpack.c.l.b16 %v227
    %v801 = vunpack.c.h.b16 %v227
    %v802 = vunpack.c.l.b16 %v228
    %v803 = vunpack.c.h.b16 %v228
    %v804 = vunpack.c.l.b16 %v229
    %v805 = vunpack.c.h.b16 %v229
    %v806 = vunpack.c.l.b16 %v230
    %v807 = vunpack.c.h.b16 %v230
    %v808 = vunpack.c.l.b16 %v231
    %v809 = vunpack.c.h.b16 %v231
    %v810 = vunpack.c.l.b16 %v232
    %v811 = vunpack.c.h.b16 %v232
    %v812 = vunpack.c.l.b16 %v233
    %v813 = vunpack.c.h.b16 %v233
    %v814 = vunpack.c.l.b16 %v234
    %v815 = vunpack.c.h.b16 %v234
    %v816 = vunpack.c.l.b16 %v235
    %v817 = vunpack.c.h.b16 %v235
    %v818 = vunpack.c.l.b16 %v236
    %v819 = vunpack.c.h.b16 %v236
    %v820 = vunpack.c.l.b16 %v237
    %v821 = vunpack.c.h.b16 %v237
    %v822 = vunpack.c.l.b16 %v238
    %v823 = vunpack.c.h.b16 %v238
    %v824 = vunpack.c.l.b16 %v239
    %v825 = vunpack.c.h.b16 %v239
    %v826 = vunpack.c.l.b16 %v240
    %v827 = vunpack.c.h.b16 %v240
    %v828 = vunpack.c.l.b16 %v241
    %v829 = vunpack.c.h.b16 %v241
    %v830 = vunpack.c.l.b16 %v242
    %v831 = vunpack.c.h.b16 %v242
    %v832 = vunpack.c.l.b16 %v243
    %v833 = vunpack.c.h.b16 %v243
    %v834 = vunpack.c.l.b16 %v244
    %v835 = vunpack.c.h.b16 %v244
    %v836 = vunpack.c.l.b16 %v245
    %v837 = vunpack.c.h.b16 %v245
    %v838 = vunpack.c.l.b16 %v246
    %v839 = vunpack.c.h.b16 %v246
    %v840 = vunpack.c.l.b16 %v247
    %v841 = vunpack.c.h.b16 %v247
    %v842 = vunpack.c.l.b16 %v248
    %v843 = vunpack.c.h.b16 %v248
    %v844 = vunpack.c.l.b16 %v249
    %v845 = vunpack.c.h.b16 %v249
    %v846 = vunpack.c.l.b16 %v250
    %v847 = vunpack.c.h.b16 %v250
    %v848 = vunpack.c.l.b16 %v251
    %v849 = vunpack.c.h.b16 %v251
    %v850 = vunpack.c.l.b16 %v252
    %v851 = vunpack.c.h.b16 %v252
    %v852 = vunpack.c.l.b16 %v253
    %v853 = vunpack.c.h.b16 %v253
    %v854 = vunpack.c.l.b16 %v254
    %v855 = vunpack.c.h.b16 %v254
    %v856 = vunpack.c.l.b16 %v255
    %v857 = vunpack.c.h.b16 %v255
    %v858 = vunpack.c.l.b16 %v256
    %v859 = vunpack.c.h.b16 %v256
    %v860 = vunpack.c.l.b16 %v257
    %v861 = vunpack.c.h.b16 %v257
    %v862 = vunpack.c.l.b16 %v258
    %v863 = vunpack.c.h.b16 %v258
    %v864 = vunpack.c.l.b16 %v259
    %v865 = vunpack.c.h.b16 %v259
    %v866 = vunpack.c.l.b16 %v260
    %v867 = vunpack.c.h.b16 %v260
    %v868 = vunpack.c.l.b16 %v261
    %v869 = vunpack.c.h.b16 %v261
    %v870 = vunpack.c.l.b16 %v262
    %v871 = vunpack.c.h.b16 %v262
    %v872 = vunpack.c.l.b16 %v263
    %v873 = vunpack.c.h.b16 %v263
    %v874 = vpack.c.b16 %v486, %v482
    %v875 = vpack.c.b16 %v487, %v483
    %v876 = vpack.c.b16 %v488, %v484
    %v877 = vpack.c.b16 %v489, %v485
    %v878 = vpack.c.b16 %v494, %v490
    %v879 = vpack.c.b16 %v495, %v491
    %v880 = vpack.c.b16 %v496, %v492
    %v881 = vpack.c.b16 %v497, %v493
    %v882 = vpack.c.b16 %v502, %v498
    %v883 = vpack.c.b16 %v503, %v499
    %v884 = vpack.c.b16 %v504, %v500
    %v885 = vpack.c.b16 %v505, %v501
    %v886 = vpack.c.b16 %v510, %v506
    %v887 = vpack.c.b16 %v511, %v507
    %v888 = vpack.c.b16 %v512, %v508
    %v889 = vpack.c.b16 %v513, %v509
    %v890 = vpack.c.b16 %v518, %v514
    %v891 = vpack.c.b16 %v519, %v515
    %v892 = vpack.c.b16 %v520, %v516
    %v893 = vpack.c.b16 %v521, %v517
    %v894 = vpack.c.b16 %v526, %v522
    %v895 = vpack.c.b16 %v527, %v523
    %v896 = vpack.c.b16 %v528, %v524
    %v897 = vpack.c.b16 %v529, %v525
    %v898 = vpack.c.b16 %v534, %v530
    %v899 = vpack.c.b16 %v535, %v531
    %v900 = vpack.c.b16 %v536, %v532
    %v901 = vpack.c.b16 %v537, %v533
    %v902 = vpack.c.b16 %v542, %v538
    %v903 = vpack.c.b16 %v543, %v539
    %v904 = vpack.c.b16 %v544, %v540
    %v905 = vpack.c.b16 %v545, %v541
    %v906 = vpack.c.b16 %v550, %v546
    %v907 = vpack.c.b16 %v551, %v547
    %v908 = vpack.c.b16 %v552, %v548
    %v909 = vpack.c.b16 %v553, %v549
    %v910 = vpack.c.b16 %v558, %v554
    %v911 = vpack.c.b16 %v559, %v555
    %v912 = vpack.c.b16 %v560, %v556
    %v913 = vpack.c.b16 %v561, %v557
    %v914 = vpack.c.b16 %v566, %v562
    %v915 = vpack.c.b16 %v567, %v563
    %v916 = vpack.c.b16 %v568, %v564
    %v917 = vpack.c.b16 %v569, %v565
    %v918 = vpack.c.b16 %v574, %v570
    %v919 = vpack.c.b16 %v575, %v571
    %v920 = vpack.c.b16 %v576, %v572
    %v921 = vpack.c.b16 %v577, %v573
    %v922 = vpack.c.b16 %v582, %v578
    %v923 = vpack.c.b16 %v583, %v579
    %v924 = vpack.c.b16 %v584, %v580
    %v925 = vpack.c.b16 %v585, %v581
    %v926 = vpack.c.b16 %v590, %v586
    %v927 = vpack.c.b16 %v591, %v587
    %v928 = vpack.c.b16 %v592, %v588
    %v929 = vpack.c.b16 %v593, %v589
    %v930 = vpack.c.b16 %v598, %v594
    %v931 = vpack.c.b16 %v599, %v595
    %v932 = vpack.c.b16 %v600, %v596
    %v933 = vpack.c.b16 %v601, %v597
    %v934 = vpack.c.b16 %v606, %v602
    %v935 = vpack.c.b16 %v607, %v603
    %v936 = vpack.c.b16 %v608, %v604
    %v937 = vpack.c.b16 %v609, %v605
    %v938 = vpack.c.b16 %v614, %v610
    %v939 = vpack.c.b16 %v615, %v611
    %v940 = vpack.c.b16 %v616, %v612
    %v941 = vpack.c.b16 %v617, %v613
    %v942 = vpack.c.b16 %v622, %v618
    %v943 = vpack.c.b16 %v623, %v619
    %v944 = vpack.c.b16 %v624, %v620
    %v945 = vpack.c.b16 %v625, %v621
    %v946 = vpack.c.b16 %v630, %v626
    %v947 = vpack.c.b16 %v631, %v627
    %v948 = vpack.c.b16 %v632, %v628
    %v949 = vpack.c.b16 %v633, %v629
    %v950 = vpack.c.b16 %v638, %v634
    %v951 = vpack.c.b16 %v639, %v635
    %v952 = vpack.c.b16 %v640, %v636
    %v953 = vpack.c.b16 %v641, %v637
    %v954 = vpack.c.b16 %v646, %v642
    %v955 = vpack.c.b16 %v647, %v643
    %v956 = vpack.c.b16 %v648, %v644
    %v957 = vpack.c.b16 %v649, %v645
    %v958 = vpack.c.b16 %v654, %v650
    %v959 = vpack.c.b16 %v655, %v651
    %v960 = vpack.c.b16 %v656, %v652
    %v961 = vpack.c.b16 %v657, %v653
    %v962 = vpack.c.b16 %v662, %v658
    %v963 = vpack.c.b16 %v663, %v659
    %v964 = vpack.c.b16 %v664, %v660
    %v965 = vpack.c.b16 %v665, %v661
    %v966 = vpack.c.b16 %v670, %v666
    %v967 = vpack.c.b16 %v671, %v667
    %v968 = vpack.c.b16 %v672, %v668
    %v969 = vpack.c.b16 %v673, %v669
    %v970 = vpack.c.b16 %v678, %v674
    %v971 = vpack.c.b16 %v679, %v675
    %v972 = vpack.c.b16 %v680, %v676
    %v973 = vpack.c.b16 %v681, %v677
    %v974 = vpack.c.b16 %v686, %v682
    %v975 = vpack.c.b16 %v687, %v683
    %v976 = vpack.c.b16 %v688, %v684
    %v977 = vpack.c.b16 %v689, %v685
    %v978 = vpack.c.b16 %v694, %v690
    %v979 = vpack.c.b16 %v695, %v691
    %v980 = vpack.c.b16 %v696, %v692
    %v981 = vpack.c.b16 %v697, %v693
    %v982 = vpack.c.b16 %v702, %v698
    %v983 = vpack.c.b16 %v703, %v699
    %v984 = vpack.c.b16 %v704, %v700
    %v985 = vpack.c.b16 %v705, %v701
    %v986 = vpack.c.b16 %v710, %v706
    %v987 = vpack.c.b16 %v711, %v707
    %v988 = vpack.c.b16 %v712, %v708
    %v989 = vpack.c.b16 %v713, %v709
    %v990 = vpack.c.b16 %v718, %v714
    %v991 = vpack.c.b16 %v719, %v715
    %v992 = vpack.c.b16 %v720, %v716
    %v993 = vpack.c.b16 %v721, %v717
    %v994 = vpack.c.b16 %v726, %v722
    %v995 = vpack.c.b16 %v727, %v723
    %v996 = vpack.c.b16 %v728, %v724
    %v997 = vpack.c.b16 %v729, %v725
    %v998 = vpack.c.b16 %v734, %v730
    %v999 = vpack.c.b16 %v735, %v731
    %v1000 = vpack.c.b16 %v736, %v732
    %v1001 = vpack.c.b16 %v737, %v733
    %v1002 = vpack.c.b16 %v742, %v738
    %v1003 = vpack.c.b16 %v743, %v739
    %v1004 = vpack.c.b16 %v744, %v740
    %v1005 = vpack.c.b16 %v745, %v741
    %v1006 = vpack.c.b16 %v750, %v746
    %v1007 = vpack.c.b16 %v751, %v747
    %v1008 = vpack.c.b16 %v752, %v748
    %v1009 = vpack.c.b16 %v753, %v749
    %v1010 = vpack.c.b16 %v758, %v754
    %v1011 = vpack.c.b16 %v759, %v755
    %v1012 = vpack.c.b16 %v760, %v756
    %v1013 = vpack.c.b16 %v761, %v757
    %v1014 = vpack.c.b16 %v766, %v762
    %v1015 = vpack.c.b16 %v767, %v763
    %v1016 = vpack.c.b16 %v768, %v764
    %v1017 = vpack.c.b16 %v769, %v765
    %v1018 = vpack.c.b16 %v774, %v770
    %v1019 = vpack.c.b16 %v775, %v771
    %v1020 = vpack.c.b16 %v776, %v772
    %v1021 = vpack.c.b16 %v777, %v773
    %v1022 = vpack.c.b16 %v782, %v778
    %v1023 = vpack.c.b16 %v783, %v779
    %v1024 = vpack.c.b16 %v784, %v780
    %v1025 = vpack.c.b16 %v785, %v781
    %v1026 = vpack.c.b16 %v790, %v786
    %v1027 = vpack.c.b16 %v791, %v787
    %v1028 = vpack.c.b16 %v792, %v788
    %v1029 = vpack.c.b16 %v793, %v789
    %v1030 = vpack.c.b16 %v798, %v794
    %v1031 = vpack.c.b16 %v799, %v795
    %v1032 = vpack.c.b16 %v800, %v796
    %v1033 = vpack.c.b16 %v801, %v797
    %v1034 = vpack.c.b16 %v806, %v802
    %v1035 = vpack.c.b16 %v807, %v803
    %v1036 = vpack.c.b16 %v808, %v804
    %v1037 = vpack.c.b16 %v809, %v805
    %v1038 = vpack.c.b16 %v814, %v810
    %v1039 = vpack.c.b16 %v815, %v811
    %v1040 = vpack.c.b16 %v816, %v812
    %v1041 = vpack.c.b16 %v817, %v813
    %v1042 = vpack.c.b16 %v822, %v818
    %v1043 = vpack.c.b16 %v823, %v819
    %v1044 = vpack.c.b16 %v824, %v820
    %v1045 = vpack.c.b16 %v825, %v821
    %v1046 = vpack.c.b16 %v830, %v826
    %v1047 = vpack.c.b16 %v831, %v827
    %v1048 = vpack.c.b16 %v832, %v828
    %v1049 = vpack.c.b16 %v833, %v829
    %v1050 = vpack.c.b16 %v838, %v834
    %v1051 = vpack.c.b16 %v839, %v835
    %v1052 = vpack.c.b16 %v840, %v836
    %v1053 = vpack.c.b16 %v841, %v837
    %v1054 = vpack.c.b16 %v846, %v842
    %v1055 = vpack.c.b16 %v847, %v843
    %v1056 = vpack.c.b16 %v848, %v844
    %v1057 = vpack.c.b16 %v849, %v845
    %v1058 = vpack.c.b16 %v854, %v850
    %v1059 = vpack.c.b16 %v855, %v851
    %v1060 = vpack.c.b16 %v856, %v852
    %v1061 = vpack.c.b16 %v857, %v853
    %v1062 = vpack.c.b16 %v862, %v858
    %v1063 = vpack.c.b16 %v863, %v859
    %v1064 = vpack.c.b16 %v864, %v860
    %v1065 = vpack.c.b16 %v865, %v861
    %v1066 = vpack.c.b16 %v870, %v866
    %v1067 = vpack.c.b16 %v871, %v867
    %v1068 = vpack.c.b16 %v872, %v868
    %v1069 = vpack.c.b16 %v873, %v869
    %vm1266 = vcmask 130048
    %v1268 = vsel %vm1266, %v67, 0
    %1270 = vmatprep.subr.bf16.mxu0 %v903
    %1271 = vmatpush1.bf16.msra.mxu0 %v902
    %1272 = vmatprep.subr.bf16.mxu0 %v899
    %1273 = vmatpush1.bf16.msra.mxu0 %v898
    %1274 = vmatprep.subr.bf16.mxu0 %v895
    %1275 = vmatpush1.bf16.msra.mxu0 %v894
    %1276 = vmatprep.subr.bf16.mxu0 %v891
    %1277 = vmatpush1.bf16.msra.mxu0 %v890
    %1278 = vmatprep.subr.bf16.mxu0 %v887
    %1279 = vmatpush1.bf16.msra.mxu0 %v886
    %1280 = vmatprep.subr.bf16.mxu0 %v883
    %1281 = vmatpush1.bf16.msra.mxu0 %v882
    %1282 = vmatprep.subr.bf16.mxu0 %v879
    %1283 = vmatpush1.bf16.msra.mxu0 %v878
    %1284 = vmatprep.subr.bf16.mxu0 %v875
    %1285 = vmatpush1.bf16.msra.mxu0 %v874
    %1286 = vmatprep.subr.bf16.mxu0 %v935
    %1287 = vmatpush2.bf16.msra.mxu0 %v934
    %1288 = vmatprep.subr.bf16.mxu0 %v931
    %1289 = vmatpush2.bf16.msra.mxu0 %v930
    %1290 = vmatprep.subr.bf16.mxu0 %v927
    %1291 = vmatpush2.bf16.msra.mxu0 %v926
    %1292 = vmatprep.subr.bf16.mxu0 %v923
    %1293 = vmatpush2.bf16.msra.mxu0 %v922
    %1294 = vmatprep.subr.bf16.mxu0 %v919
    %1295 = vmatpush2.bf16.msra.mxu0 %v918
    %1296 = vmatprep.subr.bf16.mxu0 %v915
    %1297 = vmatpush2.bf16.msra.mxu0 %v914
    %1298 = vmatprep.subr.bf16.mxu0 %v911
    %1299 = vmatpush2.bf16.msra.mxu0 %v910
    %1300 = vmatprep.subr.bf16.mxu0 %v907
    %1301 = vmatpush2.bf16.msra.mxu0 %v906
    %1302 = vmatprep.mubr.bf16.mxu0 %v62
    %1303 = vmatmul.mubr.bf16.gmra.mxu0 %v61
    %v1304 = vpop.f32.mrf.mxu0
    %v1305 = vadd.f32 %v269, %v1304
    %v1306 = vpop.f32.mrf.mxu0
    %v1307 = vadd.f32 %v273, %v1306
    %v1308 = vpop.f32.mrf.mxu0
    %v1309 = vadd.f32 %v269, %v1308
    %v1310 = vpop.f32.mrf.mxu0
    %v1311 = vadd.f32 %v273, %v1310
    %1312 = vdwg.mxu0
    %1313 = vmatprep.subr.bf16.mxu0 %v967
    %1314 = vmatpush1.bf16.msra.mxu0 %v966
    %1315 = vmatprep.subr.bf16.mxu0 %v963
    %1316 = vmatpush1.bf16.msra.mxu0 %v962
    %1317 = vmatprep.subr.bf16.mxu0 %v959
    %1318 = vmatpush1.bf16.msra.mxu0 %v958
    %1319 = vmatprep.subr.bf16.mxu0 %v955
    %1320 = vmatpush1.bf16.msra.mxu0 %v954
    %1321 = vmatprep.subr.bf16.mxu0 %v951
    %1322 = vmatpush1.bf16.msra.mxu0 %v950
    %1323 = vmatprep.subr.bf16.mxu0 %v947
    %1324 = vmatpush1.bf16.msra.mxu0 %v946
    %1325 = vmatprep.subr.bf16.mxu0 %v943
    %1326 = vmatpush1.bf16.msra.mxu0 %v942
    %1327 = vmatprep.subr.bf16.mxu0 %v939
    %1328 = vmatpush1.bf16.msra.mxu0 %v938
    %1329 = vmatprep.subr.bf16.mxu0 %v999
    %1330 = vmatpush2.bf16.msra.mxu0 %v998
    %1331 = vmatprep.subr.bf16.mxu0 %v995
    %1332 = vmatpush2.bf16.msra.mxu0 %v994
    %1333 = vmatprep.subr.bf16.mxu0 %v991
    %1334 = vmatpush2.bf16.msra.mxu0 %v990
    %1335 = vmatprep.subr.bf16.mxu0 %v987
    %1336 = vmatpush2.bf16.msra.mxu0 %v986
    %1337 = vmatprep.subr.bf16.mxu0 %v983
    %1338 = vmatpush2.bf16.msra.mxu0 %v982
    %1339 = vmatprep.subr.bf16.mxu0 %v979
    %1340 = vmatpush2.bf16.msra.mxu0 %v978
    %1341 = vmatprep.subr.bf16.mxu0 %v975
    %1342 = vmatpush2.bf16.msra.mxu0 %v974
    %1343 = vmatprep.subr.bf16.mxu0 %v971
    %1344 = vmatpush2.bf16.msra.mxu0 %v970
    %1345 = vmatprep.mubr.bf16.mxu0 %v64
    %1346 = vmatmul.mubr.bf16.gmra.mxu0 %v63
    %v1347 = vpop.f32.mrf.mxu0
    %v1348 = vadd.f32 %v1305, %v1347
    %v1349 = vpop.f32.mrf.mxu0
    %v1350 = vadd.f32 %v1307, %v1349
    %v1351 = vpop.f32.mrf.mxu0
    %v1352 = vadd.f32 %v1309, %v1351
    %v1353 = vpop.f32.mrf.mxu0
    %v1354 = vadd.f32 %v1311, %v1353
    %1355 = vdwg.mxu0
    %1356 = vmatprep.subr.bf16.mxu0 %v1031
    %1357 = vmatpush1.bf16.msra.mxu0 %v1030
    %1358 = vmatprep.subr.bf16.mxu0 %v1027
    %1359 = vmatpush1.bf16.msra.mxu0 %v1026
    %1360 = vmatprep.subr.bf16.mxu0 %v1023
    %1361 = vmatpush1.bf16.msra.mxu0 %v1022
    %1362 = vmatprep.subr.bf16.mxu0 %v1019
    %1363 = vmatpush1.bf16.msra.mxu0 %v1018
    %1364 = vmatprep.subr.bf16.mxu0 %v1015
    %1365 = vmatpush1.bf16.msra.mxu0 %v1014
    %1366 = vmatprep.subr.bf16.mxu0 %v1011
    %1367 = vmatpush1.bf16.msra.mxu0 %v1010
    %1368 = vmatprep.subr.bf16.mxu0 %v1007
    %1369 = vmatpush1.bf16.msra.mxu0 %v1006
    %1370 = vmatprep.subr.bf16.mxu0 %v1003
    %1371 = vmatpush1.bf16.msra.mxu0 %v1002
    %1372 = vmatprep.subr.bf16.mxu0 %v1063
    %1373 = vmatpush2.bf16.msra.mxu0 %v1062
    %1374 = vmatprep.subr.bf16.mxu0 %v1059
    %1375 = vmatpush2.bf16.msra.mxu0 %v1058
    %1376 = vmatprep.subr.bf16.mxu0 %v1055
    %1377 = vmatpush2.bf16.msra.mxu0 %v1054
    %1378 = vmatprep.subr.bf16.mxu0 %v1051
    %1379 = vmatpush2.bf16.msra.mxu0 %v1050
    %1380 = vmatprep.subr.bf16.mxu0 %v1047
    %1381 = vmatpush2.bf16.msra.mxu0 %v1046
    %1382 = vmatprep.subr.bf16.mxu0 %v1043
    %1383 = vmatpush2.bf16.msra.mxu0 %v1042
    %1384 = vmatprep.subr.bf16.mxu0 %v1039
    %1385 = vmatpush2.bf16.msra.mxu0 %v1038
    %1386 = vmatprep.subr.bf16.mxu0 %v1035
    %1387 = vmatpush2.bf16.msra.mxu0 %v1034
    %1388 = vmatprep.mubr.bf16.mxu0 %v66
    %1389 = vmatmul.mubr.bf16.gmra.mxu0 %v65
    %v1390 = vpop.f32.mrf.mxu0
    %v1391 = vadd.f32 %v1348, %v1390
    %v1392 = vpop.f32.mrf.mxu0
    %v1393 = vadd.f32 %v1350, %v1392
    %v1394 = vpop.f32.mrf.mxu0
    %v1395 = vadd.f32 %v1352, %v1394
    %v1396 = vpop.f32.mrf.mxu0
    %v1397 = vadd.f32 %v1354, %v1396
    %1398 = vdwg.mxu0
    %1399 = vmatprep.subr.bf16.mxu0 0
    %1400 = vmatpush1.bf16.msra.mxu0 0
    %1401 = vmatprep.subr.bf16.mxu0 0
    %1402 = vmatpush1.bf16.msra.mxu0 0
    %1403 = vmatprep.subr.bf16.mxu0 0
    %1404 = vmatpush1.bf16.msra.mxu0 0
    %1405 = vmatprep.subr.bf16.mxu0 0
    %1406 = vmatpush1.bf16.msra.mxu0 0
    %1407 = vmatprep.subr.bf16.mxu0 0
    %1408 = vmatpush1.bf16.msra.mxu0 0
    %1409 = vmatprep.subr.bf16.mxu0 0
    %1410 = vmatpush1.bf16.msra.mxu0 0
    %1411 = vmatprep.subr.bf16.mxu0 0
    %1412 = vmatpush1.bf16.msra.mxu0 0
    %1413 = vmatprep.subr.bf16.mxu0 %v1067
    %1414 = vmatpush1.bf16.msra.mxu0 %v1066
    %1415 = vmatprep.subr.bf16.mxu0 0
    %1416 = vmatpush2.bf16.msra.mxu0 0
    %1417 = vmatprep.subr.bf16.mxu0 0
    %1418 = vmatpush2.bf16.msra.mxu0 0
    %1419 = vmatprep.subr.bf16.mxu0 0
    %1420 = vmatpush2.bf16.msra.mxu0 0
    %1421 = vmatprep.subr.bf16.mxu0 0
    %1422 = vmatpush2.bf16.msra.mxu0 0
    %1423 = vmatprep.subr.bf16.mxu0 0
    %1424 = vmatpush2.bf16.msra.mxu0 0
    %1425 = vmatprep.subr.bf16.mxu0 0
    %1426 = vmatpush2.bf16.msra.mxu0 0
    %1427 = vmatprep.subr.bf16.mxu0 0
    %1428 = vmatpush2.bf16.msra.mxu0 0
    %1429 = vmatprep.subr.bf16.mxu0 0
    %1430 = vmatpush2.bf16.msra.mxu0 0
    %1431 = vmatprep.mubr.bf16.mxu0 0
    %1432 = vmatmul.mubr.bf16.gmra.mxu0 %v1268
    %v1433 = vpop.f32.mrf.mxu0
    %v1434 = vadd.f32 %v1391, %v1433
    %v1435 = vpop.f32.mrf.mxu0
    %v1436 = vadd.f32 %v1393, %v1435
    %v1437 = vpop.f32.mrf.mxu0
    %v1438 = vadd.f32 %v1395, %v1437
    %v1439 = vpop.f32.mrf.mxu0
    %v1440 = vadd.f32 %v1397, %v1439
    %1441 = vdwg.mxu0
    %1442 = vmatprep.subr.bf16.mxu0 %v905
    %1443 = vmatpush1.bf16.msra.mxu0 %v904
    %1444 = vmatprep.subr.bf16.mxu0 %v901
    %1445 = vmatpush1.bf16.msra.mxu0 %v900
    %1446 = vmatprep.subr.bf16.mxu0 %v897
    %1447 = vmatpush1.bf16.msra.mxu0 %v896
    %1448 = vmatprep.subr.bf16.mxu0 %v893
    %1449 = vmatpush1.bf16.msra.mxu0 %v892
    %1450 = vmatprep.subr.bf16.mxu0 %v889
    %1451 = vmatpush1.bf16.msra.mxu0 %v888
    %1452 = vmatprep.subr.bf16.mxu0 %v885
    %1453 = vmatpush1.bf16.msra.mxu0 %v884
    %1454 = vmatprep.subr.bf16.mxu0 %v881
    %1455 = vmatpush1.bf16.msra.mxu0 %v880
    %1456 = vmatprep.subr.bf16.mxu0 %v877
    %1457 = vmatpush1.bf16.msra.mxu0 %v876
    %1458 = vmatprep.subr.bf16.mxu0 %v937
    %1459 = vmatpush2.bf16.msra.mxu0 %v936
    %1460 = vmatprep.subr.bf16.mxu0 %v933
    %1461 = vmatpush2.bf16.msra.mxu0 %v932
    %1462 = vmatprep.subr.bf16.mxu0 %v929
    %1463 = vmatpush2.bf16.msra.mxu0 %v928
    %1464 = vmatprep.subr.bf16.mxu0 %v925
    %1465 = vmatpush2.bf16.msra.mxu0 %v924
    %1466 = vmatprep.subr.bf16.mxu0 %v921
    %1467 = vmatpush2.bf16.msra.mxu0 %v920
    %1468 = vmatprep.subr.bf16.mxu0 %v917
    %1469 = vmatpush2.bf16.msra.mxu0 %v916
    %1470 = vmatprep.subr.bf16.mxu0 %v913
    %1471 = vmatpush2.bf16.msra.mxu0 %v912
    %1472 = vmatprep.subr.bf16.mxu0 %v909
    %1473 = vmatpush2.bf16.msra.mxu0 %v908
    %1474 = vmatprep.mubr.bf16.mxu0 %v62
    %1475 = vmatmul.mubr.bf16.gmra.mxu0 %v61
    %v1476 = vpop.f32.mrf.mxu0
    %v1477 = vadd.f32 %v277, %v1476
    %v1478 = vpop.f32.mrf.mxu0
    %v1479 = vadd.f32 %v281, %v1478
    %v1480 = vpop.f32.mrf.mxu0
    %v1481 = vadd.f32 %v277, %v1480
    %v1482 = vpop.f32.mrf.mxu0
    %v1483 = vadd.f32 %v281, %v1482
    %1484 = vdwg.mxu0
    %1485 = vmatprep.subr.bf16.mxu0 %v969
    %1486 = vmatpush1.bf16.msra.mxu0 %v968
    %1487 = vmatprep.subr.bf16.mxu0 %v965
    %1488 = vmatpush1.bf16.msra.mxu0 %v964
    %1489 = vmatprep.subr.bf16.mxu0 %v961
    %1490 = vmatpush1.bf16.msra.mxu0 %v960
    %1491 = vmatprep.subr.bf16.mxu0 %v957
    %1492 = vmatpush1.bf16.msra.mxu0 %v956
    %1493 = vmatprep.subr.bf16.mxu0 %v953
    %1494 = vmatpush1.bf16.msra.mxu0 %v952
    %1495 = vmatprep.subr.bf16.mxu0 %v949
    %1496 = vmatpush1.bf16.msra.mxu0 %v948
    %1497 = vmatprep.subr.bf16.mxu0 %v945
    %1498 = vmatpush1.bf16.msra.mxu0 %v944
    %1499 = vmatprep.subr.bf16.mxu0 %v941
    %1500 = vmatpush1.bf16.msra.mxu0 %v940
    %1501 = vmatprep.subr.bf16.mxu0 %v1001
    %1502 = vmatpush2.bf16.msra.mxu0 %v1000
    %1503 = vmatprep.subr.bf16.mxu0 %v997
    %1504 = vmatpush2.bf16.msra.mxu0 %v996
    %1505 = vmatprep.subr.bf16.mxu0 %v993
    %1506 = vmatpush2.bf16.msra.mxu0 %v992
    %1507 = vmatprep.subr.bf16.mxu0 %v989
    %1508 = vmatpush2.bf16.msra.mxu0 %v988
    %1509 = vmatprep.subr.bf16.mxu0 %v985
    %1510 = vmatpush2.bf16.msra.mxu0 %v984
    %1511 = vmatprep.subr.bf16.mxu0 %v981
    %1512 = vmatpush2.bf16.msra.mxu0 %v980
    %1513 = vmatprep.subr.bf16.mxu0 %v977
    %1514 = vmatpush2.bf16.msra.mxu0 %v976
    %1515 = vmatprep.subr.bf16.mxu0 %v973
    %1516 = vmatpush2.bf16.msra.mxu0 %v972
    %1517 = vmatprep.mubr.bf16.mxu0 %v64
    %1518 = vmatmul.mubr.bf16.gmra.mxu0 %v63
    %v1519 = vpop.f32.mrf.mxu0
    %v1520 = vadd.f32 %v1477, %v1519
    %v1521 = vpop.f32.mrf.mxu0
    %v1522 = vadd.f32 %v1479, %v1521
    %v1523 = vpop.f32.mrf.mxu0
    %v1524 = vadd.f32 %v1481, %v1523
    %v1525 = vpop.f32.mrf.mxu0
    %v1526 = vadd.f32 %v1483, %v1525
    %1527 = vdwg.mxu0
    %1528 = vmatprep.subr.bf16.mxu0 %v1033
    %1529 = vmatpush1.bf16.msra.mxu0 %v1032
    %1530 = vmatprep.subr.bf16.mxu0 %v1029
    %1531 = vmatpush1.bf16.msra.mxu0 %v1028
    %1532 = vmatprep.subr.bf16.mxu0 %v1025
    %1533 = vmatpush1.bf16.msra.mxu0 %v1024
    %1534 = vmatprep.subr.bf16.mxu0 %v1021
    %1535 = vmatpush1.bf16.msra.mxu0 %v1020
    %1536 = vmatprep.subr.bf16.mxu0 %v1017
    %1537 = vmatpush1.bf16.msra.mxu0 %v1016
    %1538 = vmatprep.subr.bf16.mxu0 %v1013
    %1539 = vmatpush1.bf16.msra.mxu0 %v1012
    %1540 = vmatprep.subr.bf16.mxu0 %v1009
    %1541 = vmatpush1.bf16.msra.mxu0 %v1008
    %1542 = vmatprep.subr.bf16.mxu0 %v1005
    %1543 = vmatpush1.bf16.msra.mxu0 %v1004
    %1544 = vmatprep.subr.bf16.mxu0 %v1065
    %1545 = vmatpush2.bf16.msra.mxu0 %v1064
    %1546 = vmatprep.subr.bf16.mxu0 %v1061
    %1547 = vmatpush2.bf16.msra.mxu0 %v1060
    %1548 = vmatprep.subr.bf16.mxu0 %v1057
    %1549 = vmatpush2.bf16.msra.mxu0 %v1056
    %1550 = vmatprep.subr.bf16.mxu0 %v1053
    %1551 = vmatpush2.bf16.msra.mxu0 %v1052
    %1552 = vmatprep.subr.bf16.mxu0 %v1049
    %1553 = vmatpush2.bf16.msra.mxu0 %v1048
    %1554 = vmatprep.subr.bf16.mxu0 %v1045
    %1555 = vmatpush2.bf16.msra.mxu0 %v1044
    %1556 = vmatprep.subr.bf16.mxu0 %v1041
    %1557 = vmatpush2.bf16.msra.mxu0 %v1040
    %1558 = vmatprep.subr.bf16.mxu0 %v1037
    %1559 = vmatpush2.bf16.msra.mxu0 %v1036
    %1560 = vmatprep.mubr.bf16.mxu0 %v66
    %1561 = vmatmul.mubr.bf16.gmra.mxu0 %v65
    %v1562 = vpop.f32.mrf.mxu0
    %v1563 = vadd.f32 %v1520, %v1562
    %v1564 = vpop.f32.mrf.mxu0
    %v1565 = vadd.f32 %v1522, %v1564
    %v1566 = vpop.f32.mrf.mxu0
    %v1567 = vadd.f32 %v1524, %v1566
    %v1568 = vpop.f32.mrf.mxu0
    %v1569 = vadd.f32 %v1526, %v1568
    %1570 = vdwg.mxu0
    %1571 = vmatprep.subr.bf16.mxu0 0
    %1572 = vmatpush1.bf16.msra.mxu0 0
    %1573 = vmatprep.subr.bf16.mxu0 0
    %1574 = vmatpush1.bf16.msra.mxu0 0
    %1575 = vmatprep.subr.bf16.mxu0 0
    %1576 = vmatpush1.bf16.msra.mxu0 0
    %1577 = vmatprep.subr.bf16.mxu0 0
    %1578 = vmatpush1.bf16.msra.mxu0 0
    %1579 = vmatprep.subr.bf16.mxu0 0
    %1580 = vmatpush1.bf16.msra.mxu0 0
    %1581 = vmatprep.subr.bf16.mxu0 0
    %1582 = vmatpush1.bf16.msra.mxu0 0
    %1583 = vmatprep.subr.bf16.mxu0 0
    %1584 = vmatpush1.bf16.msra.mxu0 0
    %1585 = vmatprep.subr.bf16.mxu0 %v1069
    %1586 = vmatpush1.bf16.msra.mxu0 %v1068
    %1587 = vmatprep.subr.bf16.mxu0 0
    %1588 = vmatpush2.bf16.msra.mxu0 0
    %1589 = vmatprep.subr.bf16.mxu0 0
    %1590 = vmatpush2.bf16.msra.mxu0 0
    %1591 = vmatprep.subr.bf16.mxu0 0
    %1592 = vmatpush2.bf16.msra.mxu0 0
    %1593 = vmatprep.subr.bf16.mxu0 0
    %1594 = vmatpush2.bf16.msra.mxu0 0
    %1595 = vmatprep.subr.bf16.mxu0 0
    %1596 = vmatpush2.bf16.msra.mxu0 0
    %1597 = vmatprep.subr.bf16.mxu0 0
    %1598 = vmatpush2.bf16.msra.mxu0 0
    %1599 = vmatprep.subr.bf16.mxu0 0
    %1600 = vmatpush2.bf16.msra.mxu0 0
    %1601 = vmatprep.subr.bf16.mxu0 0
    %1602 = vmatpush2.bf16.msra.mxu0 0
    %1603 = vmatprep.mubr.bf16.mxu0 0
    %1604 = vmatmul.mubr.bf16.gmra.mxu0 %v1268
    %v1605 = vpop.f32.mrf.mxu0
    %v1606 = vadd.f32 %v1563, %v1605
    %v1607 = vpop.f32.mrf.mxu0
    %v1608 = vadd.f32 %v1565, %v1607
    %v1609 = vpop.f32.mrf.mxu0
    %v1610 = vadd.f32 %v1567, %v1609
    %v1611 = vpop.f32.mrf.mxu0
    %v1612 = vadd.f32 %v1569, %v1611
    %1613 = vdwg.mxu0
    %v1614 = vmax.f32 %v1434, 0.0
    %v1615 = vmax.f32 %v1436, 0.0
    %v1616 = vmax.f32 %v1606, 0.0
    %v1617 = vmax.f32 %v1608, 0.0
    %v1618 = vmax.f32 %v1438, 0.0
    %v1619 = vmax.f32 %v1440, 0.0
    %v1620 = vmax.f32 %v1610, 0.0
    %v1621 = vmax.f32 %v1612, 0.0
    %v1622 = vpack.c.bf16 %v1618, %v1614
    %v1623 = vpack.c.bf16 %v1619, %v1615
    %v1624 = vpack.c.bf16 %v1620, %v1616
    %v1625 = vpack.c.bf16 %v1621, %v1617
    %v1626 = vld [vmem:[%s4] sm:$0xf]
    %v1627 = vld [vmem:[%s4 + $0x4] sm:$0xf]
    %v1628 = vld [vmem:[%s4 + $0x8] sm:$0xf]
    %v1629 = vld [vmem:[%s4 + $0xc] sm:$0xf]
    %v1630 = vld [vmem:[%s4 + $0x10] sm:$0xf]
    %v1631 = vld [vmem:[%s4 + $0x14] sm:$0xf]
    %v1632 = vld [vmem:[%s4 + $0x18] sm:$0xf]
    %v1633 = vld [vmem:[%s4 + $0x1c] sm:$0xf]
    %v1634 = vld [vmem:[%s4 + $0x20] sm:$0xf]
    %v1635 = vld [vmem:[%s4 + $0x24] sm:$0xf]
    %v1636 = vld [vmem:[%s4 + $0x28] sm:$0xf]
    %v1637 = vld [vmem:[%s4 + $0x2c] sm:$0xf]
    %v1638 = vld [vmem:[%s4 + $0x30] sm:$0xf]
    %v1639 = vld [vmem:[%s4 + $0x34] sm:$0xf]
    %v1640 = vld [vmem:[%s4 + $0x38] sm:$0xf]
    %v1641 = vld [vmem:[%s4 + $0x3c] sm:$0xf]
    %v1642 = vld [vmem:[%s4 + $0x40] sm:$0xf]
    %v1643 = vld [vmem:[%s4 + $0x44] sm:$0xf]
    %v1644 = vld [vmem:[%s4 + $0x48] sm:$0xf]
    %v1645 = vld [vmem:[%s4 + $0x4c] sm:$0xf]
    %v1646 = vld [vmem:[%s4 + $0x50] sm:$0xf]
    %v1647 = vld [vmem:[%s4 + $0x54] sm:$0xf]
    %v1648 = vld [vmem:[%s4 + $0x58] sm:$0xf]
    %v1649 = vld [vmem:[%s4 + $0x5c] sm:$0xf]
    %v1650 = vld [vmem:[%s4 + $0x60] sm:$0xf]
    %v1651 = vld [vmem:[%s4 + $0x64] sm:$0xf]
    %v1652 = vld [vmem:[%s4 + $0x68] sm:$0xf]
    %v1653 = vld [vmem:[%s4 + $0x6c] sm:$0xf]
    %v1654 = vld [vmem:[%s4 + $0x70] sm:$0xf]
    %v1655 = vld [vmem:[%s4 + $0x74] sm:$0xf]
    %v1656 = vld [vmem:[%s4 + $0x78] sm:$0xf]
    %v1657 = vld [vmem:[%s4 + $0x7c] sm:$0xf]
    %v1658 = vld [vmem:[%s4 + $0x80] sm:$0xf]
    %v1659 = vld [vmem:[%s4 + $0x84] sm:$0xf]
    %v1660 = vld [vmem:[%s4 + $0x88] sm:$0xf]
    %v1661 = vld [vmem:[%s4 + $0x8c] sm:$0xf]
    %v1662 = vld [vmem:[%s4 + $0x90] sm:$0xf]
    %v1663 = vld [vmem:[%s4 + $0x94] sm:$0xf]
    %v1664 = vld [vmem:[%s4 + $0x98] sm:$0xf]
    %v1665 = vld [vmem:[%s4 + $0x9c] sm:$0xf]
    %v1666 = vld [vmem:[%s4 + $0xa0] sm:$0xf]
    %v1667 = vld [vmem:[%s4 + $0xa4] sm:$0xf]
    %v1668 = vld [vmem:[%s4 + $0xa8] sm:$0xf]
    %v1669 = vld [vmem:[%s4 + $0xac] sm:$0xf]
    %v1670 = vld [vmem:[%s4 + $0xb0] sm:$0xf]
    %v1671 = vld [vmem:[%s4 + $0xb4] sm:$0xf]
    %v1672 = vld [vmem:[%s4 + $0xb8] sm:$0xf]
    %v1673 = vld [vmem:[%s4 + $0xbc] sm:$0xf]
    %v1674 = vld [vmem:[%s4 + $0xc0] sm:$0xf]
    %v1675 = vld [vmem:[%s4 + $0xc4] sm:$0xf]
    %v1676 = vld [vmem:[%s5] sm:$0x1]
    %v1678 = vlaneseq
    %v1679 = vshrl.u32 %v1678, 7
    %v1680 = vsub.s32 0, %v1679
    %v1681 = vrot.slane %v1676, %v1680
    %v1733 = vunpack.c.l.b16 %v1626
    %v1734 = vunpack.c.l.b16 %v1627
    %v1735 = vunpack.c.l.b16 %v1628
    %v1736 = vunpack.c.l.b16 %v1629
    %v1737 = vunpack.c.l.b16 %v1630
    %v1738 = vunpack.c.l.b16 %v1631
    %v1739 = vunpack.c.l.b16 %v1632
    %v1740 = vunpack.c.l.b16 %v1633
    %v1741 = vunpack.c.l.b16 %v1634
    %v1742 = vunpack.c.l.b16 %v1635
    %v1743 = vunpack.c.l.b16 %v1636
    %v1744 = vunpack.c.l.b16 %v1637
    %v1745 = vunpack.c.l.b16 %v1638
    %v1746 = vunpack.c.l.b16 %v1639
    %v1747 = vunpack.c.l.b16 %v1640
    %v1748 = vunpack.c.l.b16 %v1641
    %v1749 = vunpack.c.l.b16 %v1642
    %v1750 = vunpack.c.l.b16 %v1643
    %v1751 = vunpack.c.l.b16 %v1644
    %v1752 = vunpack.c.l.b16 %v1645
    %v1753 = vunpack.c.l.b16 %v1646
    %v1754 = vunpack.c.l.b16 %v1647
    %v1755 = vunpack.c.l.b16 %v1648
    %v1756 = vunpack.c.l.b16 %v1649
    %v1757 = vunpack.c.l.b16 %v1650
    %v1758 = vunpack.c.l.b16 %v1651
    %v1759 = vunpack.c.l.b16 %v1652
    %v1760 = vunpack.c.l.b16 %v1653
    %v1761 = vunpack.c.l.b16 %v1654
    %v1762 = vunpack.c.l.b16 %v1655
    %v1763 = vunpack.c.l.b16 %v1656
    %v1764 = vunpack.c.l.b16 %v1657
    %v1765 = vunpack.c.l.b16 %v1658
    %v1766 = vunpack.c.l.b16 %v1659
    %v1767 = vunpack.c.l.b16 %v1660
    %v1768 = vunpack.c.l.b16 %v1661
    %v1769 = vunpack.c.l.b16 %v1662
    %v1770 = vunpack.c.l.b16 %v1663
    %v1771 = vunpack.c.l.b16 %v1664
    %v1772 = vunpack.c.l.b16 %v1665
    %v1773 = vunpack.c.l.b16 %v1666
    %v1774 = vunpack.c.l.b16 %v1667
    %v1775 = vunpack.c.l.b16 %v1668
    %v1776 = vunpack.c.l.b16 %v1669
    %v1777 = vunpack.c.l.b16 %v1670
    %v1778 = vunpack.c.l.b16 %v1671
    %v1779 = vunpack.c.l.b16 %v1672
    %v1780 = vunpack.c.l.b16 %v1673
    %v1781 = vunpack.c.l.b16 %v1674
    %v1782 = vunpack.c.l.b16 %v1675
    %v1783 = vpack.c.b16 %v1734, %v1733
    %v1784 = vpack.c.b16 %v1736, %v1735
    %v1785 = vpack.c.b16 %v1738, %v1737
    %v1786 = vpack.c.b16 %v1740, %v1739
    %v1787 = vpack.c.b16 %v1742, %v1741
    %v1788 = vpack.c.b16 %v1744, %v1743
    %v1789 = vpack.c.b16 %v1746, %v1745
    %v1790 = vpack.c.b16 %v1748, %v1747
    %v1791 = vpack.c.b16 %v1750, %v1749
    %v1792 = vpack.c.b16 %v1752, %v1751
    %v1793 = vpack.c.b16 %v1754, %v1753
    %v1794 = vpack.c.b16 %v1756, %v1755
    %v1795 = vpack.c.b16 %v1758, %v1757
    %v1796 = vpack.c.b16 %v1760, %v1759
    %v1797 = vpack.c.b16 %v1762, %v1761
    %v1798 = vpack.c.b16 %v1764, %v1763
    %v1799 = vpack.c.b16 %v1766, %v1765
    %v1800 = vpack.c.b16 %v1768, %v1767
    %v1801 = vpack.c.b16 %v1770, %v1769
    %v1802 = vpack.c.b16 %v1772, %v1771
    %v1803 = vpack.c.b16 %v1774, %v1773
    %v1804 = vpack.c.b16 %v1776, %v1775
    %v1805 = vpack.c.b16 %v1778, %v1777
    %v1806 = vpack.c.b16 %v1780, %v1779
    %v1807 = vpack.c.b16 %v1782, %v1781
    %v1834 = vsel %vm1266, %v1625, 0
    %1836 = vmatprep.subr.bf16.mxu0 0
    %1837 = vmatpush1.bf16.msra.mxu0 %v1790
    %1838 = vmatprep.subr.bf16.mxu0 0
    %1839 = vmatpush1.bf16.msra.mxu0 %v1789
    %1840 = vmatprep.subr.bf16.mxu0 0
    %1841 = vmatpush1.bf16.msra.mxu0 %v1788
    %1842 = vmatprep.subr.bf16.mxu0 0
    %1843 = vmatpush1.bf16.msra.mxu0 %v1787
    %1844 = vmatprep.subr.bf16.mxu0 0
    %1845 = vmatpush1.bf16.msra.mxu0 %v1786
    %1846 = vmatprep.subr.bf16.mxu0 0
    %1847 = vmatpush1.bf16.msra.mxu0 %v1785
    %1848 = vmatprep.subr.bf16.mxu0 0
    %1849 = vmatpush1.bf16.msra.mxu0 %v1784
    %1850 = vmatprep.subr.bf16.mxu0 0
    %1851 = vmatpush1.bf16.msra.mxu0 %v1783
    %1852 = vmatprep.subr.bf16.mxu0 0
    %1853 = vmatpush2.bf16.msra.mxu0 %v1798
    %1854 = vmatprep.subr.bf16.mxu0 0
    %1855 = vmatpush2.bf16.msra.mxu0 %v1797
    %1856 = vmatprep.subr.bf16.mxu0 0
    %1857 = vmatpush2.bf16.msra.mxu0 %v1796
    %1858 = vmatprep.subr.bf16.mxu0 0
    %1859 = vmatpush2.bf16.msra.mxu0 %v1795
    %1860 = vmatprep.subr.bf16.mxu0 0
    %1861 = vmatpush2.bf16.msra.mxu0 %v1794
    %1862 = vmatprep.subr.bf16.mxu0 0
    %1863 = vmatpush2.bf16.msra.mxu0 %v1793
    %1864 = vmatprep.subr.bf16.mxu0 0
    %1865 = vmatpush2.bf16.msra.mxu0 %v1792
    %1866 = vmatprep.subr.bf16.mxu0 0
    %1867 = vmatpush2.bf16.msra.mxu0 %v1791
    %1868 = vmatprep.mubr.bf16.mxu0 %v1623
    %1869 = vmatmul.mubr.bf16.gmra.mxu0 %v1622
    %v1870 = vpop.f32.mrf.mxu0
    %v1871 = vadd.f32 %v1681, %v1870
    %v1872 = vpop.f32.mrf.mxu0
    %v1873 = vpop.f32.mrf.mxu0
    %v1874 = vadd.f32 %v1681, %v1873
    %v1875 = vpop.f32.mrf.mxu0
    %1876 = vdwg.mxu0
    %1877 = vmatprep.subr.bf16.mxu0 0
    %1878 = vmatpush1.bf16.msra.mxu0 %v1806
    %1879 = vmatprep.subr.bf16.mxu0 0
    %1880 = vmatpush1.bf16.msra.mxu0 %v1805
    %1881 = vmatprep.subr.bf16.mxu0 0
    %1882 = vmatpush1.bf16.msra.mxu0 %v1804
    %1883 = vmatprep.subr.bf16.mxu0 0
    %1884 = vmatpush1.bf16.msra.mxu0 %v1803
    %1885 = vmatprep.subr.bf16.mxu0 0
    %1886 = vmatpush1.bf16.msra.mxu0 %v1802
    %1887 = vmatprep.subr.bf16.mxu0 0
    %1888 = vmatpush1.bf16.msra.mxu0 %v1801
    %1889 = vmatprep.subr.bf16.mxu0 0
    %1890 = vmatpush1.bf16.msra.mxu0 %v1800
    %1891 = vmatprep.subr.bf16.mxu0 0
    %1892 = vmatpush1.bf16.msra.mxu0 %v1799
    %1893 = vmatprep.subr.bf16.mxu0 0
    %1894 = vmatpush2.bf16.msra.mxu0 0
    %1895 = vmatprep.subr.bf16.mxu0 0
    %1896 = vmatpush2.bf16.msra.mxu0 0
    %1897 = vmatprep.subr.bf16.mxu0 0
    %1898 = vmatpush2.bf16.msra.mxu0 0
    %1899 = vmatprep.subr.bf16.mxu0 0
    %1900 = vmatpush2.bf16.msra.mxu0 0
    %1901 = vmatprep.subr.bf16.mxu0 0
    %1902 = vmatpush2.bf16.msra.mxu0 0
    %1903 = vmatprep.subr.bf16.mxu0 0
    %1904 = vmatpush2.bf16.msra.mxu0 0
    %1905 = vmatprep.subr.bf16.mxu0 0
    %1906 = vmatpush2.bf16.msra.mxu0 0
    %1907 = vmatprep.subr.bf16.mxu0 0
    %1908 = vmatpush2.bf16.msra.mxu0 %v1807
    %1909 = vmatprep.mubr.bf16.mxu0 %v1834
    %1910 = vmatmul.mubr.bf16.gmra.mxu0 %v1624
    %v1911 = vpop.f32.mrf.mxu0
    %v1912 = vadd.f32 %v1871, %v1911
    %v1913 = vpop.f32.mrf.mxu0
    %v1914 = vpop.f32.mrf.mxu0
    %v1915 = vadd.f32 %v1874, %v1914
    %v1916 = vpop.f32.mrf.mxu0
    %1917 = vdwg.mxu0
    %v1918 = vld [vmem:[%s6] sm:$0xf]
    %v1919 = vld [vmem:[%s6 + $0x4] sm:$0xf]
    %v1920 = vld [vmem:[%s6 + $0x8] sm:$0xf]
    %v1921 = vld [vmem:[%s6 + $0xc] sm:$0xf]
    %v1922 = vld [vmem:[%s6 + $0x10] sm:$0xf]
    %v1923 = vld [vmem:[%s6 + $0x14] sm:$0xf]
    %v1924 = vld [vmem:[%s6 + $0x18] sm:$0xf]
    %v1925 = vld [vmem:[%s6 + $0x1c] sm:$0xf]
    %v1926 = vld [vmem:[%s6 + $0x20] sm:$0xf]
    %v1927 = vld [vmem:[%s6 + $0x24] sm:$0xf]
    %v1928 = vld [vmem:[%s6 + $0x28] sm:$0xf]
    %v1929 = vld [vmem:[%s6 + $0x2c] sm:$0xf]
    %v1930 = vld [vmem:[%s6 + $0x30] sm:$0xf]
    %v1931 = vld [vmem:[%s6 + $0x34] sm:$0xf]
    %v1932 = vld [vmem:[%s6 + $0x38] sm:$0xf]
    %v1933 = vld [vmem:[%s6 + $0x3c] sm:$0xf]
    %v1934 = vld [vmem:[%s6 + $0x40] sm:$0xf]
    %v1935 = vld [vmem:[%s6 + $0x44] sm:$0xf]
    %v1936 = vld [vmem:[%s6 + $0x48] sm:$0xf]
    %v1937 = vld [vmem:[%s6 + $0x4c] sm:$0xf]
    %v1938 = vld [vmem:[%s6 + $0x50] sm:$0xf]
    %v1939 = vld [vmem:[%s6 + $0x54] sm:$0xf]
    %v1940 = vld [vmem:[%s6 + $0x58] sm:$0xf]
    %v1941 = vld [vmem:[%s6 + $0x5c] sm:$0xf]
    %v1942 = vld [vmem:[%s6 + $0x60] sm:$0xf]
    %v1943 = vld [vmem:[%s6 + $0x64] sm:$0xf]
    %v1944 = vld [vmem:[%s6 + $0x68] sm:$0xf]
    %v1945 = vld [vmem:[%s6 + $0x6c] sm:$0xf]
    %v1946 = vld [vmem:[%s6 + $0x70] sm:$0xf]
    %v1947 = vld [vmem:[%s6 + $0x74] sm:$0xf]
    %v1948 = vld [vmem:[%s6 + $0x78] sm:$0xf]
    %v1949 = vld [vmem:[%s6 + $0x7c] sm:$0xf]
    %v1950 = vld [vmem:[%s6 + $0x80] sm:$0xf]
    %v1951 = vld [vmem:[%s6 + $0x84] sm:$0xf]
    %v1952 = vld [vmem:[%s6 + $0x88] sm:$0xf]
    %v1953 = vld [vmem:[%s6 + $0x8c] sm:$0xf]
    %v1954 = vld [vmem:[%s6 + $0x90] sm:$0xf]
    %v1955 = vld [vmem:[%s6 + $0x94] sm:$0xf]
    %v1956 = vld [vmem:[%s6 + $0x98] sm:$0xf]
    %v1957 = vld [vmem:[%s6 + $0x9c] sm:$0xf]
    %v1958 = vld [vmem:[%s6 + $0xa0] sm:$0xf]
    %v1959 = vld [vmem:[%s6 + $0xa4] sm:$0xf]
    %v1960 = vld [vmem:[%s6 + $0xa8] sm:$0xf]
    %v1961 = vld [vmem:[%s6 + $0xac] sm:$0xf]
    %v1962 = vld [vmem:[%s6 + $0xb0] sm:$0xf]
    %v1963 = vld [vmem:[%s6 + $0xb4] sm:$0xf]
    %v1964 = vld [vmem:[%s6 + $0xb8] sm:$0xf]
    %v1965 = vld [vmem:[%s6 + $0xbc] sm:$0xf]
    %v1966 = vld [vmem:[%s6 + $0xc0] sm:$0xf]
    %v1967 = vld [vmem:[%s6 + $0xc4] sm:$0xf]
    %v1968 = vld [vmem:[%s7] sm:$0x1]
    %v1970 = vlaneseq
    %v1971 = vshrl.u32 %v1970, 7
    %v1972 = vsub.s32 0, %v1971
    %v1973 = vrot.slane %v1968, %v1972
    %v2025 = vunpack.c.l.b16 %v1918
    %v2026 = vunpack.c.l.b16 %v1919
    %v2027 = vunpack.c.l.b16 %v1920
    %v2028 = vunpack.c.l.b16 %v1921
    %v2029 = vunpack.c.l.b16 %v1922
    %v2030 = vunpack.c.l.b16 %v1923
    %v2031 = vunpack.c.l.b16 %v1924
    %v2032 = vunpack.c.l.b16 %v1925
    %v2033 = vunpack.c.l.b16 %v1926
    %v2034 = vunpack.c.l.b16 %v1927
    %v2035 = vunpack.c.l.b16 %v1928
    %v2036 = vunpack.c.l.b16 %v1929
    %v2037 = vunpack.c.l.b16 %v1930
    %v2038 = vunpack.c.l.b16 %v1931
    %v2039 = vunpack.c.l.b16 %v1932
    %v2040 = vunpack.c.l.b16 %v1933
    %v2041 = vunpack.c.l.b16 %v1934
    %v2042 = vunpack.c.l.b16 %v1935
    %v2043 = vunpack.c.l.b16 %v1936
    %v2044 = vunpack.c.l.b16 %v1937
    %v2045 = vunpack.c.l.b16 %v1938
    %v2046 = vunpack.c.l.b16 %v1939
    %v2047 = vunpack.c.l.b16 %v1940
    %v2048 = vunpack.c.l.b16 %v1941
    %v2049 = vunpack.c.l.b16 %v1942
    %v2050 = vunpack.c.l.b16 %v1943
    %v2051 = vunpack.c.l.b16 %v1944
    %v2052 = vunpack.c.l.b16 %v1945
    %v2053 = vunpack.c.l.b16 %v1946
    %v2054 = vunpack.c.l.b16 %v1947
    %v2055 = vunpack.c.l.b16 %v1948
    %v2056 = vunpack.c.l.b16 %v1949
    %v2057 = vunpack.c.l.b16 %v1950
    %v2058 = vunpack.c.l.b16 %v1951
    %v2059 = vunpack.c.l.b16 %v1952
    %v2060 = vunpack.c.l.b16 %v1953
    %v2061 = vunpack.c.l.b16 %v1954
    %v2062 = vunpack.c.l.b16 %v1955
    %v2063 = vunpack.c.l.b16 %v1956
    %v2064 = vunpack.c.l.b16 %v1957
    %v2065 = vunpack.c.l.b16 %v1958
    %v2066 = vunpack.c.l.b16 %v1959
    %v2067 = vunpack.c.l.b16 %v1960
    %v2068 = vunpack.c.l.b16 %v1961
    %v2069 = vunpack.c.l.b16 %v1962
    %v2070 = vunpack.c.l.b16 %v1963
    %v2071 = vunpack.c.l.b16 %v1964
    %v2072 = vunpack.c.l.b16 %v1965
    %v2073 = vunpack.c.l.b16 %v1966
    %v2074 = vunpack.c.l.b16 %v1967
    %v2075 = vpack.c.b16 %v2026, %v2025
    %v2076 = vpack.c.b16 %v2028, %v2027
    %v2077 = vpack.c.b16 %v2030, %v2029
    %v2078 = vpack.c.b16 %v2032, %v2031
    %v2079 = vpack.c.b16 %v2034, %v2033
    %v2080 = vpack.c.b16 %v2036, %v2035
    %v2081 = vpack.c.b16 %v2038, %v2037
    %v2082 = vpack.c.b16 %v2040, %v2039
    %v2083 = vpack.c.b16 %v2042, %v2041
    %v2084 = vpack.c.b16 %v2044, %v2043
    %v2085 = vpack.c.b16 %v2046, %v2045
    %v2086 = vpack.c.b16 %v2048, %v2047
    %v2087 = vpack.c.b16 %v2050, %v2049
    %v2088 = vpack.c.b16 %v2052, %v2051
    %v2089 = vpack.c.b16 %v2054, %v2053
    %v2090 = vpack.c.b16 %v2056, %v2055
    %v2091 = vpack.c.b16 %v2058, %v2057
    %v2092 = vpack.c.b16 %v2060, %v2059
    %v2093 = vpack.c.b16 %v2062, %v2061
    %v2094 = vpack.c.b16 %v2064, %v2063
    %v2095 = vpack.c.b16 %v2066, %v2065
    %v2096 = vpack.c.b16 %v2068, %v2067
    %v2097 = vpack.c.b16 %v2070, %v2069
    %v2098 = vpack.c.b16 %v2072, %v2071
    %v2099 = vpack.c.b16 %v2074, %v2073
    %2125 = vmatprep.subr.bf16.mxu0 0
    %2126 = vmatpush1.bf16.msra.mxu0 %v2082
    %2127 = vmatprep.subr.bf16.mxu0 0
    %2128 = vmatpush1.bf16.msra.mxu0 %v2081
    %2129 = vmatprep.subr.bf16.mxu0 0
    %2130 = vmatpush1.bf16.msra.mxu0 %v2080
    %2131 = vmatprep.subr.bf16.mxu0 0
    %2132 = vmatpush1.bf16.msra.mxu0 %v2079
    %2133 = vmatprep.subr.bf16.mxu0 0
    %2134 = vmatpush1.bf16.msra.mxu0 %v2078
    %2135 = vmatprep.subr.bf16.mxu0 0
    %2136 = vmatpush1.bf16.msra.mxu0 %v2077
    %2137 = vmatprep.subr.bf16.mxu0 0
    %2138 = vmatpush1.bf16.msra.mxu0 %v2076
    %2139 = vmatprep.subr.bf16.mxu0 0
    %2140 = vmatpush1.bf16.msra.mxu0 %v2075
    %2141 = vmatprep.subr.bf16.mxu0 0
    %2142 = vmatpush2.bf16.msra.mxu0 %v2090
    %2143 = vmatprep.subr.bf16.mxu0 0
    %2144 = vmatpush2.bf16.msra.mxu0 %v2089
    %2145 = vmatprep.subr.bf16.mxu0 0
    %2146 = vmatpush2.bf16.msra.mxu0 %v2088
    %2147 = vmatprep.subr.bf16.mxu0 0
    %2148 = vmatpush2.bf16.msra.mxu0 %v2087
    %2149 = vmatprep.subr.bf16.mxu0 0
    %2150 = vmatpush2.bf16.msra.mxu0 %v2086
    %2151 = vmatprep.subr.bf16.mxu0 0
    %2152 = vmatpush2.bf16.msra.mxu0 %v2085
    %2153 = vmatprep.subr.bf16.mxu0 0
    %2154 = vmatpush2.bf16.msra.mxu0 %v2084
    %2155 = vmatprep.subr.bf16.mxu0 0
    %2156 = vmatpush2.bf16.msra.mxu0 %v2083
    %2157 = vmatprep.mubr.bf16.mxu0 %v1623
    %2158 = vmatmul.mubr.bf16.gmra.mxu0 %v1622
    %v2159 = vpop.f32.mrf.mxu0
    %v2160 = vadd.f32 %v1973, %v2159
    %v2161 = vpop.f32.mrf.mxu0
    %v2162 = vpop.f32.mrf.mxu0
    %v2163 = vadd.f32 %v1973, %v2162
    %v2164 = vpop.f32.mrf.mxu0
    %2165 = vdwg.mxu0
    %2166 = vmatprep.subr.bf16.mxu0 0
    %2167 = vmatpush1.bf16.msra.mxu0 %v2098
    %2168 = vmatprep.subr.bf16.mxu0 0
    %2169 = vmatpush1.bf16.msra.mxu0 %v2097
    %2170 = vmatprep.subr.bf16.mxu0 0
    %2171 = vmatpush1.bf16.msra.mxu0 %v2096
    %2172 = vmatprep.subr.bf16.mxu0 0
    %2173 = vmatpush1.bf16.msra.mxu0 %v2095
    %2174 = vmatprep.subr.bf16.mxu0 0
    %2175 = vmatpush1.bf16.msra.mxu0 %v2094
    %2176 = vmatprep.subr.bf16.mxu0 0
    %2177 = vmatpush1.bf16.msra.mxu0 %v2093
    %2178 = vmatprep.subr.bf16.mxu0 0
    %2179 = vmatpush1.bf16.msra.mxu0 %v2092
    %2180 = vmatprep.subr.bf16.mxu0 0
    %2181 = vmatpush1.bf16.msra.mxu0 %v2091
    %2182 = vmatprep.subr.bf16.mxu0 0
    %2183 = vmatpush2.bf16.msra.mxu0 0
    %2184 = vmatprep.subr.bf16.mxu0 0
    %2185 = vmatpush2.bf16.msra.mxu0 0
    %2186 = vmatprep.subr.bf16.mxu0 0
    %2187 = vmatpush2.bf16.msra.mxu0 0
    %2188 = vmatprep.subr.bf16.mxu0 0
    %2189 = vmatpush2.bf16.msra.mxu0 0
    %2190 = vmatprep.subr.bf16.mxu0 0
    %2191 = vmatpush2.bf16.msra.mxu0 0
    %2192 = vmatprep.subr.bf16.mxu0 0
    %2193 = vmatpush2.bf16.msra.mxu0 0
    %2194 = vmatprep.subr.bf16.mxu0 0
    %2195 = vmatpush2.bf16.msra.mxu0 0
    %2196 = vmatprep.subr.bf16.mxu0 0
    %2197 = vmatpush2.bf16.msra.mxu0 %v2099
    %2198 = vmatprep.mubr.bf16.mxu0 %v1834
    %2199 = vmatmul.mubr.bf16.gmra.mxu0 %v1624
    %v2200 = vpop.f32.mrf.mxu0
    %v2201 = vadd.f32 %v2160, %v2200
    %v2202 = vpop.f32.mrf.mxu0
    %v2203 = vpop.f32.mrf.mxu0
    %v2204 = vadd.f32 %v2163, %v2203
    %v2205 = vpop.f32.mrf.mxu0
    %2206 = vdwg.mxu0
    %v2207 = vld [vmem:[%s1] sm:$0xff]
    %v2208 = vld [vmem:[%s1 + $0x8] sm:$0xff]
    %v2209 = vmul.f32 %v2201, %v2207
    %v2210 = vmul.f32 %v2204, %v2208
    %v2211 = vadd.f32 %v1912, %v2209
    %v2212 = vadd.f32 %v1915, %v2210
    %v2213 = vpack.c.bf16 %v2212, %v2211
    %v2214 = vld [vmem:[%s8] sm:$0xff]
    %v2215 = vld [vmem:[%s8 + $0x8] sm:$0xff]
    %v2216 = vld [vmem:[%s8 + $0x10] sm:$0xff]
    %v2217 = vld [vmem:[%s8 + $0x18] sm:$0xff]
    %v2218 = vld [vmem:[%s8 + $0x20] sm:$0x33]
    %v2219 = vld [vmem:[%s8 + $0x28] sm:$0x33]
    %v2220 = vld [vmem:[%s9] sm:$0xf]
    %v2222 = vlaneseq
    %v2223 = vshrl.u32 %v2222, 7
    %v2224 = vsub.s32 0, %v2223
    %v2225 = vrot.slane %v2220, %v2224
    %v2226 = vlaneseq
    %v2227 = vshrl.u32 %v2226, 7
    %v2228 = vsub.s32 1, %v2227
    %v2229 = vrot.slane %v2220, %v2228
    %v2230 = vlaneseq
    %v2231 = vshrl.u32 %v2230, 7
    %v2232 = vsub.s32 2, %v2231
    %v2233 = vrot.slane %v2220, %v2232
    %v2234 = vlaneseq
    %v2235 = vshrl.u32 %v2234, 7
    %v2236 = vsub.s32 3, %v2235
    %v2237 = vrot.slane %v2220, %v2236
    %v2248 = vunpack.c.l.b16 %v2214
    %v2249 = vunpack.c.h.b16 %v2214
    %v2250 = vunpack.c.l.b16 %v2215
    %v2251 = vunpack.c.h.b16 %v2215
    %v2252 = vunpack.c.l.b16 %v2216
    %v2253 = vunpack.c.h.b16 %v2216
    %v2254 = vunpack.c.l.b16 %v2217
    %v2255 = vunpack.c.h.b16 %v2217
    %v2256 = vunpack.c.l.b16 %v2218
    %v2257 = vunpack.c.h.b16 %v2218
    %v2258 = vunpack.c.l.b16 %v2219
    %v2259 = vunpack.c.h.b16 %v2219
    %v2260 = vpack.c.b16 %v2252, %v2248
    %v2261 = vpack.c.b16 %v2253, %v2249
    %v2262 = vpack.c.b16 %v2254, %v2250
    %v2263 = vpack.c.b16 %v2255, %v2251
    %v2264 = vpack.c.b16 %v2256, %v2256
    %v2265 = vpack.c.b16 %v2257, %v2257
    %v2266 = vpack.c.b16 %v2258, %v2258
    %v2267 = vpack.c.b16 %v2259, %v2259
    %vm2272 = vcmask 162816
    %v2274 = vsel %vm2272, %v2213, 0
    %vm2276 = vcmask 1041408
    %v2278 = vsel %vm2276, %v2264, 0
    %v2281 = vsel %vm2276, %v2265, 0
    %v2284 = vsel %vm2276, %v2266, 0
    %v2287 = vsel %vm2276, %v2267, 0
    %2289 = vmatprep.subr.bf16.mxu0 0
    %2290 = vmatpush1.bf16.msra.mxu0 0
    %2291 = vmatprep.subr.bf16.mxu0 0
    %2292 = vmatpush1.bf16.msra.mxu0 0
    %2293 = vmatprep.subr.bf16.mxu0 0
    %2294 = vmatpush1.bf16.msra.mxu0 0
    %2295 = vmatprep.subr.bf16.mxu0 0
    %2296 = vmatpush1.bf16.msra.mxu0 0
    %2297 = vmatprep.subr.bf16.mxu0 0
    %2298 = vmatpush1.bf16.msra.mxu0 0
    %2299 = vmatprep.subr.bf16.mxu0 0
    %2300 = vmatpush1.bf16.msra.mxu0 0
    %2301 = vmatprep.subr.bf16.mxu0 %v2281
    %2302 = vmatpush1.bf16.msra.mxu0 %v2278
    %2303 = vmatprep.subr.bf16.mxu0 %v2261
    %2304 = vmatpush1.bf16.msra.mxu0 %v2260
    %2305 = vmatprep.subr.bf16.mxu0 0
    %2306 = vmatpush2.bf16.msra.mxu0 0
    %2307 = vmatprep.subr.bf16.mxu0 0
    %2308 = vmatpush2.bf16.msra.mxu0 0
    %2309 = vmatprep.subr.bf16.mxu0 0
    %2310 = vmatpush2.bf16.msra.mxu0 0
    %2311 = vmatprep.subr.bf16.mxu0 0
    %2312 = vmatpush2.bf16.msra.mxu0 0
    %2313 = vmatprep.subr.bf16.mxu0 0
    %2314 = vmatpush2.bf16.msra.mxu0 0
    %2315 = vmatprep.subr.bf16.mxu0 0
    %2316 = vmatpush2.bf16.msra.mxu0 0
    %2317 = vmatprep.subr.bf16.mxu0 0
    %2318 = vmatpush2.bf16.msra.mxu0 0
    %2319 = vmatprep.subr.bf16.mxu0 0
    %2320 = vmatpush2.bf16.msra.mxu0 0
    %2321 = vmatprep.mubr.bf16.mxu0 0
    %2322 = vmatmul.mubr.bf16.gmra.mxu0 %v2274
    %v2323 = vpop.f32.mrf.mxu0
    %v2324 = vadd.f32 %v2225, %v2323
    %v2325 = vpop.f32.mrf.mxu0
    %v2326 = vadd.f32 %v2229, %v2325
    %v2327 = vpop.f32.mrf.mxu0
    %v2328 = vadd.f32 %v2225, %v2327
    %v2329 = vpop.f32.mrf.mxu0
    %v2330 = vadd.f32 %v2229, %v2329
    %2331 = vdwg.mxu0
    %2332 = vmatprep.subr.bf16.mxu0 0
    %2333 = vmatpush1.bf16.msra.mxu0 0
    %2334 = vmatprep.subr.bf16.mxu0 0
    %2335 = vmatpush1.bf16.msra.mxu0 0
    %2336 = vmatprep.subr.bf16.mxu0 0
    %2337 = vmatpush1.bf16.msra.mxu0 0
    %2338 = vmatprep.subr.bf16.mxu0 0
    %2339 = vmatpush1.bf16.msra.mxu0 0
    %2340 = vmatprep.subr.bf16.mxu0 0
    %2341 = vmatpush1.bf16.msra.mxu0 0
    %2342 = vmatprep.subr.bf16.mxu0 0
    %2343 = vmatpush1.bf16.msra.mxu0 0
    %2344 = vmatprep.subr.bf16.mxu0 %v2287
    %2345 = vmatpush1.bf16.msra.mxu0 %v2284
    %2346 = vmatprep.subr.bf16.mxu0 %v2263
    %2347 = vmatpush1.bf16.msra.mxu0 %v2262
    %2348 = vmatprep.subr.bf16.mxu0 0
    %2349 = vmatpush2.bf16.msra.mxu0 0
    %2350 = vmatprep.subr.bf16.mxu0 0
    %2351 = vmatpush2.bf16.msra.mxu0 0
    %2352 = vmatprep.subr.bf16.mxu0 0
    %2353 = vmatpush2.bf16.msra.mxu0 0
    %2354 = vmatprep.subr.bf16.mxu0 0
    %2355 = vmatpush2.bf16.msra.mxu0 0
    %2356 = vmatprep.subr.bf16.mxu0 0
    %2357 = vmatpush2.bf16.msra.mxu0 0
    %2358 = vmatprep.subr.bf16.mxu0 0
    %2359 = vmatpush2.bf16.msra.mxu0 0
    %2360 = vmatprep.subr.bf16.mxu0 0
    %2361 = vmatpush2.bf16.msra.mxu0 0
    %2362 = vmatprep.subr.bf16.mxu0 0
    %2363 = vmatpush2.bf16.msra.mxu0 0
    %2364 = vmatprep.mubr.bf16.mxu0 0
    %2365 = vmatmul.mubr.bf16.gmra.mxu0 %v2274
    %v2366 = vpop.f32.mrf.mxu0
    %v2367 = vadd.f32 %v2233, %v2366
    %v2368 = vpop.f32.mrf.mxu0
    %v2369 = vadd.f32 %v2237, %v2368
    %v2370 = vpop.f32.mrf.mxu0
    %v2371 = vadd.f32 %v2233, %v2370
    %v2372 = vpop.f32.mrf.mxu0
    %v2373 = vadd.f32 %v2237, %v2372
    %2374 = vdwg.mxu0
    %v2375 = vmax.f32 %v2324, 0.0
    %v2376 = vmax.f32 %v2326, 0.0
    %v2377 = vmax.f32 %v2367, 0.0
    %v2378 = vmax.f32 %v2369, 0.0
    %v2379 = vmax.f32 %v2328, 0.0
    %v2380 = vmax.f32 %v2330, 0.0
    %v2381 = vmax.f32 %v2371, 0.0
    %v2382 = vmax.f32 %v2373, 0.0
    %v2383 = vpack.c.bf16 %v2379, %v2375
    %v2384 = vpack.c.bf16 %v2380, %v2376
    %v2385 = vpack.c.bf16 %v2381, %v2377
    %v2386 = vpack.c.bf16 %v2382, %v2378
    %v2387 = vld [vmem:[%s10] sm:$0xff]
    %v2388 = vld [vmem:[%s10 + $0x8] sm:$0xff]
    %v2389 = vld [vmem:[%s10 + $0x10] sm:$0xff]
    %v2390 = vld [vmem:[%s10 + $0x18] sm:$0xf]
    %v2391 = vld [vmem:[%s10 + $0x1c] sm:$0xff]
    %v2392 = vld [vmem:[%s10 + $0x24] sm:$0xff]
    %v2393 = vld [vmem:[%s10 + $0x2c] sm:$0xff]
    %v2394 = vld [vmem:[%s10 + $0x34] sm:$0xf]
    %v2395 = vld [vmem:[%s10 + $0x38] sm:$0xff]
    %v2396 = vld [vmem:[%s10 + $0x40] sm:$0xff]
    %v2397 = vld [vmem:[%s10 + $0x48] sm:$0xff]
    %v2398 = vld [vmem:[%s10 + $0x50] sm:$0xf]
    %v2399 = vld [vmem:[%s10 + $0x54] sm:$0xff]
    %v2400 = vld [vmem:[%s10 + $0x5c] sm:$0xff]
    %v2401 = vld [vmem:[%s10 + $0x64] sm:$0xff]
    %v2402 = vld [vmem:[%s10 + $0x6c] sm:$0xf]
    %v2403 = vld [vmem:[%s10 + $0x70] sm:$0xff]
    %v2404 = vld [vmem:[%s10 + $0x78] sm:$0xff]
    %v2405 = vld [vmem:[%s10 + $0x80] sm:$0xff]
    %v2406 = vld [vmem:[%s10 + $0x88] sm:$0xf]
    %v2407 = vld [vmem:[%s10 + $0x8c] sm:$0xff]
    %v2408 = vld [vmem:[%s10 + $0x94] sm:$0xff]
    %v2409 = vld [vmem:[%s10 + $0x9c] sm:$0xff]
    %v2410 = vld [vmem:[%s10 + $0xa4] sm:$0xf]
    %v2411 = vld [vmem:[%s10 + $0xa8] sm:$0xff]
    %v2412 = vld [vmem:[%s10 + $0xb0] sm:$0xff]
    %v2413 = vld [vmem:[%s10 + $0xb8] sm:$0xff]
    %v2414 = vld [vmem:[%s10 + $0xc0] sm:$0xf]
    %v2415 = vld [vmem:[%s10 + $0xc4] sm:$0xff]
    %v2416 = vld [vmem:[%s10 + $0xcc] sm:$0xff]
    %v2417 = vld [vmem:[%s10 + $0xd4] sm:$0xff]
    %v2418 = vld [vmem:[%s10 + $0xdc] sm:$0xf]
    %v2419 = vld [vmem:[%s10 + $0xe0] sm:$0xff]
    %v2420 = vld [vmem:[%s10 + $0xe8] sm:$0xff]
    %v2421 = vld [vmem:[%s10 + $0xf0] sm:$0xff]
    %v2422 = vld [vmem:[%s10 + $0xf8] sm:$0xf]
    %v2423 = vld [vmem:[%s10 + $0xfc] sm:$0xff]
    %v2424 = vld [vmem:[%s10 + $0x104] sm:$0xff]
    %v2425 = vld [vmem:[%s10 + $0x10c] sm:$0xff]
    %v2426 = vld [vmem:[%s10 + $0x114] sm:$0xf]
    %v2427 = vld [vmem:[%s10 + $0x118] sm:$0xff]
    %v2428 = vld [vmem:[%s10 + $0x120] sm:$0xff]
    %v2429 = vld [vmem:[%s10 + $0x128] sm:$0xff]
    %v2430 = vld [vmem:[%s10 + $0x130] sm:$0xf]
    %v2431 = vld [vmem:[%s10 + $0x134] sm:$0xff]
    %v2432 = vld [vmem:[%s10 + $0x13c] sm:$0xff]
    %v2433 = vld [vmem:[%s10 + $0x144] sm:$0xff]
    %v2434 = vld [vmem:[%s10 + $0x14c] sm:$0xf]
    %v2435 = vld [vmem:[%s10 + $0x150] sm:$0xff]
    %v2436 = vld [vmem:[%s10 + $0x158] sm:$0xff]
    %v2437 = vld [vmem:[%s10 + $0x160] sm:$0xff]
    %v2438 = vld [vmem:[%s10 + $0x168] sm:$0xf]
    %v2439 = vld [vmem:[%s10 + $0x16c] sm:$0xff]
    %v2440 = vld [vmem:[%s10 + $0x174] sm:$0xff]
    %v2441 = vld [vmem:[%s10 + $0x17c] sm:$0xff]
    %v2442 = vld [vmem:[%s10 + $0x184] sm:$0xf]
    %v2443 = vld [vmem:[%s10 + $0x188] sm:$0xff]
    %v2444 = vld [vmem:[%s10 + $0x190] sm:$0xff]
    %v2445 = vld [vmem:[%s10 + $0x198] sm:$0xff]
    %v2446 = vld [vmem:[%s10 + $0x1a0] sm:$0xf]
    %v2447 = vld [vmem:[%s10 + $0x1a4] sm:$0xff]
    %v2448 = vld [vmem:[%s10 + $0x1ac] sm:$0xff]
    %v2449 = vld [vmem:[%s10 + $0x1b4] sm:$0xff]
    %v2450 = vld [vmem:[%s10 + $0x1bc] sm:$0xf]
    %v2451 = vld [vmem:[%s10 + $0x1c0] sm:$0xff]
    %v2452 = vld [vmem:[%s10 + $0x1c8] sm:$0xff]
    %v2453 = vld [vmem:[%s10 + $0x1d0] sm:$0xff]
    %v2454 = vld [vmem:[%s10 + $0x1d8] sm:$0xf]
    %v2455 = vld [vmem:[%s10 + $0x1dc] sm:$0xff]
    %v2456 = vld [vmem:[%s10 + $0x1e4] sm:$0xff]
    %v2457 = vld [vmem:[%s10 + $0x1ec] sm:$0xff]
    %v2458 = vld [vmem:[%s10 + $0x1f4] sm:$0xf]
    %v2459 = vld [vmem:[%s10 + $0x1f8] sm:$0xff]
    %v2460 = vld [vmem:[%s10 + $0x200] sm:$0xff]
    %v2461 = vld [vmem:[%s10 + $0x208] sm:$0xff]
    %v2462 = vld [vmem:[%s10 + $0x210] sm:$0xf]
    %v2463 = vld [vmem:[%s10 + $0x214] sm:$0xff]
    %v2464 = vld [vmem:[%s10 + $0x21c] sm:$0xff]
    %v2465 = vld [vmem:[%s10 + $0x224] sm:$0xff]
    %v2466 = vld [vmem:[%s10 + $0x22c] sm:$0xf]
    %v2467 = vld [vmem:[%s10 + $0x230] sm:$0xff]
    %v2468 = vld [vmem:[%s10 + $0x238] sm:$0xff]
    %v2469 = vld [vmem:[%s10 + $0x240] sm:$0xff]
    %v2470 = vld [vmem:[%s10 + $0x248] sm:$0xf]
    %v2471 = vld [vmem:[%s10 + $0x24c] sm:$0xff]
    %v2472 = vld [vmem:[%s10 + $0x254] sm:$0xff]
    %v2473 = vld [vmem:[%s10 + $0x25c] sm:$0xff]
    %v2474 = vld [vmem:[%s10 + $0x264] sm:$0xf]
    %v2475 = vld [vmem:[%s10 + $0x268] sm:$0xff]
    %v2476 = vld [vmem:[%s10 + $0x270] sm:$0xff]
    %v2477 = vld [vmem:[%s10 + $0x278] sm:$0xff]
    %v2478 = vld [vmem:[%s10 + $0x280] sm:$0xf]
    %v2479 = vld [vmem:[%s10 + $0x284] sm:$0xff]
    %v2480 = vld [vmem:[%s10 + $0x28c] sm:$0xff]
    %v2481 = vld [vmem:[%s10 + $0x294] sm:$0xff]
    %v2482 = vld [vmem:[%s10 + $0x29c] sm:$0xf]
    %v2483 = vld [vmem:[%s10 + $0x2a0] sm:$0xff]
    %v2484 = vld [vmem:[%s10 + $0x2a8] sm:$0xff]
    %v2485 = vld [vmem:[%s10 + $0x2b0] sm:$0xff]
    %v2486 = vld [vmem:[%s10 + $0x2b8] sm:$0xf]
    %v2487 = vld [vmem:[%s10 + $0x2bc] sm:$0xff]
    %v2488 = vld [vmem:[%s10 + $0x2c4] sm:$0xff]
    %v2489 = vld [vmem:[%s10 + $0x2cc] sm:$0xff]
    %v2490 = vld [vmem:[%s10 + $0x2d4] sm:$0xf]
    %v2491 = vld [vmem:[%s10 + $0x2d8] sm:$0xff]
    %v2492 = vld [vmem:[%s10 + $0x2e0] sm:$0xff]
    %v2493 = vld [vmem:[%s10 + $0x2e8] sm:$0xff]
    %v2494 = vld [vmem:[%s10 + $0x2f0] sm:$0xf]
    %v2495 = vld [vmem:[%s10 + $0x2f4] sm:$0xff]
    %v2496 = vld [vmem:[%s10 + $0x2fc] sm:$0xff]
    %v2497 = vld [vmem:[%s10 + $0x304] sm:$0xff]
    %v2498 = vld [vmem:[%s10 + $0x30c] sm:$0xf]
    %v2499 = vld [vmem:[%s10 + $0x310] sm:$0xff]
    %v2500 = vld [vmem:[%s10 + $0x318] sm:$0xff]
    %v2501 = vld [vmem:[%s10 + $0x320] sm:$0xff]
    %v2502 = vld [vmem:[%s10 + $0x328] sm:$0xf]
    %v2503 = vld [vmem:[%s10 + $0x32c] sm:$0xff]
    %v2504 = vld [vmem:[%s10 + $0x334] sm:$0xff]
    %v2505 = vld [vmem:[%s10 + $0x33c] sm:$0xff]
    %v2506 = vld [vmem:[%s10 + $0x344] sm:$0xf]
    %v2507 = vld [vmem:[%s10 + $0x348] sm:$0xff]
    %v2508 = vld [vmem:[%s10 + $0x350] sm:$0xff]
    %v2509 = vld [vmem:[%s10 + $0x358] sm:$0xff]
    %v2510 = vld [vmem:[%s10 + $0x360] sm:$0xf]
    %v2511 = vld [vmem:[%s10 + $0x364] sm:$0xff]
    %v2512 = vld [vmem:[%s10 + $0x36c] sm:$0xff]
    %v2513 = vld [vmem:[%s10 + $0x374] sm:$0xff]
    %v2514 = vld [vmem:[%s10 + $0x37c] sm:$0xf]
    %v2515 = vld [vmem:[%s10 + $0x380] sm:$0xff]
    %v2516 = vld [vmem:[%s10 + $0x388] sm:$0xff]
    %v2517 = vld [vmem:[%s10 + $0x390] sm:$0xff]
    %v2518 = vld [vmem:[%s10 + $0x398] sm:$0xf]
    %v2519 = vld [vmem:[%s10 + $0x39c] sm:$0xff]
    %v2520 = vld [vmem:[%s10 + $0x3a4] sm:$0xff]
    %v2521 = vld [vmem:[%s10 + $0x3ac] sm:$0xff]
    %v2522 = vld [vmem:[%s10 + $0x3b4] sm:$0xf]
    %v2523 = vld [vmem:[%s10 + $0x3b8] sm:$0xff]
    %v2524 = vld [vmem:[%s10 + $0x3c0] sm:$0xff]
    %v2525 = vld [vmem:[%s10 + $0x3c8] sm:$0xff]
    %v2526 = vld [vmem:[%s10 + $0x3d0] sm:$0xf]
    %v2527 = vld [vmem:[%s10 + $0x3d4] sm:$0xff]
    %v2528 = vld [vmem:[%s10 + $0x3dc] sm:$0xff]
    %v2529 = vld [vmem:[%s10 + $0x3e4] sm:$0xff]
    %v2530 = vld [vmem:[%s10 + $0x3ec] sm:$0xf]
    %v2531 = vld [vmem:[%s10 + $0x3f0] sm:$0xff]
    %v2532 = vld [vmem:[%s10 + $0x3f8] sm:$0xff]
    %v2533 = vld [vmem:[%s10 + $0x400] sm:$0xff]
    %v2534 = vld [vmem:[%s10 + $0x408] sm:$0xf]
    %v2535 = vld [vmem:[%s10 + $0x40c] sm:$0xff]
    %v2536 = vld [vmem:[%s10 + $0x414] sm:$0xff]
    %v2537 = vld [vmem:[%s10 + $0x41c] sm:$0xff]
    %v2538 = vld [vmem:[%s10 + $0x424] sm:$0xf]
    %v2539 = vld [vmem:[%s10 + $0x428] sm:$0xff]
    %v2540 = vld [vmem:[%s10 + $0x430] sm:$0xff]
    %v2541 = vld [vmem:[%s10 + $0x438] sm:$0xff]
    %v2542 = vld [vmem:[%s10 + $0x440] sm:$0xf]
    %v2543 = vld [vmem:[%s10 + $0x444] sm:$0xff]
    %v2544 = vld [vmem:[%s10 + $0x44c] sm:$0xff]
    %v2545 = vld [vmem:[%s10 + $0x454] sm:$0xff]
    %v2546 = vld [vmem:[%s10 + $0x45c] sm:$0xf]
    %v2547 = vld [vmem:[%s10 + $0x460] sm:$0xff]
    %v2548 = vld [vmem:[%s10 + $0x468] sm:$0xff]
    %v2549 = vld [vmem:[%s10 + $0x470] sm:$0xff]
    %v2550 = vld [vmem:[%s10 + $0x478] sm:$0xf]
    %v2551 = vld [vmem:[%s10 + $0x47c] sm:$0xff]
    %v2552 = vld [vmem:[%s10 + $0x484] sm:$0xff]
    %v2553 = vld [vmem:[%s10 + $0x48c] sm:$0xff]
    %v2554 = vld [vmem:[%s10 + $0x494] sm:$0xf]
    %v2555 = vld [vmem:[%s10 + $0x498] sm:$0xff]
    %v2556 = vld [vmem:[%s10 + $0x4a0] sm:$0xff]
    %v2557 = vld [vmem:[%s10 + $0x4a8] sm:$0xff]
    %v2558 = vld [vmem:[%s10 + $0x4b0] sm:$0xf]
    %v2559 = vld [vmem:[%s10 + $0x4b4] sm:$0xff]
    %v2560 = vld [vmem:[%s10 + $0x4bc] sm:$0xff]
    %v2561 = vld [vmem:[%s10 + $0x4c4] sm:$0xff]
    %v2562 = vld [vmem:[%s10 + $0x4cc] sm:$0xf]
    %v2563 = vld [vmem:[%s10 + $0x4d0] sm:$0xff]
    %v2564 = vld [vmem:[%s10 + $0x4d8] sm:$0xff]
    %v2565 = vld [vmem:[%s10 + $0x4e0] sm:$0xff]
    %v2566 = vld [vmem:[%s10 + $0x4e8] sm:$0xf]
    %v2567 = vld [vmem:[%s10 + $0x4ec] sm:$0xff]
    %v2568 = vld [vmem:[%s10 + $0x4f4] sm:$0xff]
    %v2569 = vld [vmem:[%s10 + $0x4fc] sm:$0xff]
    %v2570 = vld [vmem:[%s10 + $0x504] sm:$0xf]
    %v2571 = vld [vmem:[%s10 + $0x508] sm:$0xff]
    %v2572 = vld [vmem:[%s10 + $0x510] sm:$0xff]
    %v2573 = vld [vmem:[%s10 + $0x518] sm:$0xff]
    %v2574 = vld [vmem:[%s10 + $0x520] sm:$0xf]
    %v2575 = vld [vmem:[%s10 + $0x524] sm:$0xff]
    %v2576 = vld [vmem:[%s10 + $0x52c] sm:$0xff]
    %v2577 = vld [vmem:[%s10 + $0x534] sm:$0xff]
    %v2578 = vld [vmem:[%s10 + $0x53c] sm:$0xf]
    %v2579 = vld [vmem:[%s10 + $0x540] sm:$0xff]
    %v2580 = vld [vmem:[%s10 + $0x548] sm:$0xff]
    %v2581 = vld [vmem:[%s10 + $0x550] sm:$0xff]
    %v2582 = vld [vmem:[%s10 + $0x558] sm:$0xf]
    %v2583 = vld [vmem:[%s10 + $0x55c] sm:$0xff]
    %v2584 = vld [vmem:[%s10 + $0x564] sm:$0xff]
    %v2585 = vld [vmem:[%s10 + $0x56c] sm:$0xff]
    %v2586 = vld [vmem:[%s10 + $0x574] sm:$0xf]
    %v2587 = vld [vmem:[%s11] sm:$0x7f]
    %v2589 = vlaneseq
    %v2590 = vshrl.u32 %v2589, 7
    %v2591 = vsub.s32 0, %v2590
    %v2592 = vrot.slane %v2587, %v2591
    %v2593 = vlaneseq
    %v2594 = vshrl.u32 %v2593, 7
    %v2595 = vsub.s32 1, %v2594
    %v2596 = vrot.slane %v2587, %v2595
    %v2597 = vlaneseq
    %v2598 = vshrl.u32 %v2597, 7
    %v2599 = vsub.s32 2, %v2598
    %v2600 = vrot.slane %v2587, %v2599
    %v2601 = vlaneseq
    %v2602 = vshrl.u32 %v2601, 7
    %v2603 = vsub.s32 3, %v2602
    %v2604 = vrot.slane %v2587, %v2603
    %v2605 = vlaneseq
    %v2606 = vshrl.u32 %v2605, 7
    %v2607 = vsub.s32 4, %v2606
    %v2608 = vrot.slane %v2587, %v2607
    %v2609 = vlaneseq
    %v2610 = vshrl.u32 %v2609, 7
    %v2611 = vsub.s32 5, %v2610
    %v2612 = vrot.slane %v2587, %v2611
    %v2613 = vlaneseq
    %v2614 = vshrl.u32 %v2613, 7
    %v2615 = vsub.s32 6, %v2614
    %v2616 = vrot.slane %v2587, %v2615
    %v2824 = vunpack.c.l.b16 %v2387
    %v2825 = vunpack.c.h.b16 %v2387
    %v2826 = vunpack.c.l.b16 %v2388
    %v2827 = vunpack.c.h.b16 %v2388
    %v2828 = vunpack.c.l.b16 %v2389
    %v2829 = vunpack.c.h.b16 %v2389
    %v2830 = vunpack.c.l.b16 %v2390
    %v2831 = vunpack.c.l.b16 %v2391
    %v2832 = vunpack.c.h.b16 %v2391
    %v2833 = vunpack.c.l.b16 %v2392
    %v2834 = vunpack.c.h.b16 %v2392
    %v2835 = vunpack.c.l.b16 %v2393
    %v2836 = vunpack.c.h.b16 %v2393
    %v2837 = vunpack.c.l.b16 %v2394
    %v2838 = vunpack.c.l.b16 %v2395
    %v2839 = vunpack.c.h.b16 %v2395
    %v2840 = vunpack.c.l.b16 %v2396
    %v2841 = vunpack.c.h.b16 %v2396
    %v2842 = vunpack.c.l.b16 %v2397
    %v2843 = vunpack.c.h.b16 %v2397
    %v2844 = vunpack.c.l.b16 %v2398
    %v2845 = vunpack.c.l.b16 %v2399
    %v2846 = vunpack.c.h.b16 %v2399
    %v2847 = vunpack.c.l.b16 %v2400
    %v2848 = vunpack.c.h.b16 %v2400
    %v2849 = vunpack.c.l.b16 %v2401
    %v2850 = vunpack.c.h.b16 %v2401
    %v2851 = vunpack.c.l.b16 %v2402
    %v2852 = vunpack.c.l.b16 %v2403
    %v2853 = vunpack.c.h.b16 %v2403
    %v2854 = vunpack.c.l.b16 %v2404
    %v2855 = vunpack.c.h.b16 %v2404
    %v2856 = vunpack.c.l.b16 %v2405
    %v2857 = vunpack.c.h.b16 %v2405
    %v2858 = vunpack.c.l.b16 %v2406
    %v2859 = vunpack.c.l.b16 %v2407
    %v2860 = vunpack.c.h.b16 %v2407
    %v2861 = vunpack.c.l.b16 %v2408
    %v2862 = vunpack.c.h.b16 %v2408
    %v2863 = vunpack.c.l.b16 %v2409
    %v2864 = vunpack.c.h.b16 %v2409
    %v2865 = vunpack.c.l.b16 %v2410
    %v2866 = vunpack.c.l.b16 %v2411
    %v2867 = vunpack.c.h.b16 %v2411
    %v2868 = vunpack.c.l.b16 %v2412
    %v2869 = vunpack.c.h.b16 %v2412
    %v2870 = vunpack.c.l.b16 %v2413
    %v2871 = vunpack.c.h.b16 %v2413
    %v2872 = vunpack.c.l.b16 %v2414
    %v2873 = vunpack.c.l.b16 %v2415
    %v2874 = vunpack.c.h.b16 %v2415
    %v2875 = vunpack.c.l.b16 %v2416
    %v2876 = vunpack.c.h.b16 %v2416
    %v2877 = vunpack.c.l.b16 %v2417
    %v2878 = vunpack.c.h.b16 %v2417
    %v2879 = vunpack.c.l.b16 %v2418
    %v2880 = vunpack.c.l.b16 %v2419
    %v2881 = vunpack.c.h.b16 %v2419
    %v2882 = vunpack.c.l.b16 %v2420
    %v2883 = vunpack.c.h.b16 %v2420
    %v2884 = vunpack.c.l.b16 %v2421
    %v2885 = vunpack.c.h.b16 %v2421
    %v2886 = vunpack.c.l.b16 %v2422
    %v2887 = vunpack.c.l.b16 %v2423
    %v2888 = vunpack.c.h.b16 %v2423
    %v2889 = vunpack.c.l.b16 %v2424
    %v2890 = vunpack.c.h.b16 %v2424
    %v2891 = vunpack.c.l.b16 %v2425
    %v2892 = vunpack.c.h.b16 %v2425
    %v2893 = vunpack.c.l.b16 %v2426
    %v2894 = vunpack.c.l.b16 %v2427
    %v2895 = vunpack.c.h.b16 %v2427
    %v2896 = vunpack.c.l.b16 %v2428
    %v2897 = vunpack.c.h.b16 %v2428
    %v2898 = vunpack.c.l.b16 %v2429
    %v2899 = vunpack.c.h.b16 %v2429
    %v2900 = vunpack.c.l.b16 %v2430
    %v2901 = vunpack.c.l.b16 %v2431
    %v2902 = vunpack.c.h.b16 %v2431
    %v2903 = vunpack.c.l.b16 %v2432
    %v2904 = vunpack.c.h.b16 %v2432
    %v2905 = vunpack.c.l.b16 %v2433
    %v2906 = vunpack.c.h.b16 %v2433
    %v2907 = vunpack.c.l.b16 %v2434
    %v2908 = vunpack.c.l.b16 %v2435
    %v2909 = vunpack.c.h.b16 %v2435
    %v2910 = vunpack.c.l.b16 %v2436
    %v2911 = vunpack.c.h.b16 %v2436
    %v2912 = vunpack.c.l.b16 %v2437
    %v2913 = vunpack.c.h.b16 %v2437
    %v2914 = vunpack.c.l.b16 %v2438
    %v2915 = vunpack.c.l.b16 %v2439
    %v2916 = vunpack.c.h.b16 %v2439
    %v2917 = vunpack.c.l.b16 %v2440
    %v2918 = vunpack.c.h.b16 %v2440
    %v2919 = vunpack.c.l.b16 %v2441
    %v2920 = vunpack.c.h.b16 %v2441
    %v2921 = vunpack.c.l.b16 %v2442
    %v2922 = vunpack.c.l.b16 %v2443
    %v2923 = vunpack.c.h.b16 %v2443
    %v2924 = vunpack.c.l.b16 %v2444
    %v2925 = vunpack.c.h.b16 %v2444
    %v2926 = vunpack.c.l.b16 %v2445
    %v2927 = vunpack.c.h.b16 %v2445
    %v2928 = vunpack.c.l.b16 %v2446
    %v2929 = vunpack.c.l.b16 %v2447
    %v2930 = vunpack.c.h.b16 %v2447
    %v2931 = vunpack.c.l.b16 %v2448
    %v2932 = vunpack.c.h.b16 %v2448
    %v2933 = vunpack.c.l.b16 %v2449
    %v2934 = vunpack.c.h.b16 %v2449
    %v2935 = vunpack.c.l.b16 %v2450
    %v2936 = vunpack.c.l.b16 %v2451
    %v2937 = vunpack.c.h.b16 %v2451
    %v2938 = vunpack.c.l.b16 %v2452
    %v2939 = vunpack.c.h.b16 %v2452
    %v2940 = vunpack.c.l.b16 %v2453
    %v2941 = vunpack.c.h.b16 %v2453
    %v2942 = vunpack.c.l.b16 %v2454
    %v2943 = vunpack.c.l.b16 %v2455
    %v2944 = vunpack.c.h.b16 %v2455
    %v2945 = vunpack.c.l.b16 %v2456
    %v2946 = vunpack.c.h.b16 %v2456
    %v2947 = vunpack.c.l.b16 %v2457
    %v2948 = vunpack.c.h.b16 %v2457
    %v2949 = vunpack.c.l.b16 %v2458
    %v2950 = vunpack.c.l.b16 %v2459
    %v2951 = vunpack.c.h.b16 %v2459
    %v2952 = vunpack.c.l.b16 %v2460
    %v2953 = vunpack.c.h.b16 %v2460
    %v2954 = vunpack.c.l.b16 %v2461
    %v2955 = vunpack.c.h.b16 %v2461
    %v2956 = vunpack.c.l.b16 %v2462
    %v2957 = vunpack.c.l.b16 %v2463
    %v2958 = vunpack.c.h.b16 %v2463
    %v2959 = vunpack.c.l.b16 %v2464
    %v2960 = vunpack.c.h.b16 %v2464
    %v2961 = vunpack.c.l.b16 %v2465
    %v2962 = vunpack.c.h.b16 %v2465
    %v2963 = vunpack.c.l.b16 %v2466
    %v2964 = vunpack.c.l.b16 %v2467
    %v2965 = vunpack.c.h.b16 %v2467
    %v2966 = vunpack.c.l.b16 %v2468
    %v2967 = vunpack.c.h.b16 %v2468
    %v2968 = vunpack.c.l.b16 %v2469
    %v2969 = vunpack.c.h.b16 %v2469
    %v2970 = vunpack.c.l.b16 %v2470
    %v2971 = vunpack.c.l.b16 %v2471
    %v2972 = vunpack.c.h.b16 %v2471
    %v2973 = vunpack.c.l.b16 %v2472
    %v2974 = vunpack.c.h.b16 %v2472
    %v2975 = vunpack.c.l.b16 %v2473
    %v2976 = vunpack.c.h.b16 %v2473
    %v2977 = vunpack.c.l.b16 %v2474
    %v2978 = vunpack.c.l.b16 %v2475
    %v2979 = vunpack.c.h.b16 %v2475
    %v2980 = vunpack.c.l.b16 %v2476
    %v2981 = vunpack.c.h.b16 %v2476
    %v2982 = vunpack.c.l.b16 %v2477
    %v2983 = vunpack.c.h.b16 %v2477
    %v2984 = vunpack.c.l.b16 %v2478
    %v2985 = vunpack.c.l.b16 %v2479
    %v2986 = vunpack.c.h.b16 %v2479
    %v2987 = vunpack.c.l.b16 %v2480
    %v2988 = vunpack.c.h.b16 %v2480
    %v2989 = vunpack.c.l.b16 %v2481
    %v2990 = vunpack.c.h.b16 %v2481
    %v2991 = vunpack.c.l.b16 %v2482
    %v2992 = vunpack.c.l.b16 %v2483
    %v2993 = vunpack.c.h.b16 %v2483
    %v2994 = vunpack.c.l.b16 %v2484
    %v2995 = vunpack.c.h.b16 %v2484
    %v2996 = vunpack.c.l.b16 %v2485
    %v2997 = vunpack.c.h.b16 %v2485
    %v2998 = vunpack.c.l.b16 %v2486
    %v2999 = vunpack.c.l.b16 %v2487
    %v3000 = vunpack.c.h.b16 %v2487
    %v3001 = vunpack.c.l.b16 %v2488
    %v3002 = vunpack.c.h.b16 %v2488
    %v3003 = vunpack.c.l.b16 %v2489
    %v3004 = vunpack.c.h.b16 %v2489
    %v3005 = vunpack.c.l.b16 %v2490
    %v3006 = vunpack.c.l.b16 %v2491
    %v3007 = vunpack.c.h.b16 %v2491
    %v3008 = vunpack.c.l.b16 %v2492
    %v3009 = vunpack.c.h.b16 %v2492
    %v3010 = vunpack.c.l.b16 %v2493
    %v3011 = vunpack.c.h.b16 %v2493
    %v3012 = vunpack.c.l.b16 %v2494
    %v3013 = vunpack.c.l.b16 %v2495
    %v3014 = vunpack.c.h.b16 %v2495
    %v3015 = vunpack.c.l.b16 %v2496
    %v3016 = vunpack.c.h.b16 %v2496
    %v3017 = vunpack.c.l.b16 %v2497
    %v3018 = vunpack.c.h.b16 %v2497
    %v3019 = vunpack.c.l.b16 %v2498
    %v3020 = vunpack.c.l.b16 %v2499
    %v3021 = vunpack.c.h.b16 %v2499
    %v3022 = vunpack.c.l.b16 %v2500
    %v3023 = vunpack.c.h.b16 %v2500
    %v3024 = vunpack.c.l.b16 %v2501
    %v3025 = vunpack.c.h.b16 %v2501
    %v3026 = vunpack.c.l.b16 %v2502
    %v3027 = vunpack.c.l.b16 %v2503
    %v3028 = vunpack.c.h.b16 %v2503
    %v3029 = vunpack.c.l.b16 %v2504
    %v3030 = vunpack.c.h.b16 %v2504
    %v3031 = vunpack.c.l.b16 %v2505
    %v3032 = vunpack.c.h.b16 %v2505
    %v3033 = vunpack.c.l.b16 %v2506
    %v3034 = vunpack.c.l.b16 %v2507
    %v3035 = vunpack.c.h.b16 %v2507
    %v3036 = vunpack.c.l.b16 %v2508
    %v3037 = vunpack.c.h.b16 %v2508
    %v3038 = vunpack.c.l.b16 %v2509
    %v3039 = vunpack.c.h.b16 %v2509
    %v3040 = vunpack.c.l.b16 %v2510
    %v3041 = vunpack.c.l.b16 %v2511
    %v3042 = vunpack.c.h.b16 %v2511
    %v3043 = vunpack.c.l.b16 %v2512
    %v3044 = vunpack.c.h.b16 %v2512
    %v3045 = vunpack.c.l.b16 %v2513
    %v3046 = vunpack.c.h.b16 %v2513
    %v3047 = vunpack.c.l.b16 %v2514
    %v3048 = vunpack.c.l.b16 %v2515
    %v3049 = vunpack.c.h.b16 %v2515
    %v3050 = vunpack.c.l.b16 %v2516
    %v3051 = vunpack.c.h.b16 %v2516
    %v3052 = vunpack.c.l.b16 %v2517
    %v3053 = vunpack.c.h.b16 %v2517
    %v3054 = vunpack.c.l.b16 %v2518
    %v3055 = vunpack.c.l.b16 %v2519
    %v3056 = vunpack.c.h.b16 %v2519
    %v3057 = vunpack.c.l.b16 %v2520
    %v3058 = vunpack.c.h.b16 %v2520
    %v3059 = vunpack.c.l.b16 %v2521
    %v3060 = vunpack.c.h.b16 %v2521
    %v3061 = vunpack.c.l.b16 %v2522
    %v3062 = vunpack.c.l.b16 %v2523
    %v3063 = vunpack.c.h.b16 %v2523
    %v3064 = vunpack.c.l.b16 %v2524
    %v3065 = vunpack.c.h.b16 %v2524
    %v3066 = vunpack.c.l.b16 %v2525
    %v3067 = vunpack.c.h.b16 %v2525
    %v3068 = vunpack.c.l.b16 %v2526
    %v3069 = vunpack.c.l.b16 %v2527
    %v3070 = vunpack.c.h.b16 %v2527
    %v3071 = vunpack.c.l.b16 %v2528
    %v3072 = vunpack.c.h.b16 %v2528
    %v3073 = vunpack.c.l.b16 %v2529
    %v3074 = vunpack.c.h.b16 %v2529
    %v3075 = vunpack.c.l.b16 %v2530
    %v3076 = vunpack.c.l.b16 %v2531
    %v3077 = vunpack.c.h.b16 %v2531
    %v3078 = vunpack.c.l.b16 %v2532
    %v3079 = vunpack.c.h.b16 %v2532
    %v3080 = vunpack.c.l.b16 %v2533
    %v3081 = vunpack.c.h.b16 %v2533
    %v3082 = vunpack.c.l.b16 %v2534
    %v3083 = vunpack.c.l.b16 %v2535
    %v3084 = vunpack.c.h.b16 %v2535
    %v3085 = vunpack.c.l.b16 %v2536
    %v3086 = vunpack.c.h.b16 %v2536
    %v3087 = vunpack.c.l.b16 %v2537
    %v3088 = vunpack.c.h.b16 %v2537
    %v3089 = vunpack.c.l.b16 %v2538
    %v3090 = vunpack.c.l.b16 %v2539
    %v3091 = vunpack.c.h.b16 %v2539
    %v3092 = vunpack.c.l.b16 %v2540
    %v3093 = vunpack.c.h.b16 %v2540
    %v3094 = vunpack.c.l.b16 %v2541
    %v3095 = vunpack.c.h.b16 %v2541
    %v3096 = vunpack.c.l.b16 %v2542
    %v3097 = vunpack.c.l.b16 %v2543
    %v3098 = vunpack.c.h.b16 %v2543
    %v3099 = vunpack.c.l.b16 %v2544
    %v3100 = vunpack.c.h.b16 %v2544
    %v3101 = vunpack.c.l.b16 %v2545
    %v3102 = vunpack.c.h.b16 %v2545
    %v3103 = vunpack.c.l.b16 %v2546
    %v3104 = vunpack.c.l.b16 %v2547
    %v3105 = vunpack.c.h.b16 %v2547
    %v3106 = vunpack.c.l.b16 %v2548
    %v3107 = vunpack.c.h.b16 %v2548
    %v3108 = vunpack.c.l.b16 %v2549
    %v3109 = vunpack.c.h.b16 %v2549
    %v3110 = vunpack.c.l.b16 %v2550
    %v3111 = vunpack.c.l.b16 %v2551
    %v3112 = vunpack.c.h.b16 %v2551
    %v3113 = vunpack.c.l.b16 %v2552
    %v3114 = vunpack.c.h.b16 %v2552
    %v3115 = vunpack.c.l.b16 %v2553
    %v3116 = vunpack.c.h.b16 %v2553
    %v3117 = vunpack.c.l.b16 %v2554
    %v3118 = vunpack.c.l.b16 %v2555
    %v3119 = vunpack.c.h.b16 %v2555
    %v3120 = vunpack.c.l.b16 %v2556
    %v3121 = vunpack.c.h.b16 %v2556
    %v3122 = vunpack.c.l.b16 %v2557
    %v3123 = vunpack.c.h.b16 %v2557
    %v3124 = vunpack.c.l.b16 %v2558
    %v3125 = vunpack.c.l.b16 %v2559
    %v3126 = vunpack.c.h.b16 %v2559
    %v3127 = vunpack.c.l.b16 %v2560
    %v3128 = vunpack.c.h.b16 %v2560
    %v3129 = vunpack.c.l.b16 %v2561
    %v3130 = vunpack.c.h.b16 %v2561
    %v3131 = vunpack.c.l.b16 %v2562
    %v3132 = vunpack.c.l.b16 %v2563
    %v3133 = vunpack.c.h.b16 %v2563
    %v3134 = vunpack.c.l.b16 %v2564
    %v3135 = vunpack.c.h.b16 %v2564
    %v3136 = vunpack.c.l.b16 %v2565
    %v3137 = vunpack.c.h.b16 %v2565
    %v3138 = vunpack.c.l.b16 %v2566
    %v3139 = vunpack.c.l.b16 %v2567
    %v3140 = vunpack.c.h.b16 %v2567
    %v3141 = vunpack.c.l.b16 %v2568
    %v3142 = vunpack.c.h.b16 %v2568
    %v3143 = vunpack.c.l.b16 %v2569
    %v3144 = vunpack.c.h.b16 %v2569
    %v3145 = vunpack.c.l.b16 %v2570
    %v3146 = vunpack.c.l.b16 %v2571
    %v3147 = vunpack.c.h.b16 %v2571
    %v3148 = vunpack.c.l.b16 %v2572
    %v3149 = vunpack.c.h.b16 %v2572
    %v3150 = vunpack.c.l.b16 %v2573
    %v3151 = vunpack.c.h.b16 %v2573
    %v3152 = vunpack.c.l.b16 %v2574
    %v3153 = vunpack.c.l.b16 %v2575
    %v3154 = vunpack.c.h.b16 %v2575
    %v3155 = vunpack.c.l.b16 %v2576
    %v3156 = vunpack.c.h.b16 %v2576
    %v3157 = vunpack.c.l.b16 %v2577
    %v3158 = vunpack.c.h.b16 %v2577
    %v3159 = vunpack.c.l.b16 %v2578
    %v3160 = vunpack.c.l.b16 %v2579
    %v3161 = vunpack.c.h.b16 %v2579
    %v3162 = vunpack.c.l.b16 %v2580
    %v3163 = vunpack.c.h.b16 %v2580
    %v3164 = vunpack.c.l.b16 %v2581
    %v3165 = vunpack.c.h.b16 %v2581
    %v3166 = vunpack.c.l.b16 %v2582
    %v3167 = vunpack.c.l.b16 %v2583
    %v3168 = vunpack.c.h.b16 %v2583
    %v3169 = vunpack.c.l.b16 %v2584
    %v3170 = vunpack.c.h.b16 %v2584
    %v3171 = vunpack.c.l.b16 %v2585
    %v3172 = vunpack.c.h.b16 %v2585
    %v3173 = vunpack.c.l.b16 %v2586
    %v3174 = vpack.c.b16 %v2831, %v2824
    %v3175 = vpack.c.b16 %v2832, %v2825
    %v3176 = vpack.c.b16 %v2833, %v2826
    %v3177 = vpack.c.b16 %v2834, %v2827
    %v3178 = vpack.c.b16 %v2835, %v2828
    %v3179 = vpack.c.b16 %v2836, %v2829
    %v3180 = vpack.c.b16 %v2837, %v2830
    %v3181 = vpack.c.b16 %v2845, %v2838
    %v3182 = vpack.c.b16 %v2846, %v2839
    %v3183 = vpack.c.b16 %v2847, %v2840
    %v3184 = vpack.c.b16 %v2848, %v2841
    %v3185 = vpack.c.b16 %v2849, %v2842
    %v3186 = vpack.c.b16 %v2850, %v2843
    %v3187 = vpack.c.b16 %v2851, %v2844
    %v3188 = vpack.c.b16 %v2859, %v2852
    %v3189 = vpack.c.b16 %v2860, %v2853
    %v3190 = vpack.c.b16 %v2861, %v2854
    %v3191 = vpack.c.b16 %v2862, %v2855
    %v3192 = vpack.c.b16 %v2863, %v2856
    %v3193 = vpack.c.b16 %v2864, %v2857
    %v3194 = vpack.c.b16 %v2865, %v2858
    %v3195 = vpack.c.b16 %v2873, %v2866
    %v3196 = vpack.c.b16 %v2874, %v2867
    %v3197 = vpack.c.b16 %v2875, %v2868
    %v3198 = vpack.c.b16 %v2876, %v2869
    %v3199 = vpack.c.b16 %v2877, %v2870
    %v3200 = vpack.c.b16 %v2878, %v2871
    %v3201 = vpack.c.b16 %v2879, %v2872
    %v3202 = vpack.c.b16 %v2887, %v2880
    %v3203 = vpack.c.b16 %v2888, %v2881
    %v3204 = vpack.c.b16 %v2889, %v2882
    %v3205 = vpack.c.b16 %v2890, %v2883
    %v3206 = vpack.c.b16 %v2891, %v2884
    %v3207 = vpack.c.b16 %v2892, %v2885
    %v3208 = vpack.c.b16 %v2893, %v2886
    %v3209 = vpack.c.b16 %v2901, %v2894
    %v3210 = vpack.c.b16 %v2902, %v2895
    %v3211 = vpack.c.b16 %v2903, %v2896
    %v3212 = vpack.c.b16 %v2904, %v2897
    %v3213 = vpack.c.b16 %v2905, %v2898
    %v3214 = vpack.c.b16 %v2906, %v2899
    %v3215 = vpack.c.b16 %v2907, %v2900
    %v3216 = vpack.c.b16 %v2915, %v2908
    %v3217 = vpack.c.b16 %v2916, %v2909
    %v3218 = vpack.c.b16 %v2917, %v2910
    %v3219 = vpack.c.b16 %v2918, %v2911
    %v3220 = vpack.c.b16 %v2919, %v2912
    %v3221 = vpack.c.b16 %v2920, %v2913
    %v3222 = vpack.c.b16 %v2921, %v2914
    %v3223 = vpack.c.b16 %v2929, %v2922
    %v3224 = vpack.c.b16 %v2930, %v2923
    %v3225 = vpack.c.b16 %v2931, %v2924
    %v3226 = vpack.c.b16 %v2932, %v2925
    %v3227 = vpack.c.b16 %v2933, %v2926
    %v3228 = vpack.c.b16 %v2934, %v2927
    %v3229 = vpack.c.b16 %v2935, %v2928
    %v3230 = vpack.c.b16 %v2943, %v2936
    %v3231 = vpack.c.b16 %v2944, %v2937
    %v3232 = vpack.c.b16 %v2945, %v2938
    %v3233 = vpack.c.b16 %v2946, %v2939
    %v3234 = vpack.c.b16 %v2947, %v2940
    %v3235 = vpack.c.b16 %v2948, %v2941
    %v3236 = vpack.c.b16 %v2949, %v2942
    %v3237 = vpack.c.b16 %v2957, %v2950
    %v3238 = vpack.c.b16 %v2958, %v2951
    %v3239 = vpack.c.b16 %v2959, %v2952
    %v3240 = vpack.c.b16 %v2960, %v2953
    %v3241 = vpack.c.b16 %v2961, %v2954
    %v3242 = vpack.c.b16 %v2962, %v2955
    %v3243 = vpack.c.b16 %v2963, %v2956
    %v3244 = vpack.c.b16 %v2971, %v2964
    %v3245 = vpack.c.b16 %v2972, %v2965
    %v3246 = vpack.c.b16 %v2973, %v2966
    %v3247 = vpack.c.b16 %v2974, %v2967
    %v3248 = vpack.c.b16 %v2975, %v2968
    %v3249 = vpack.c.b16 %v2976, %v2969
    %v3250 = vpack.c.b16 %v2977, %v2970
    %v3251 = vpack.c.b16 %v2985, %v2978
    %v3252 = vpack.c.b16 %v2986, %v2979
    %v3253 = vpack.c.b16 %v2987, %v2980
    %v3254 = vpack.c.b16 %v2988, %v2981
    %v3255 = vpack.c.b16 %v2989, %v2982
    %v3256 = vpack.c.b16 %v2990, %v2983
    %v3257 = vpack.c.b16 %v2991, %v2984
    %v3258 = vpack.c.b16 %v2999, %v2992
    %v3259 = vpack.c.b16 %v3000, %v2993
    %v3260 = vpack.c.b16 %v3001, %v2994
    %v3261 = vpack.c.b16 %v3002, %v2995
    %v3262 = vpack.c.b16 %v3003, %v2996
    %v3263 = vpack.c.b16 %v3004, %v2997
    %v3264 = vpack.c.b16 %v3005, %v2998
    %v3265 = vpack.c.b16 %v3013, %v3006
    %v3266 = vpack.c.b16 %v3014, %v3007
    %v3267 = vpack.c.b16 %v3015, %v3008
    %v3268 = vpack.c.b16 %v3016, %v3009
    %v3269 = vpack.c.b16 %v3017, %v3010
    %v3270 = vpack.c.b16 %v3018, %v3011
    %v3271 = vpack.c.b16 %v3019, %v3012
    %v3272 = vpack.c.b16 %v3027, %v3020
    %v3273 = vpack.c.b16 %v3028, %v3021
    %v3274 = vpack.c.b16 %v3029, %v3022
    %v3275 = vpack.c.b16 %v3030, %v3023
    %v3276 = vpack.c.b16 %v3031, %v3024
    %v3277 = vpack.c.b16 %v3032, %v3025
    %v3278 = vpack.c.b16 %v3033, %v3026
    %v3279 = vpack.c.b16 %v3041, %v3034
    %v3280 = vpack.c.b16 %v3042, %v3035
    %v3281 = vpack.c.b16 %v3043, %v3036
    %v3282 = vpack.c.b16 %v3044, %v3037
    %v3283 = vpack.c.b16 %v3045, %v3038
    %v3284 = vpack.c.b16 %v3046, %v3039
    %v3285 = vpack.c.b16 %v3047, %v3040
    %v3286 = vpack.c.b16 %v3055, %v3048
    %v3287 = vpack.c.b16 %v3056, %v3049
    %v3288 = vpack.c.b16 %v3057, %v3050
    %v3289 = vpack.c.b16 %v3058, %v3051
    %v3290 = vpack.c.b16 %v3059, %v3052
    %v3291 = vpack.c.b16 %v3060, %v3053
    %v3292 = vpack.c.b16 %v3061, %v3054
    %v3293 = vpack.c.b16 %v3069, %v3062
    %v3294 = vpack.c.b16 %v3070, %v3063
    %v3295 = vpack.c.b16 %v3071, %v3064
    %v3296 = vpack.c.b16 %v3072, %v3065
    %v3297 = vpack.c.b16 %v3073, %v3066
    %v3298 = vpack.c.b16 %v3074, %v3067
    %v3299 = vpack.c.b16 %v3075, %v3068
    %v3300 = vpack.c.b16 %v3083, %v3076
    %v3301 = vpack.c.b16 %v3084, %v3077
    %v3302 = vpack.c.b16 %v3085, %v3078
    %v3303 = vpack.c.b16 %v3086, %v3079
    %v3304 = vpack.c.b16 %v3087, %v3080
    %v3305 = vpack.c.b16 %v3088, %v3081
    %v3306 = vpack.c.b16 %v3089, %v3082
    %v3307 = vpack.c.b16 %v3097, %v3090
    %v3308 = vpack.c.b16 %v3098, %v3091
    %v3309 = vpack.c.b16 %v3099, %v3092
    %v3310 = vpack.c.b16 %v3100, %v3093
    %v3311 = vpack.c.b16 %v3101, %v3094
    %v3312 = vpack.c.b16 %v3102, %v3095
    %v3313 = vpack.c.b16 %v3103, %v3096
    %v3314 = vpack.c.b16 %v3111, %v3104
    %v3315 = vpack.c.b16 %v3112, %v3105
    %v3316 = vpack.c.b16 %v3113, %v3106
    %v3317 = vpack.c.b16 %v3114, %v3107
    %v3318 = vpack.c.b16 %v3115, %v3108
    %v3319 = vpack.c.b16 %v3116, %v3109
    %v3320 = vpack.c.b16 %v3117, %v3110
    %v3321 = vpack.c.b16 %v3125, %v3118
    %v3322 = vpack.c.b16 %v3126, %v3119
    %v3323 = vpack.c.b16 %v3127, %v3120
    %v3324 = vpack.c.b16 %v3128, %v3121
    %v3325 = vpack.c.b16 %v3129, %v3122
    %v3326 = vpack.c.b16 %v3130, %v3123
    %v3327 = vpack.c.b16 %v3131, %v3124
    %v3328 = vpack.c.b16 %v3139, %v3132
    %v3329 = vpack.c.b16 %v3140, %v3133
    %v3330 = vpack.c.b16 %v3141, %v3134
    %v3331 = vpack.c.b16 %v3142, %v3135
    %v3332 = vpack.c.b16 %v3143, %v3136
    %v3333 = vpack.c.b16 %v3144, %v3137
    %v3334 = vpack.c.b16 %v3145, %v3138
    %v3335 = vpack.c.b16 %v3153, %v3146
    %v3336 = vpack.c.b16 %v3154, %v3147
    %v3337 = vpack.c.b16 %v3155, %v3148
    %v3338 = vpack.c.b16 %v3156, %v3149
    %v3339 = vpack.c.b16 %v3157, %v3150
    %v3340 = vpack.c.b16 %v3158, %v3151
    %v3341 = vpack.c.b16 %v3159, %v3152
    %v3342 = vpack.c.b16 %v3167, %v3160
    %v3343 = vpack.c.b16 %v3168, %v3161
    %v3344 = vpack.c.b16 %v3169, %v3162
    %v3345 = vpack.c.b16 %v3170, %v3163
    %v3346 = vpack.c.b16 %v3171, %v3164
    %v3347 = vpack.c.b16 %v3172, %v3165
    %v3348 = vpack.c.b16 %v3173, %v3166
    %v3525 = vsel %vm1266, %v2386, 0
    %3527 = vmatprep.subr.bf16.mxu0 %v3224
    %3528 = vmatpush1.bf16.msra.mxu0 %v3223
    %3529 = vmatprep.subr.bf16.mxu0 %v3217
    %3530 = vmatpush1.bf16.msra.mxu0 %v3216
    %3531 = vmatprep.subr.bf16.mxu0 %v3210
    %3532 = vmatpush1.bf16.msra.mxu0 %v3209
    %3533 = vmatprep.subr.bf16.mxu0 %v3203
    %3534 = vmatpush1.bf16.msra.mxu0 %v3202
    %3535 = vmatprep.subr.bf16.mxu0 %v3196
    %3536 = vmatpush1.bf16.msra.mxu0 %v3195
    %3537 = vmatprep.subr.bf16.mxu0 %v3189
    %3538 = vmatpush1.bf16.msra.mxu0 %v3188
    %3539 = vmatprep.subr.bf16.mxu0 %v3182
    %3540 = vmatpush1.bf16.msra.mxu0 %v3181
    %3541 = vmatprep.subr.bf16.mxu0 %v3175
    %3542 = vmatpush1.bf16.msra.mxu0 %v3174
    %3543 = vmatprep.subr.bf16.mxu0 %v3280
    %3544 = vmatpush2.bf16.msra.mxu0 %v3279
    %3545 = vmatprep.subr.bf16.mxu0 %v3273
    %3546 = vmatpush2.bf16.msra.mxu0 %v3272
    %3547 = vmatprep.subr.bf16.mxu0 %v3266
    %3548 = vmatpush2.bf16.msra.mxu0 %v3265
    %3549 = vmatprep.subr.bf16.mxu0 %v3259
    %3550 = vmatpush2.bf16.msra.mxu0 %v3258
    %3551 = vmatprep.subr.bf16.mxu0 %v3252
    %3552 = vmatpush2.bf16.msra.mxu0 %v3251
    %3553 = vmatprep.subr.bf16.mxu0 %v3245
    %3554 = vmatpush2.bf16.msra.mxu0 %v3244
    %3555 = vmatprep.subr.bf16.mxu0 %v3238
    %3556 = vmatpush2.bf16.msra.mxu0 %v3237
    %3557 = vmatprep.subr.bf16.mxu0 %v3231
    %3558 = vmatpush2.bf16.msra.mxu0 %v3230
    %3559 = vmatprep.mubr.bf16.mxu0 %v2384
    %3560 = vmatmul.mubr.bf16.gmra.mxu0 %v2383
    %v3561 = vpop.f32.mrf.mxu0
    %v3562 = vadd.f32 %v2592, %v3561
    %v3563 = vpop.f32.mrf.mxu0
    %v3564 = vadd.f32 %v2596, %v3563
    %v3565 = vpop.f32.mrf.mxu0
    %v3566 = vadd.f32 %v2592, %v3565
    %v3567 = vpop.f32.mrf.mxu0
    %v3568 = vadd.f32 %v2596, %v3567
    %3569 = vdwg.mxu0
    %3570 = vmatprep.subr.bf16.mxu0 %v3336
    %3571 = vmatpush1.bf16.msra.mxu0 %v3335
    %3572 = vmatprep.subr.bf16.mxu0 %v3329
    %3573 = vmatpush1.bf16.msra.mxu0 %v3328
    %3574 = vmatprep.subr.bf16.mxu0 %v3322
    %3575 = vmatpush1.bf16.msra.mxu0 %v3321
    %3576 = vmatprep.subr.bf16.mxu0 %v3315
    %3577 = vmatpush1.bf16.msra.mxu0 %v3314
    %3578 = vmatprep.subr.bf16.mxu0 %v3308
    %3579 = vmatpush1.bf16.msra.mxu0 %v3307
    %3580 = vmatprep.subr.bf16.mxu0 %v3301
    %3581 = vmatpush1.bf16.msra.mxu0 %v3300
    %3582 = vmatprep.subr.bf16.mxu0 %v3294
    %3583 = vmatpush1.bf16.msra.mxu0 %v3293
    %3584 = vmatprep.subr.bf16.mxu0 %v3287
    %3585 = vmatpush1.bf16.msra.mxu0 %v3286
    %3586 = vmatprep.subr.bf16.mxu0 0
    %3587 = vmatpush2.bf16.msra.mxu0 0
    %3588 = vmatprep.subr.bf16.mxu0 0
    %3589 = vmatpush2.bf16.msra.mxu0 0
    %3590 = vmatprep.subr.bf16.mxu0 0
    %3591 = vmatpush2.bf16.msra.mxu0 0
    %3592 = vmatprep.subr.bf16.mxu0 0
    %3593 = vmatpush2.bf16.msra.mxu0 0
    %3594 = vmatprep.subr.bf16.mxu0 0
    %3595 = vmatpush2.bf16.msra.mxu0 0
    %3596 = vmatprep.subr.bf16.mxu0 0
    %3597 = vmatpush2.bf16.msra.mxu0 0
    %3598 = vmatprep.subr.bf16.mxu0 0
    %3599 = vmatpush2.bf16.msra.mxu0 0
    %3600 = vmatprep.subr.bf16.mxu0 %v3343
    %3601 = vmatpush2.bf16.msra.mxu0 %v3342
    %3602 = vmatprep.mubr.bf16.mxu0 %v3525
    %3603 = vmatmul.mubr.bf16.gmra.mxu0 %v2385
    %v3604 = vpop.f32.mrf.mxu0
    %v3605 = vadd.f32 %v3562, %v3604
    %v3606 = vpop.f32.mrf.mxu0
    %v3607 = vadd.f32 %v3564, %v3606
    %v3608 = vpop.f32.mrf.mxu0
    %v3609 = vadd.f32 %v3566, %v3608
    %v3610 = vpop.f32.mrf.mxu0
    %v3611 = vadd.f32 %v3568, %v3610
    %3612 = vdwg.mxu0
    %3613 = vmatprep.subr.bf16.mxu0 %v3226
    %3614 = vmatpush1.bf16.msra.mxu0 %v3225
    %3615 = vmatprep.subr.bf16.mxu0 %v3219
    %3616 = vmatpush1.bf16.msra.mxu0 %v3218
    %3617 = vmatprep.subr.bf16.mxu0 %v3212
    %3618 = vmatpush1.bf16.msra.mxu0 %v3211
    %3619 = vmatprep.subr.bf16.mxu0 %v3205
    %3620 = vmatpush1.bf16.msra.mxu0 %v3204
    %3621 = vmatprep.subr.bf16.mxu0 %v3198
    %3622 = vmatpush1.bf16.msra.mxu0 %v3197
    %3623 = vmatprep.subr.bf16.mxu0 %v3191
    %3624 = vmatpush1.bf16.msra.mxu0 %v3190
    %3625 = vmatprep.subr.bf16.mxu0 %v3184
    %3626 = vmatpush1.bf16.msra.mxu0 %v3183
    %3627 = vmatprep.subr.bf16.mxu0 %v3177
    %3628 = vmatpush1.bf16.msra.mxu0 %v3176
    %3629 = vmatprep.subr.bf16.mxu0 %v3282
    %3630 = vmatpush2.bf16.msra.mxu0 %v3281
    %3631 = vmatprep.subr.bf16.mxu0 %v3275
    %3632 = vmatpush2.bf16.msra.mxu0 %v3274
    %3633 = vmatprep.subr.bf16.mxu0 %v3268
    %3634 = vmatpush2.bf16.msra.mxu0 %v3267
    %3635 = vmatprep.subr.bf16.mxu0 %v3261
    %3636 = vmatpush2.bf16.msra.mxu0 %v3260
    %3637 = vmatprep.subr.bf16.mxu0 %v3254
    %3638 = vmatpush2.bf16.msra.mxu0 %v3253
    %3639 = vmatprep.subr.bf16.mxu0 %v3247
    %3640 = vmatpush2.bf16.msra.mxu0 %v3246
    %3641 = vmatprep.subr.bf16.mxu0 %v3240
    %3642 = vmatpush2.bf16.msra.mxu0 %v3239
    %3643 = vmatprep.subr.bf16.mxu0 %v3233
    %3644 = vmatpush2.bf16.msra.mxu0 %v3232
    %3645 = vmatprep.mubr.bf16.mxu0 %v2384
    %3646 = vmatmul.mubr.bf16.gmra.mxu0 %v2383
    %v3647 = vpop.f32.mrf.mxu0
    %v3648 = vadd.f32 %v2600, %v3647
    %v3649 = vpop.f32.mrf.mxu0
    %v3650 = vadd.f32 %v2604, %v3649
    %v3651 = vpop.f32.mrf.mxu0
    %v3652 = vadd.f32 %v2600, %v3651
    %v3653 = vpop.f32.mrf.mxu0
    %v3654 = vadd.f32 %v2604, %v3653
    %3655 = vdwg.mxu0
    %3656 = vmatprep.subr.bf16.mxu0 %v3338
    %3657 = vmatpush1.bf16.msra.mxu0 %v3337
    %3658 = vmatprep.subr.bf16.mxu0 %v3331
    %3659 = vmatpush1.bf16.msra.mxu0 %v3330
    %3660 = vmatprep.subr.bf16.mxu0 %v3324
    %3661 = vmatpush1.bf16.msra.mxu0 %v3323
    %3662 = vmatprep.subr.bf16.mxu0 %v3317
    %3663 = vmatpush1.bf16.msra.mxu0 %v3316
    %3664 = vmatprep.subr.bf16.mxu0 %v3310
    %3665 = vmatpush1.bf16.msra.mxu0 %v3309
    %3666 = vmatprep.subr.bf16.mxu0 %v3303
    %3667 = vmatpush1.bf16.msra.mxu0 %v3302
    %3668 = vmatprep.subr.bf16.mxu0 %v3296
    %3669 = vmatpush1.bf16.msra.mxu0 %v3295
    %3670 = vmatprep.subr.bf16.mxu0 %v3289
    %3671 = vmatpush1.bf16.msra.mxu0 %v3288
    %3672 = vmatprep.subr.bf16.mxu0 0
    %3673 = vmatpush2.bf16.msra.mxu0 0
    %3674 = vmatprep.subr.bf16.mxu0 0
    %3675 = vmatpush2.bf16.msra.mxu0 0
    %3676 = vmatprep.subr.bf16.mxu0 0
    %3677 = vmatpush2.bf16.msra.mxu0 0
    %3678 = vmatprep.subr.bf16.mxu0 0
    %3679 = vmatpush2.bf16.msra.mxu0 0
    %3680 = vmatprep.subr.bf16.mxu0 0
    %3681 = vmatpush2.bf16.msra.mxu0 0
    %3682 = vmatprep.subr.bf16.mxu0 0
    %3683 = vmatpush2.bf16.msra.mxu0 0
    %3684 = vmatprep.subr.bf16.mxu0 0
    %3685 = vmatpush2.bf16.msra.mxu0 0
    %3686 = vmatprep.subr.bf16.mxu0 %v3345
    %3687 = vmatpush2.bf16.msra.mxu0 %v3344
    %3688 = vmatprep.mubr.bf16.mxu0 %v3525
    %3689 = vmatmul.mubr.bf16.gmra.mxu0 %v2385
    %v3690 = vpop.f32.mrf.mxu0
    %v3691 = vadd.f32 %v3648, %v3690
    %v3692 = vpop.f32.mrf.mxu0
    %v3693 = vadd.f32 %v3650, %v3692
    %v3694 = vpop.f32.mrf.mxu0
    %v3695 = vadd.f32 %v3652, %v3694
    %v3696 = vpop.f32.mrf.mxu0
    %v3697 = vadd.f32 %v3654, %v3696
    %3698 = vdwg.mxu0
    %3699 = vmatprep.subr.bf16.mxu0 %v3228
    %3700 = vmatpush1.bf16.msra.mxu0 %v3227
    %3701 = vmatprep.subr.bf16.mxu0 %v3221
    %3702 = vmatpush1.bf16.msra.mxu0 %v3220
    %3703 = vmatprep.subr.bf16.mxu0 %v3214
    %3704 = vmatpush1.bf16.msra.mxu0 %v3213
    %3705 = vmatprep.subr.bf16.mxu0 %v3207
    %3706 = vmatpush1.bf16.msra.mxu0 %v3206
    %3707 = vmatprep.subr.bf16.mxu0 %v3200
    %3708 = vmatpush1.bf16.msra.mxu0 %v3199
    %3709 = vmatprep.subr.bf16.mxu0 %v3193
    %3710 = vmatpush1.bf16.msra.mxu0 %v3192
    %3711 = vmatprep.subr.bf16.mxu0 %v3186
    %3712 = vmatpush1.bf16.msra.mxu0 %v3185
    %3713 = vmatprep.subr.bf16.mxu0 %v3179
    %3714 = vmatpush1.bf16.msra.mxu0 %v3178
    %3715 = vmatprep.subr.bf16.mxu0 %v3284
    %3716 = vmatpush2.bf16.msra.mxu0 %v3283
    %3717 = vmatprep.subr.bf16.mxu0 %v3277
    %3718 = vmatpush2.bf16.msra.mxu0 %v3276
    %3719 = vmatprep.subr.bf16.mxu0 %v3270
    %3720 = vmatpush2.bf16.msra.mxu0 %v3269
    %3721 = vmatprep.subr.bf16.mxu0 %v3263
    %3722 = vmatpush2.bf16.msra.mxu0 %v3262
    %3723 = vmatprep.subr.bf16.mxu0 %v3256
    %3724 = vmatpush2.bf16.msra.mxu0 %v3255
    %3725 = vmatprep.subr.bf16.mxu0 %v3249
    %3726 = vmatpush2.bf16.msra.mxu0 %v3248
    %3727 = vmatprep.subr.bf16.mxu0 %v3242
    %3728 = vmatpush2.bf16.msra.mxu0 %v3241
    %3729 = vmatprep.subr.bf16.mxu0 %v3235
    %3730 = vmatpush2.bf16.msra.mxu0 %v3234
    %3731 = vmatprep.mubr.bf16.mxu0 %v2384
    %3732 = vmatmul.mubr.bf16.gmra.mxu0 %v2383
    %v3733 = vpop.f32.mrf.mxu0
    %v3734 = vadd.f32 %v2608, %v3733
    %v3735 = vpop.f32.mrf.mxu0
    %v3736 = vadd.f32 %v2612, %v3735
    %v3737 = vpop.f32.mrf.mxu0
    %v3738 = vadd.f32 %v2608, %v3737
    %v3739 = vpop.f32.mrf.mxu0
    %v3740 = vadd.f32 %v2612, %v3739
    %3741 = vdwg.mxu0
    %3742 = vmatprep.subr.bf16.mxu0 %v3340
    %3743 = vmatpush1.bf16.msra.mxu0 %v3339
    %3744 = vmatprep.subr.bf16.mxu0 %v3333
    %3745 = vmatpush1.bf16.msra.mxu0 %v3332
    %3746 = vmatprep.subr.bf16.mxu0 %v3326
    %3747 = vmatpush1.bf16.msra.mxu0 %v3325
    %3748 = vmatprep.subr.bf16.mxu0 %v3319
    %3749 = vmatpush1.bf16.msra.mxu0 %v3318
    %3750 = vmatprep.subr.bf16.mxu0 %v3312
    %3751 = vmatpush1.bf16.msra.mxu0 %v3311
    %3752 = vmatprep.subr.bf16.mxu0 %v3305
    %3753 = vmatpush1.bf16.msra.mxu0 %v3304
    %3754 = vmatprep.subr.bf16.mxu0 %v3298
    %3755 = vmatpush1.bf16.msra.mxu0 %v3297
    %3756 = vmatprep.subr.bf16.mxu0 %v3291
    %3757 = vmatpush1.bf16.msra.mxu0 %v3290
    %3758 = vmatprep.subr.bf16.mxu0 0
    %3759 = vmatpush2.bf16.msra.mxu0 0
    %3760 = vmatprep.subr.bf16.mxu0 0
    %3761 = vmatpush2.bf16.msra.mxu0 0
    %3762 = vmatprep.subr.bf16.mxu0 0
    %3763 = vmatpush2.bf16.msra.mxu0 0
    %3764 = vmatprep.subr.bf16.mxu0 0
    %3765 = vmatpush2.bf16.msra.mxu0 0
    %3766 = vmatprep.subr.bf16.mxu0 0
    %3767 = vmatpush2.bf16.msra.mxu0 0
    %3768 = vmatprep.subr.bf16.mxu0 0
    %3769 = vmatpush2.bf16.msra.mxu0 0
    %3770 = vmatprep.subr.bf16.mxu0 0
    %3771 = vmatpush2.bf16.msra.mxu0 0
    %3772 = vmatprep.subr.bf16.mxu0 %v3347
    %3773 = vmatpush2.bf16.msra.mxu0 %v3346
    %3774 = vmatprep.mubr.bf16.mxu0 %v3525
    %3775 = vmatmul.mubr.bf16.gmra.mxu0 %v2385
    %v3776 = vpop.f32.mrf.mxu0
    %v3777 = vadd.f32 %v3734, %v3776
    %v3778 = vpop.f32.mrf.mxu0
    %v3779 = vadd.f32 %v3736, %v3778
    %v3780 = vpop.f32.mrf.mxu0
    %v3781 = vadd.f32 %v3738, %v3780
    %v3782 = vpop.f32.mrf.mxu0
    %v3783 = vadd.f32 %v3740, %v3782
    %3784 = vdwg.mxu0
    %3785 = vmatprep.subr.bf16.mxu0 0
    %3786 = vmatpush1.bf16.msra.mxu0 %v3229
    %3787 = vmatprep.subr.bf16.mxu0 0
    %3788 = vmatpush1.bf16.msra.mxu0 %v3222
    %3789 = vmatprep.subr.bf16.mxu0 0
    %3790 = vmatpush1.bf16.msra.mxu0 %v3215
    %3791 = vmatprep.subr.bf16.mxu0 0
    %3792 = vmatpush1.bf16.msra.mxu0 %v3208
    %3793 = vmatprep.subr.bf16.mxu0 0
    %3794 = vmatpush1.bf16.msra.mxu0 %v3201
    %3795 = vmatprep.subr.bf16.mxu0 0
    %3796 = vmatpush1.bf16.msra.mxu0 %v3194
    %3797 = vmatprep.subr.bf16.mxu0 0
    %3798 = vmatpush1.bf16.msra.mxu0 %v3187
    %3799 = vmatprep.subr.bf16.mxu0 0
    %3800 = vmatpush1.bf16.msra.mxu0 %v3180
    %3801 = vmatprep.subr.bf16.mxu0 0
    %3802 = vmatpush2.bf16.msra.mxu0 %v3285
    %3803 = vmatprep.subr.bf16.mxu0 0
    %3804 = vmatpush2.bf16.msra.mxu0 %v3278
    %3805 = vmatprep.subr.bf16.mxu0 0
    %3806 = vmatpush2.bf16.msra.mxu0 %v3271
    %3807 = vmatprep.subr.bf16.mxu0 0
    %3808 = vmatpush2.bf16.msra.mxu0 %v3264
    %3809 = vmatprep.subr.bf16.mxu0 0
    %3810 = vmatpush2.bf16.msra.mxu0 %v3257
    %3811 = vmatprep.subr.bf16.mxu0 0
    %3812 = vmatpush2.bf16.msra.mxu0 %v3250
    %3813 = vmatprep.subr.bf16.mxu0 0
    %3814 = vmatpush2.bf16.msra.mxu0 %v3243
    %3815 = vmatprep.subr.bf16.mxu0 0
    %3816 = vmatpush2.bf16.msra.mxu0 %v3236
    %3817 = vmatprep.mubr.bf16.mxu0 %v2384
    %3818 = vmatmul.mubr.bf16.gmra.mxu0 %v2383
    %v3819 = vpop.f32.mrf.mxu0
    %v3820 = vadd.f32 %v2616, %v3819
    %v3821 = vpop.f32.mrf.mxu0
    %v3822 = vpop.f32.mrf.mxu0
    %v3823 = vadd.f32 %v2616, %v3822
    %v3824 = vpop.f32.mrf.mxu0
    %3825 = vdwg.mxu0
    %3826 = vmatprep.subr.bf16.mxu0 0
    %3827 = vmatpush1.bf16.msra.mxu0 %v3341
    %3828 = vmatprep.subr.bf16.mxu0 0
    %3829 = vmatpush1.bf16.msra.mxu0 %v3334
    %3830 = vmatprep.subr.bf16.mxu0 0
    %3831 = vmatpush1.bf16.msra.mxu0 %v3327
    %3832 = vmatprep.subr.bf16.mxu0 0
    %3833 = vmatpush1.bf16.msra.mxu0 %v3320
    %3834 = vmatprep.subr.bf16.mxu0 0
    %3835 = vmatpush1.bf16.msra.mxu0 %v3313
    %3836 = vmatprep.subr.bf16.mxu0 0
    %3837 = vmatpush1.bf16.msra.mxu0 %v3306
    %3838 = vmatprep.subr.bf16.mxu0 0
    %3839 = vmatpush1.bf16.msra.mxu0 %v3299
    %3840 = vmatprep.subr.bf16.mxu0 0
    %3841 = vmatpush1.bf16.msra.mxu0 %v3292
    %3842 = vmatprep.subr.bf16.mxu0 0
    %3843 = vmatpush2.bf16.msra.mxu0 0
    %3844 = vmatprep.subr.bf16.mxu0 0
    %3845 = vmatpush2.bf16.msra.mxu0 0
    %3846 = vmatprep.subr.bf16.mxu0 0
    %3847 = vmatpush2.bf16.msra.mxu0 0
    %3848 = vmatprep.subr.bf16.mxu0 0
    %3849 = vmatpush2.bf16.msra.mxu0 0
    %3850 = vmatprep.subr.bf16.mxu0 0
    %3851 = vmatpush2.bf16.msra.mxu0 0
    %3852 = vmatprep.subr.bf16.mxu0 0
    %3853 = vmatpush2.bf16.msra.mxu0 0
    %3854 = vmatprep.subr.bf16.mxu0 0
    %3855 = vmatpush2.bf16.msra.mxu0 0
    %3856 = vmatprep.subr.bf16.mxu0 0
    %3857 = vmatpush2.bf16.msra.mxu0 %v3348
    %3858 = vmatprep.mubr.bf16.mxu0 %v3525
    %3859 = vmatmul.mubr.bf16.gmra.mxu0 %v2385
    %v3860 = vpop.f32.mrf.mxu0
    %v3861 = vadd.f32 %v3820, %v3860
    %v3862 = vpop.f32.mrf.mxu0
    %v3863 = vpop.f32.mrf.mxu0
    %v3864 = vadd.f32 %v3823, %v3863
    %v3865 = vpop.f32.mrf.mxu0
    %3866 = vdwg.mxu0
    %v3867 = vmax.f32 %v3605, -30.0
    %v3868 = vmax.f32 %v3607, -30.0
    %v3869 = vmax.f32 %v3691, -30.0
    %v3870 = vmax.f32 %v3693, -30.0
    %v3871 = vmax.f32 %v3777, -30.0
    %v3872 = vmax.f32 %v3779, -30.0
    %v3873 = vmax.f32 %v3861, -30.0
    %v3874 = vmax.f32 %v3609, -30.0
    %v3875 = vmax.f32 %v3611, -30.0
    %v3876 = vmax.f32 %v3695, -30.0
    %v3877 = vmax.f32 %v3697, -30.0
    %v3878 = vmax.f32 %v3781, -30.0
    %v3879 = vmax.f32 %v3783, -30.0
    %v3880 = vmax.f32 %v3864, -30.0
    %v3881 = vmin.f32 %v3867, 30.0
    %v3882 = vmin.f32 %v3868, 30.0
    %v3883 = vmin.f32 %v3869, 30.0
    %v3884 = vmin.f32 %v3870, 30.0
    %v3885 = vmin.f32 %v3871, 30.0
    %v3886 = vmin.f32 %v3872, 30.0
    %v3887 = vmin.f32 %v3873, 30.0
    %v3888 = vmin.f32 %v3874, 30.0
    %v3889 = vmin.f32 %v3875, 30.0
    %v3890 = vmin.f32 %v3876, 30.0
    %v3891 = vmin.f32 %v3877, 30.0
    %v3892 = vmin.f32 %v3878, 30.0
    %v3893 = vmin.f32 %v3879, 30.0
    %v3894 = vmin.f32 %v3880, 30.0
    %v3895 = vsub.f32 0.0, %v3881
    %v3896 = vsub.f32 0.0, %v3882
    %v3897 = vsub.f32 0.0, %v3883
    %v3898 = vsub.f32 0.0, %v3884
    %v3899 = vsub.f32 0.0, %v3885
    %v3900 = vsub.f32 0.0, %v3886
    %v3901 = vsub.f32 0.0, %v3887
    %v3902 = vsub.f32 0.0, %v3888
    %v3903 = vsub.f32 0.0, %v3889
    %v3904 = vsub.f32 0.0, %v3890
    %v3905 = vsub.f32 0.0, %v3891
    %v3906 = vsub.f32 0.0, %v3892
    %v3907 = vsub.f32 0.0, %v3893
    %v3908 = vsub.f32 0.0, %v3894
    %v3909 = vmul.f32 %v3895, 1.442695
    %v3910 = vpow.pop %v3909
    %v3911 = vmul.f32 %v3896, 1.442695
    %v3912 = vpow.pop %v3911
    %v3913 = vmul.f32 %v3897, 1.442695
    %v3914 = vpow.pop %v3913
    %v3915 = vmul.f32 %v3898, 1.442695
    %v3916 = vpow.pop %v3915
    %v3917 = vmul.f32 %v3899, 1.442695
    %v3918 = vpow.pop %v3917
    %v3919 = vmul.f32 %v3900, 1.442695
    %v3920 = vpow.pop %v3919
    %v3921 = vmul.f32 %v3901, 1.442695
    %v3922 = vpow.pop %v3921
    %v3923 = vmul.f32 %v3902, 1.442695
    %v3924 = vpow.pop %v3923
    %v3925 = vmul.f32 %v3903, 1.442695
    %v3926 = vpow.pop %v3925
    %v3927 = vmul.f32 %v3904, 1.442695
    %v3928 = vpow.pop %v3927
    %v3929 = vmul.f32 %v3905, 1.442695
    %v3930 = vpow.pop %v3929
    %v3931 = vmul.f32 %v3906, 1.442695
    %v3932 = vpow.pop %v3931
    %v3933 = vmul.f32 %v3907, 1.442695
    %v3934 = vpow.pop %v3933
    %v3935 = vmul.f32 %v3908, 1.442695
    %v3936 = vpow.pop %v3935
    %v3937 = vadd.f32 %v3910, 1.0
    %v3938 = vadd.f32 %v3912, 1.0
    %v3939 = vadd.f32 %v3914, 1.0
    %v3940 = vadd.f32 %v3916, 1.0
    %v3941 = vadd.f32 %v3918, 1.0
    %v3942 = vadd.f32 %v3920, 1.0
    %v3943 = vadd.f32 %v3922, 1.0
    %v3944 = vadd.f32 %v3924, 1.0
    %v3945 = vadd.f32 %v3926, 1.0
    %v3946 = vadd.f32 %v3928, 1.0
    %v3947 = vadd.f32 %v3930, 1.0
    %v3948 = vadd.f32 %v3932, 1.0
    %v3949 = vadd.f32 %v3934, 1.0
    %v3950 = vadd.f32 %v3936, 1.0
    %v3951 = vrcp.pop %v3937
    %v3952 = vrcp.pop %v3938
    %v3953 = vrcp.pop %v3939
    %v3954 = vrcp.pop %v3940
    %v3955 = vrcp.pop %v3941
    %v3956 = vrcp.pop %v3942
    %v3957 = vrcp.pop %v3943
    %v3958 = vrcp.pop %v3944
    %v3959 = vrcp.pop %v3945
    %v3960 = vrcp.pop %v3946
    %v3961 = vrcp.pop %v3947
    %v3962 = vrcp.pop %v3948
    %v3963 = vrcp.pop %v3949
    %v3964 = vrcp.pop %v3950
    %v3965 = vpack.c.bf16 %v3958, %v3951
    %v3966 = vpack.c.bf16 %v3959, %v3952
    %v3967 = vpack.c.bf16 %v3960, %v3953
    %v3968 = vpack.c.bf16 %v3961, %v3954
    %v3969 = vpack.c.bf16 %v3962, %v3955
    %v3970 = vpack.c.bf16 %v3963, %v3956
    %v3971 = vpack.c.bf16 %v3964, %v3957
    %v3979 = vunpack.c.l.b16 %v3965
    %v3980 = vunpack.c.l.b16 %v3966
    %v3981 = vunpack.c.l.b16 %v3967
    %v3982 = vunpack.c.l.b16 %v3968
    %v3983 = vunpack.c.l.b16 %v3969
    %v3984 = vunpack.c.l.b16 %v3970
    %v3985 = vunpack.c.l.b16 %v3971
    %v3986 = vunpack.c.h.b16 %v3965
    %v3987 = vunpack.c.h.b16 %v3966
    %v3988 = vunpack.c.h.b16 %v3967
    %v3989 = vunpack.c.h.b16 %v3968
    %v3990 = vunpack.c.h.b16 %v3969
    %v3991 = vunpack.c.h.b16 %v3970
    %v3992 = vunpack.c.h.b16 %v3971
    %v3993 = vpack.c.b16 %v3980, %v3979
    %v3994 = vpack.c.b16 %v3982, %v3981
    %v3995 = vpack.c.b16 %v3984, %v3983
    %v3996 = vpack.c.b16 %v3985, %v3985
    %v3997 = vpack.c.b16 %v3987, %v3986
    %v3998 = vpack.c.b16 %v3989, %v3988
    %v3999 = vpack.c.b16 %v3991, %v3990
    %v4000 = vpack.c.b16 %v3992, %v3992
    %4009 = vst [vmem:[#allocation2] sm:$0xff] %v3993
    %4010 = vst [vmem:[#allocation2 + $0x8] sm:$0xff] %v3994
    %4011 = vst [vmem:[#allocation2 + $0x10] sm:$0xff] %v3995
    %vm4012 = vcmask 125952
    %4013 = vst.msk [vmem:[#allocation2 + $0x18] sm:$0xf] %vm4012, %v3996
    %4014 = vst [vmem:[#allocation2 + $0x1c] sm:$0xff] %v3997
    %4015 = vst [vmem:[#allocation2 + $0x24] sm:$0xff] %v3998
    %4016 = vst [vmem:[#allocation2 + $0x2c] sm:$0xff] %v3999
    %4017 = vst.msk [vmem:[#allocation2 + $0x34] sm:$0xf] %vm4012, %v4000
    %4018 = vst.msk [vmem:[#allocation4] sm:$0xff] %vm2272, %v1912
    %4019 = vst.msk [vmem:[#allocation4 + $0x8] sm:$0xff] %vm2272, %v1915
    %4020 = vst.msk [vmem:[#allocation6] sm:$0xff] %vm2272, %v2201
    %4021 = vst.msk [vmem:[#allocation6 + $0x8] sm:$0xff] %vm2272, %v2204
    // Predicated region
    $region50: #{tpu_custom_call.1} parent=1 // pred_check
      _
    $region51: #{tpu_custom_call.1} parent=1 // pred_check_branch
      %4023 = sbr.rel (0) target = $region53
    $region52: #{tpu_custom_call.1} parent=1 // pred_region
      %s4025 = ssub.s32 896, 896
      %4026 = vsyncadd [#allocation3], %s4025
      %s4027 = sshll.u32 [#allocation2], 4
      %s4028 = int_to_ptr.vmem [resolvable:$true] %s4027
      %4033 = dma.vmem_to_hbm [thread:$0]  %s4028, 896, %s12, [#allocation3], 448, 448, 28
    $region53: #{tpu_custom_call.1} parent=1 // pred_fallthru
      _
    // Predicated region
    $region54: #{tpu_custom_call.1} parent=1 // pred_check
      _
    $region55: #{tpu_custom_call.1} parent=1 // pred_check_branch
      %4035 = sbr.rel (0) target = $region57
    $region56: #{tpu_custom_call.1} parent=1 // pred_region
      %s4037 = ssub.s32 256, 256
      %4038 = vsyncadd [#allocation5], %s4037
      %s4039 = sshll.u32 [#allocation4], 4
      %s4040 = int_to_ptr.vmem [resolvable:$true] %s4039
      %4045 = dma.vmem_to_hbm [thread:$0]  %s4040, 256, %s13, [#allocation5], 128, 128, 8
    $region57: #{tpu_custom_call.1} parent=1 // pred_fallthru
      _
    // Predicated region
    $region58: #{tpu_custom_call.1} parent=1 // pred_check
      _
    $region59: #{tpu_custom_call.1} parent=1 // pred_check_branch
      %4047 = sbr.rel (0) target = $region61
    $region60: #{tpu_custom_call.1} parent=1 // pred_region
      %s4049 = ssub.s32 256, 256
      %4050 = vsyncadd [#allocation5], %s4049
      %s4051 = sshll.u32 [#allocation6], 4
      %s4052 = int_to_ptr.vmem [resolvable:$true] %s4051
      %4057 = dma.vmem_to_hbm [thread:$0]  %s4052, 256, %s14, [#allocation5], 128, 128, 8
    $region61: #{tpu_custom_call.1} parent=1 // pred_fallthru
      _
    // Predicated region
    $region62: #{tpu_custom_call.1} parent=1 // pred_check
      _
    $region63: #{tpu_custom_call.1} parent=1 // pred_check_branch
      %4059 = sbr.rel (0) target = $region65
    $region64: #{tpu_custom_call.1} parent=1 // pred_region
      %4060 = dma.done [#allocation3], 896
    $region65: #{tpu_custom_call.1} parent=1 // pred_fallthru
      _
    // Predicated region
    $region66: #{tpu_custom_call.1} parent=1 // pred_check
      _
    $region67: #{tpu_custom_call.1} parent=1 // pred_check_branch
      %4062 = sbr.rel (0) target = $region69
    $region68: #{tpu_custom_call.1} parent=1 // pred_region
      %4063 = dma.done [#allocation5], 256
    $region69: #{tpu_custom_call.1} parent=1 // pred_fallthru
      _
    // Predicated region
    $region70: #{tpu_custom_call.1} parent=1 // pred_check
      _
    $region71: #{tpu_custom_call.1} parent=1 // pred_check_branch
      %4065 = sbr.rel (0) target = $region73
    $region72: #{tpu_custom_call.1} parent=1 // pred_region
      %4066 = dma.done [#allocation5], 256
    $region73: #{tpu_custom_call.1} parent=1 // pred_fallthru
      _
    %4067 = vsyncpa [#allocation3], 1
    %4068 = vsyncpa [#allocation5], 1

</llo_original>
